<compile_context>
chip_gen: v7x
topology: tpu7x:2x2x1
jax: 0.10.0
libtpu: 0.0.40
codegen_flags: <defaults>
</compile_context>

<pallas_src>
import jax
import jax.numpy as jnp
from jax.experimental import pallas as pl
from jax.experimental.pallas import tpu as pltpu

# ---- model dimensions (fc expects 11392 = 64 * 178  =>  L = 356) ----
C_IN = 4
C_OUT = 64
L = 356
K = 3
L_POOL = L // 2                    # 178 pooled time steps
FLAT = C_OUT * L_POOL              # 11392
NUM_CLASSES = 9
N_OUT = NUM_CLASSES + 1            # 10
N_PAD = 128                        # lane-dense padded logits width

# ---- kernel tiling ----
TB = 128                                        # batch rows per block (MXU M dim)
GROUP = 16                                      # pool positions per grid step
N_GROUPS = (L_POOL + GROUP - 1) // GROUP        # 12
T_PAD = N_GROUPS * GROUP                        # 192 (padded pooled time)
WIN = 2 * GROUP + 2                             # 34 padded-input steps per group window
PATCH = WIN * C_IN                              # 136 im2col row width
PATCH_PAD = 256                                 # lane-dense im2col width
GCOLS = GROUP * C_OUT                           # 1024 conv outputs per group
XPAD_LEN = 2 * GROUP * (N_GROUPS - 1) + WIN     # 386 padded input length
N_HALVES = 2                                    # split the group reduction across 2 TCs
HALF_GROUPS = N_GROUPS // N_HALVES              # 6
assert N_GROUPS % N_HALVES == 0


def fused_cnn_kernel(xg_ref, wc_ref, bc_ref, v_ref, o_ref):
    """One grid step = one group of GROUP pool positions for one batch block.

    xg_ref : (TB, PATCH_PAD)       bf16 im2col rows for this group
    wc_ref : (PATCH_PAD, 2*GCOLS)  bf16 folded conv taps [even | odd], resident
    bc_ref : (1, GCOLS)            f32 conv bias tiled over the GROUP positions
    v_ref  : (T_PAD*C_OUT, N_PAD)  bf16 FC weight, fully resident; row = p*64 + c
    o_ref  : (TB, N_PAD)           f32 partial logits, resident across the group axis
    """
    h = pl.program_id(0)
    g = pl.program_id(2)

    @pl.when(g == 0)
    def _init():
        o_ref[...] = jnp.zeros_like(o_ref)

    # One MXU matmul produces both conv outputs of every pool pair (even | odd).
    conv = jnp.dot(xg_ref[...], wc_ref[...], preferred_element_type=jnp.float32)
    # relu(max(a + b, c + b)) == relu(max(a, c) + b)   (f32 VPU math)
    pooled = jnp.maximum(
        jnp.maximum(conv[:, :GCOLS], conv[:, GCOLS:]) + bc_ref[...], 0.0)
    # FC: contract this group's pooled activations against the matching resident
    # weight rows and accumulate into the lane-dense output block.
    row0 = pl.multiple_of((h * HALF_GROUPS + g) * GCOLS, GCOLS)
    o_ref[...] += jnp.dot(pooled.astype(jnp.bfloat16),
                          v_ref[pl.ds(row0, GCOLS), :],
                          preferred_element_type=jnp.float32)


# ---------------- glue: layout / weight preparation ----------------

def _prep_inputs(x_ncl, b_pad):
    """NCL input -> (N_GROUPS, b_pad, PATCH_PAD) bf16 im2col rows."""
    B = x_ncl.shape[0]
    x_nlc = jnp.transpose(x_ncl, (0, 2, 1)).astype(jnp.float32)          # (B, L, C_IN)
    # conv's own zero-pad of 1 at the front plus a zero tail so the last
    # group's fake pool positions (p >= 178) read zeros.
    xpad = jnp.pad(x_nlc, ((0, 0), (1, XPAD_LEN - L - 1), (0, 0)))       # (B, 386, C_IN)
    starts = 2 * GROUP * jnp.arange(N_GROUPS)                            # (12,)
    idx = starts[:, None] + jnp.arange(WIN)[None, :]                     # (12, 34)
    xg = xpad[:, idx, :].reshape(B, N_GROUPS, PATCH)                     # row = d*C_IN + ci
    xg = jnp.pad(xg, ((0, b_pad - B), (0, 0), (0, PATCH_PAD - PATCH)))
    return jnp.transpose(xg, (1, 0, 2)).astype(jnp.bfloat16)             # (12, b_pad, 256)


def prepare_params(wconv, bconv, wfc, bfc):
    """Weight preparation. Call ONCE and reuse (kept out of the per-call jit)."""
    # Fold the 3 conv taps into a block-banded (PATCH_PAD, 2*GCOLS) matrix that
    # produces [even | odd] conv outputs for all GROUP pool positions at once.
    w_taps = jnp.transpose(wconv, (2, 1, 0)).astype(jnp.float32)         # (K, C_IN, C_OUT)
    we = jnp.zeros((WIN, C_IN, GROUP, C_OUT), jnp.float32)
    wo = jnp.zeros((WIN, C_IN, GROUP, C_OUT), jnp.float32)
    for s in range(GROUP):                  # local pool position within the group
        for k in range(K):
            we = we.at[2 * s + k, :, s, :].set(w_taps[k])        # conv @ t = 32g + 2s
            wo = wo.at[2 * s + 1 + k, :, s, :].set(w_taps[k])    # conv @ t = 32g + 2s + 1
    wm = jnp.concatenate([we.reshape(PATCH, GCOLS),
                          wo.reshape(PATCH, GCOLS)], axis=1)             # (136, 2048)
    wm = jnp.pad(wm, ((0, PATCH_PAD - PATCH), (0, 0))).astype(jnp.bfloat16)
    bias_row = jnp.tile(bconv.astype(jnp.float32), GROUP).reshape(1, GCOLS)

    # FC weight -> (T_PAD*C_OUT, N_PAD): rows ordered p*64+c; zero rows for fake
    # pool positions (p >= 178) and zero lanes beyond the N_OUT real logits.
    w = wfc.astype(jnp.float32).reshape(N_OUT, C_OUT, L_POOL)            # [n, c, p]
    w = jnp.pad(w, ((0, N_PAD - N_OUT), (0, 0), (0, T_PAD - L_POOL)))    # (128, 64, 192)
    v = jnp.transpose(w, (2, 1, 0)).reshape(T_PAD * C_OUT, N_PAD)        # row = p*64 + c
    return wm, bias_row, v.astype(jnp.bfloat16), bfc.astype(jnp.float32)


@jax.jit
def cnn_forward(x_ncl, wm, bias_row, v, bfc):
    """Forward pass matching CNNModel.forward on NCL input (B, C_IN, 356)."""
    B = x_ncl.shape[0]
    b_pad = ((B + TB - 1) // TB) * TB
    xg = _prep_inputs(x_ncl, b_pad)                                      # (12, b_pad, 256)

    partial = pl.pallas_call(
        fused_cnn_kernel,
        out_shape=jax.ShapeDtypeStruct((N_HALVES, b_pad, N_PAD), jnp.float32),
        grid=(N_HALVES, b_pad // TB, HALF_GROUPS),
        in_specs=[
            # im2col rows, streamed per (half, batch block, group)
            pl.BlockSpec((None, TB, PATCH_PAD),
                         lambda h, bb, g: (h * HALF_GROUPS + g, bb, 0)),
            # folded conv taps (resident)
            pl.BlockSpec((PATCH_PAD, 2 * GCOLS), lambda h, bb, g: (0, 0)),
            # conv bias (resident)
            pl.BlockSpec((1, GCOLS), lambda h, bb, g: (0, 0)),
            # FC weight, fully resident; sliced per group inside the kernel
            pl.BlockSpec((T_PAD * C_OUT, N_PAD), lambda h, bb, g: (0, 0)),
        ],
        out_specs=pl.BlockSpec((None, TB, N_PAD), lambda h, bb, g: (h, bb, 0)),
        compiler_params=pltpu.CompilerParams(
            dimension_semantics=("parallel", "parallel", "arbitrary"),
            vmem_limit_bytes=32 * 1024 * 1024),
    )(xg, wm, bias_row, v)

    # Combine the two halves of the group reduction, drop padding, add FC bias.
    return partial.sum(axis=0)[:B, :N_OUT] + bfc[None, :]


def torch_reference(x_ncl, wconv, bconv, wfc, bfc):
    """Pure-JAX f32 mirror of the PyTorch forward (NCL semantics), for checking."""
    B = x_ncl.shape[0]
    xpad = jnp.pad(x_ncl, ((0, 0), (0, 0), (1, 1)))                      # (B, C_in, 358)
    taps = jnp.stack([xpad[:, :, k:k + L] for k in range(K)], axis=-1)
    conv = jnp.einsum('bctk,ock->bot', taps, wconv) + bconv[None, :, None]
    conv = jnp.maximum(conv, 0.0)
    pool = conv.reshape(B, C_OUT, L_POOL, 2).max(axis=-1)
    flat = pool.reshape(B, -1)
    return flat @ wfc.T + bfc[None, :]


if __name__ == "__main__":
    key = jax.random.PRNGKey(0)
    k_x, k_wc, k_bc, k_wf, k_bf = jax.random.split(key, 5)

    B = 2
    x = jax.random.normal(k_x, (B, C_IN, L), dtype=jnp.float32)
    wconv = 0.05 * jax.random.normal(k_wc, (C_OUT, C_IN, K), dtype=jnp.float32)
    bconv = 0.05 * jax.random.normal(k_bc, (C_OUT,), dtype=jnp.float32)
    wfc = 0.01 * jax.random.normal(k_wf, (N_OUT, FLAT), dtype=jnp.float32)
    bfc = 0.01 * jax.random.normal(k_bf, (N_OUT,), dtype=jnp.float32)

    params = prepare_params(wconv, bconv, wfc, bfc)   # once; reused across calls
    out = jax.block_until_ready(cnn_forward(x, *params))

    ref = torch_reference(x, wconv, bconv, wfc, bfc)
    assert out.shape == (B, N_OUT), out.shape
    max_err = float(jnp.max(jnp.abs(out - ref)))
    # bf16 MXU operands with f32 accumulation -> slightly looser tolerance.
    assert jnp.allclose(out, ref, rtol=1e-2, atol=1e-2), max_err

    print("KERNEL_OK")
</pallas_src>

<mosaic_0001>
module attributes {stable_mosaic.version = 11 : i64} {
  func.func @fused_cnn_kernel(%arg0: i32, %arg1: i32, %arg2: i32, %arg3: memref<1x128x256xbf16, #tpu.memory_space<vmem>>, %arg4: memref<256x2048xbf16, #tpu.memory_space<vmem>>, %arg5: memref<1x1024xf32, #tpu.memory_space<vmem>>, %arg6: memref<12288x128xbf16, #tpu.memory_space<vmem>>, %arg7: memref<1x128x128xf32, #tpu.memory_space<vmem>>) attributes {dimension_semantics = [#tpu.dimension_semantics<parallel>, #tpu.dimension_semantics<parallel>, #tpu.dimension_semantics<arbitrary>], iteration_bounds = array<i64: 2, 1, 6>, scalar_prefetch = 0 : i64, scratch_operands = 0 : i64, tpu.core_type = #tpu.core_type<tc>, window_params = [{transform_indices = @transform_0, window_bounds = array<i64: 1, 128, 256>}, {pipeline_mode = #tpu.pipeline_mode<synchronous>, transform_indices = @transform_1, window_bounds = array<i64: 256, 2048>}, {pipeline_mode = #tpu.pipeline_mode<synchronous>, transform_indices = @transform_2, window_bounds = array<i64: 1, 1024>}, {pipeline_mode = #tpu.pipeline_mode<synchronous>, transform_indices = @transform_3, window_bounds = array<i64: 12288, 128>}, {transform_indices = @transform_4, window_bounds = array<i64: 1, 128, 128>}]} {
    %c0_i32 = arith.constant 0 : i32
    %0 = arith.cmpi eq, %arg2, %c0_i32 : i32
    %1 = arith.extui %0 : i1 to i32
    %c0_i32_0 = arith.constant 0 : i32
    %2 = arith.cmpi ne, %1, %c0_i32_0 : i32
    scf.if %2 {
      %cst_16 = arith.constant 0.000000e+00 : f32
      %29 = vector.broadcast %cst_16 : f32 to vector<128x128xf32>
      %c0_17 = arith.constant 0 : index
      %c0_18 = arith.constant 0 : index
      %c0_19 = arith.constant 0 : index
      %30 = vector.load %arg7[%c0_17, %c0_18, %c0_19] : memref<1x128x128xf32, #tpu.memory_space<vmem>>, vector<1x128x128xf32>
      %31 = vector.shape_cast %30 : vector<1x128x128xf32> to vector<128x128xf32>
      %32 = vector.shape_cast %29 : vector<128x128xf32> to vector<1x128x128xf32>
      tpu.vector_store %arg7[%c0_17, %c0_18, %c0_19], %32 {strides = array<i32>} : memref<1x128x128xf32, #tpu.memory_space<vmem>>, vector<1x128x128xf32>,
    } else {
    }
    %c0 = arith.constant 0 : index
    %c0_1 = arith.constant 0 : index
    %c0_2 = arith.constant 0 : index
    %3 = vector.load %arg3[%c0, %c0_1, %c0_2] : memref<1x128x256xbf16, #tpu.memory_space<vmem>>, vector<1x128x256xbf16>
    %4 = vector.shape_cast %3 : vector<1x128x256xbf16> to vector<128x256xbf16>
    %c0_3 = arith.constant 0 : index
    %c0_4 = arith.constant 0 : index
    %5 = vector.load %arg4[%c0_3, %c0_4] : memref<256x2048xbf16, #tpu.memory_space<vmem>>, vector<256x2048xbf16>
    %cst = arith.constant dense<0.000000e+00> : vector<128x2048xf32>
    %6 = tpu.matmul %4, %5, %cst {dimension_numbers = #tpu.dot_dimension_numbers<[1], [0], [0], [1], [0, 0, 1, 1], [], []>} : vector<128x256xbf16>, vector<256x2048xbf16>, vector<128x2048xf32> -> vector<128x2048xf32>
    %7 = vector.extract_strided_slice %6 {offsets = [0, 0], sizes = [128, 1024], strides = [1, 1]} : vector<128x2048xf32> to vector<128x1024xf32>
    %8 = vector.extract_strided_slice %6 {offsets = [0, 1024], sizes = [128, 1024], strides = [1, 1]} : vector<128x2048xf32> to vector<128x1024xf32>
    %9 = arith.maximumf %7, %8 : vector<128x1024xf32>
    %c0_5 = arith.constant 0 : index
    %c0_6 = arith.constant 0 : index
    %10 = vector.load %arg5[%c0_5, %c0_6] : memref<1x1024xf32, #tpu.memory_space<vmem>>, vector<1x1024xf32>
    %11 = vector.broadcast %10 : vector<1x1024xf32> to vector<128x1024xf32>
    %12 = arith.addf %9, %11 : vector<128x1024xf32>
    %cst_7 = arith.constant 0.000000e+00 : f32
    %13 = vector.broadcast %cst_7 : f32 to vector<128x1024xf32>
    %14 = arith.maximumf %12, %13 : vector<128x1024xf32>
    %c6_i32 = arith.constant 6 : i32
    %15 = arith.muli %arg0, %c6_i32 : i32
    %16 = arith.addi %15, %arg2 : i32
    %c1024_i32 = arith.constant 1024 : i32
    %17 = arith.muli %16, %c1024_i32 : i32
    %18 = tpu.assume_multiple %17, 1024 : i32
    %c0_8 = arith.constant 0 : index
    %c0_9 = arith.constant 0 : index
    %c0_10 = arith.constant 0 : index
    %19 = vector.load %arg7[%c0_8, %c0_9, %c0_10] : memref<1x128x128xf32, #tpu.memory_space<vmem>>, vector<1x128x128xf32>
    %20 = vector.shape_cast %19 : vector<1x128x128xf32> to vector<128x128xf32>
    %21 = arith.truncf %14 : vector<128x1024xf32> to vector<128x1024xbf16>
    %22 = arith.index_cast %18 : i32 to index
    %c0_11 = arith.constant 0 : index
    %23 = vector.load %arg6[%22, %c0_11] : memref<12288x128xbf16, #tpu.memory_space<vmem>>, vector<1024x128xbf16>
    %cst_12 = arith.constant dense<0.000000e+00> : vector<128x128xf32>
    %24 = tpu.matmul %21, %23, %cst_12 {dimension_numbers = #tpu.dot_dimension_numbers<[1], [0], [0], [1], [0, 0, 1, 1], [], []>} : vector<128x1024xbf16>, vector<1024x128xbf16>, vector<128x128xf32> -> vector<128x128xf32>
    %25 = arith.addf %20, %24 : vector<128x128xf32>
    %c0_13 = arith.constant 0 : index
    %c0_14 = arith.constant 0 : index
    %c0_15 = arith.constant 0 : index
    %26 = vector.load %arg7[%c0_13, %c0_14, %c0_15] : memref<1x128x128xf32, #tpu.memory_space<vmem>>, vector<1x128x128xf32>
    %27 = vector.shape_cast %26 : vector<1x128x128xf32> to vector<128x128xf32>
    %28 = vector.shape_cast %25 : vector<128x128xf32> to vector<1x128x128xf32>
    tpu.vector_store %arg7[%c0_13, %c0_14, %c0_15], %28 {strides = array<i32>} : memref<1x128x128xf32, #tpu.memory_space<vmem>>, vector<1x128x128xf32>,
    return
  }
  func.func @transform_0(%arg0: i32, %arg1: i32, %arg2: i32) -> (i32, i32, i32) {
    %c6_i32 = arith.constant 6 : i32
    %0 = arith.muli %arg0, %c6_i32 : i32
    %1 = arith.addi %0, %arg2 : i32
    %c0_i32 = arith.constant 0 : i32
    %c0_i32_0 = arith.constant 0 : i32
    return %1, %arg1, %c0_i32 : i32, i32, i32
  }
  func.func @transform_1(%arg0: i32, %arg1: i32, %arg2: i32) -> (i32, i32) {
    %c0_i32 = arith.constant 0 : i32
    %c0_i32_0 = arith.constant 0 : i32
    %c0_i32_1 = arith.constant 0 : i32
    return %c0_i32, %c0_i32_0 : i32, i32
  }
  func.func @transform_2(%arg0: i32, %arg1: i32, %arg2: i32) -> (i32, i32) {
    %c0_i32 = arith.constant 0 : i32
    %c0_i32_0 = arith.constant 0 : i32
    %c0_i32_1 = arith.constant 0 : i32
    return %c0_i32, %c0_i32_0 : i32, i32
  }
  func.func @transform_3(%arg0: i32, %arg1: i32, %arg2: i32) -> (i32, i32) {
    %c0_i32 = arith.constant 0 : i32
    %c0_i32_0 = arith.constant 0 : i32
    %c0_i32_1 = arith.constant 0 : i32
    return %c0_i32, %c0_i32_0 : i32, i32
  }
  func.func @transform_4(%arg0: i32, %arg1: i32, %arg2: i32) -> (i32, i32, i32) {
    %c0_i32 = arith.constant 0 : i32
    %c0_i32_0 = arith.constant 0 : i32
    return %arg0, %arg1, %c0_i32 : i32, i32, i32
  }
}

</mosaic_0001>

<llo_original>
// kernel: cnn_forward.1
$region0: #{cnn_forward.1}
  #allocation0 [shape = 'u32[]', space=smem, size = 0x4, offset = 0x4, fixed_abs, tag = 'smem constant byte address 0x4 - core index']
  #allocation1 [shape = 'u32[144,128]{1,0:T(1,128)}', space=vmem, size = 0x12000, scoped, tag = 'internal scratch']
  %s0 = inlined_call_operand.vmem [shape: bf16[12,128,256], index: 0, kind: input, shape index: {}]
  %s1 = inlined_call_operand.hbm [shape: bf16[256,2048], index: 1, kind: input, shape index: {}]
  %s2 = inlined_call_operand.hbm [shape: f32[1,1024], index: 2, kind: input, shape index: {}]
  %s3 = inlined_call_operand.hbm [shape: bf16[12288,128], index: 3, kind: input, shape index: {}]
  %s4 = inlined_call_operand.vmem [shape: f32[2,128,128], index: 4, kind: output, shape index: {}]
  %s5 = sld [smem:[#allocation0]]
  $region65: #{cnn_forward.1} parent=0
    _
  %s7 = ssub.s32 1, %s5
  %s8 = scalar_select 0, %s7, %s5
  $region1: #{cnn_forward.1} parent=0
    #allocation2 [shape = 'u8[1048576]{0}', space=vmem, size = 0x100000, scoped, tag = 'input window, operand 1, single buffered']
    #allocation3 [shape = 's32[2]{0}', space=sflag, size = 0x8, scoped, tag = 'scoped memory for cnn_forward.1']
    #allocation4 [shape = 'u8[4096]{0}', space=vmem, size = 0x1000, scoped, tag = 'input window, operand 2, single buffered']
    #allocation5 [shape = 's32[1]{0}', space=sflag, size = 0x4, scoped, tag = 'scoped memory for cnn_forward.1']
    #allocation6 [shape = 'u8[3145728]{0}', space=vmem, size = 0x300000, scoped, tag = 'input window, operand 3, single buffered']
    %9 = vsyncpa [#allocation3], 0
    %10 = vsyncpa [#allocation5], 0
    loop: start=0, step=1, limit=14
    $region2: #{cnn_forward.1} parent=1 // loop_pre_header
      _
    $region3: #{cnn_forward.1} parent=1 // loop_header
      %s12 = sphi 0, %s16
      %p13 = scmp.ge.s32.totalorder %s12, 14
      %s19 = sphi 0, %s38
      %s20 = sphi 0, %s34
      %s21 = sphi 0, %s30
      %s22 = sphi 0, %s19
      %s23 = sphi 0, %s20
      %s24 = sphi 0, %s21
      %s25 = sphi 0, %s22
      %s26 = sphi 0, %s23
      %s27 = sphi 0, %s24
      %s47 = sphi 0, %s49
      %s50 = sphi 0, %s47
      %s51 = sphi 0, %s50
      %s67 = sphi 0, %s51
      %s71 = sphi 0, %s71
      %s73 = sphi 0, %s71
      %s74 = sphi 0, %s73
      %s88 = sphi 0, %s74
      %s92 = sphi 0, %s92
      %s94 = sphi 0, %s92
      %s95 = sphi 0, %s94
      %s109 = sphi 0, %s95
      %s113 = sphi 0, %s113
      %s115 = sphi 0, %s113
      %s116 = sphi 0, %s115
      %s130 = sphi 0, %s116
      %s138 = sphi 0, %s140
      %s141 = sphi 0, %s138
      %s142 = sphi 0, %s141
      %s158 = sphi 0, %s142
    $region4: #{cnn_forward.1} parent=1 // loop_header_branch
      %15 = sbr.rel (%p13) target = $region8
    $region5: #{cnn_forward.1} parent=1 // loop_body
      %s17 = ssub.s32 %s12, 1
      %s18 = ssub.s32 %s12, 2
      %s28 = sadd.s32 1, %s21
      %p29 = scmp.ge.s32.totalorder %s28, 6
      %s30 = scalar_select %p29, 0, %s28
      %s31 = sadd.s32 1, %s20
      %s32 = scalar_select %p29, %s31, %s20
      %p33 = scmp.ge.s32.totalorder %s32, 1
      %s34 = scalar_select %p33, 0, %s32
      %s35 = sadd.s32 1, %s19
      %s36 = scalar_select %p33, %s35, %s19
      %p37 = scmp.ge.s32.totalorder %s36, 2
      %s38 = scalar_select %p37, 0, %s36
      %s39 = smul.u32 %s19, 6
      %s40 = sadd.s32 %s39, %s21
      %s41 = smul.u32 %s38, 6
      %s42 = sadd.s32 %s41, %s30
      %s43 = ssub.s32 %s40, %s42
      %s44 = ssub.s32 %s20, %s34
      %s45 = sor.u32 %s43, %s44
      %p46 = scmp.eq.s32.totalorder %s45, 0
      %s48 = sadd.s32 %s47, 1
      %s49 = scalar_select %p46, %s47, %s48
      %p52 = pneg %p46
      %p53 = scmp.eq.s32.totalorder %s12, 11
      %p54 = por %p52, %p53
      %p55 = scmp.ne.s32.totalorder %s47, %s50
      %p56 = scmp.eq.s32.totalorder %s12, 0
      %p57 = por %p55, %p56
      %p58 = scmp.ne.s32.totalorder %s47, %s50
      %p59 = scmp.eq.s32.totalorder %s17, 11
      %p60 = por %p58, %p59
      %p61 = scmp.ne.s32.totalorder %s50, %s51
      %p62 = scmp.eq.s32.totalorder %s17, 0
      %p63 = por %p61, %p62
      %p64 = scmp.ne.s32.totalorder %s50, %s51
      %p65 = scmp.eq.s32.totalorder %s18, 11
      %p66 = por %p64, %p65
      %p68 = scmp.ne.s32.totalorder %s51, %s67
      %p69 = scmp.eq.s32.totalorder %s18, 0
      %p70 = por %p68, %p69
      %s72 = sadd.s32 %s71, 1
      %p75 = scmp.eq.s32.totalorder %s12, 11
      %p76 = scmp.ne.s32.totalorder %s71, %s73
      %p77 = scmp.eq.s32.totalorder %s12, 0
      %p78 = por %p76, %p77
      %p79 = scmp.ne.s32.totalorder %s71, %s73
      %p80 = scmp.eq.s32.totalorder %s17, 11
      %p81 = por %p79, %p80
      %p82 = scmp.ne.s32.totalorder %s73, %s74
      %p83 = scmp.eq.s32.totalorder %s17, 0
      %p84 = por %p82, %p83
      %p85 = scmp.ne.s32.totalorder %s73, %s74
      %p86 = scmp.eq.s32.totalorder %s18, 11
      %p87 = por %p85, %p86
      %p89 = scmp.ne.s32.totalorder %s74, %s88
      %p90 = scmp.eq.s32.totalorder %s18, 0
      %p91 = por %p89, %p90
      %s93 = sadd.s32 %s92, 1
      %p96 = scmp.eq.s32.totalorder %s12, 11
      %p97 = scmp.ne.s32.totalorder %s92, %s94
      %p98 = scmp.eq.s32.totalorder %s12, 0
      %p99 = por %p97, %p98
      %p100 = scmp.ne.s32.totalorder %s92, %s94
      %p101 = scmp.eq.s32.totalorder %s17, 11
      %p102 = por %p100, %p101
      %p103 = scmp.ne.s32.totalorder %s94, %s95
      %p104 = scmp.eq.s32.totalorder %s17, 0
      %p105 = por %p103, %p104
      %p106 = scmp.ne.s32.totalorder %s94, %s95
      %p107 = scmp.eq.s32.totalorder %s18, 11
      %p108 = por %p106, %p107
      %p110 = scmp.ne.s32.totalorder %s95, %s109
      %p111 = scmp.eq.s32.totalorder %s18, 0
      %p112 = por %p110, %p111
      %s114 = sadd.s32 %s113, 1
      %p117 = scmp.eq.s32.totalorder %s12, 11
      %p118 = scmp.ne.s32.totalorder %s113, %s115
      %p119 = scmp.eq.s32.totalorder %s12, 0
      %p120 = por %p118, %p119
      %p121 = scmp.ne.s32.totalorder %s113, %s115
      %p122 = scmp.eq.s32.totalorder %s17, 11
      %p123 = por %p121, %p122
      %p124 = scmp.ne.s32.totalorder %s115, %s116
      %p125 = scmp.eq.s32.totalorder %s17, 0
      %p126 = por %p124, %p125
      %p127 = scmp.ne.s32.totalorder %s115, %s116
      %p128 = scmp.eq.s32.totalorder %s18, 11
      %p129 = por %p127, %p128
      %p131 = scmp.ne.s32.totalorder %s116, %s130
      %p132 = scmp.eq.s32.totalorder %s18, 0
      %p133 = por %p131, %p132
      %s134 = ssub.s32 %s19, %s38
      %s135 = ssub.s32 %s20, %s34
      %s136 = sor.u32 %s134, %s135
      %p137 = scmp.eq.s32.totalorder %s136, 0
      %s139 = sadd.s32 %s138, 1
      %s140 = scalar_select %p137, %s138, %s139
      %p143 = pneg %p137
      %p144 = scmp.eq.s32.totalorder %s12, 11
      %p145 = por %p143, %p144
      %p146 = scmp.ne.s32.totalorder %s138, %s141
      %p147 = scmp.eq.s32.totalorder %s12, 0
      %p148 = por %p146, %p147
      %p149 = scmp.ne.s32.totalorder %s138, %s141
      %p150 = scmp.eq.s32.totalorder %s17, 11
      %p151 = por %p149, %p150
      %p152 = scmp.ne.s32.totalorder %s141, %s142
      %p153 = scmp.eq.s32.totalorder %s17, 0
      %p154 = por %p152, %p153
      %p155 = scmp.ne.s32.totalorder %s141, %s142
      %p156 = scmp.eq.s32.totalorder %s18, 11
      %p157 = por %p155, %p156
      %p159 = scmp.ne.s32.totalorder %s142, %s158
      %p160 = scmp.eq.s32.totalorder %s18, 0
      %p161 = por %p159, %p160
      %p162 = scmp.le.s32.totalorder 1, %s12
      %p163 = scmp.lt.s32.totalorder %s12, 13
      %p164 = pnand %p162, %p163
      %p165 = pneg %p164
      // Predicated region
      $region9: #{cnn_forward.1} parent=5 // pred_check
        _
      $region10: #{cnn_forward.1} parent=5 // pred_check_branch
        %167 = sbr.rel (%p164) target = $region12
      $region11: #{cnn_forward.1} parent=5 // pred_region
        %s168 = ssub.s32 %s12, 1
        // Predicated region
        $region13: #{cnn_forward.1} parent=11 // pred_check
          %p169 = pneg %p84
        $region14: #{cnn_forward.1} parent=11 // pred_check_branch
          %171 = sbr.rel (%p169) target = $region16
        $region15: #{cnn_forward.1} parent=11 // pred_region
          %s173 = ssub.s32 32768, 32768
          %174 = vsyncadd [#allocation3], %s173
          %s175 = sshll.u32 [#allocation2], 4
          %s176 = int_to_ptr.vmem [resolvable:$true] %s175
          %181 = dma.hbm_to_vmem [thread:$0]  %s1, 32768, %s176, [#allocation3], 1024, 1024, 64
        $region16: #{cnn_forward.1} parent=11 // pred_fallthru
          _
        // Predicated region
        $region17: #{cnn_forward.1} parent=11 // pred_check
          %p182 = pneg %p105
        $region18: #{cnn_forward.1} parent=11 // pred_check_branch
          %184 = sbr.rel (%p182) target = $region20
        $region19: #{cnn_forward.1} parent=11 // pred_region
          %s186 = ssub.s32 128, 128
          %187 = vsyncadd [#allocation5], %s186
          %s189 = sshll.u32 [#allocation4], 4
          %s190 = int_to_ptr.vmem [resolvable:$true] %s189
          %192 = dma.hbm_to_vmem [thread:$0]  %s2, 128, %s190, [#allocation5]
        $region20: #{cnn_forward.1} parent=11 // pred_fallthru
          _
        // Predicated region
        $region21: #{cnn_forward.1} parent=11 // pred_check
          %p193 = pneg %p126
        $region22: #{cnn_forward.1} parent=11 // pred_check_branch
          %195 = sbr.rel (%p193) target = $region24
        $region23: #{cnn_forward.1} parent=11 // pred_region
          %s197 = ssub.s32 98304, 98304
          %198 = vsyncadd [#allocation5], %s197
          %s199 = sshll.u32 [#allocation6], 4
          %s200 = int_to_ptr.vmem [resolvable:$true] %s199
          %205 = dma.hbm_to_vmem [thread:$0]  %s3, 98304, %s200, [#allocation5], 64, 64, 4
        $region24: #{cnn_forward.1} parent=11 // pred_fallthru
          _
      $region12: #{cnn_forward.1} parent=5 // pred_fallthru
        _
      %p206 = scmp.lt.s32.totalorder %s12, 12
      // Predicated region
      $region25: #{cnn_forward.1} parent=5 // pred_check
        %p207 = pneg %p206
      $region26: #{cnn_forward.1} parent=5 // pred_check_branch
        %209 = sbr.rel (%p207) target = $region28
      $region27: #{cnn_forward.1} parent=5 // pred_region
        // Predicated region
        $region29: #{cnn_forward.1} parent=27 // pred_check
          %p210 = pneg %p57
        $region30: #{cnn_forward.1} parent=27 // pred_check_branch
          %212 = sbr.rel (%p210) target = $region32
        $region31: #{cnn_forward.1} parent=27 // pred_region
          %s213 = smul.u32 %s19, 6
          %s214 = sadd.s32 %s213, %s21
          %s215 = smul.u32 16, %s20
          %p216 = scmp.lt.s32.totalorder %s214, 11
          %s217 = scalar_select %p216, %s214, 11
          %p218 = scmp.lt.s32.totalorder %s215, 15
          %s219 = scalar_select %p218, %s215, 15
          %s220 = smul.addr %s219, 2
          %s221 = smul.addr %s217, 32
          %s222 = sadd.s32 %s220, %s221
          %s223 = smul.addr %s222, 4
          %s224 = scalar_lea.vmem %s0, %s223
          %s225 = smul.u32 %s19, 6
          %s226 = sadd.s32 %s225, %s21
          %s227 = smul.u32 16, %s20
        $region32: #{cnn_forward.1} parent=27 // pred_fallthru
          _
      $region28: #{cnn_forward.1} parent=5 // pred_fallthru
        _
      %p228 = scmp.le.s32.totalorder 1, %s12
      %p229 = scmp.lt.s32.totalorder %s12, 13
      %p230 = pnand %p228, %p229
      %p231 = pneg %p230
      // Predicated region
      $region33: #{cnn_forward.1} parent=5 // pred_check
        _
      $region34: #{cnn_forward.1} parent=5 // pred_check_branch
        %233 = sbr.rel (%p230) target = $region36
      $region35: #{cnn_forward.1} parent=5 // pred_region
        %s234 = ssub.s32 %s12, 1
        // Predicated region
        $region37: #{cnn_forward.1} parent=35 // pred_check
          %p235 = pneg %p84
        $region38: #{cnn_forward.1} parent=35 // pred_check_branch
          %237 = sbr.rel (%p235) target = $region40
        $region39: #{cnn_forward.1} parent=35 // pred_region
          %238 = dma.done [#allocation3], 32768
        $region40: #{cnn_forward.1} parent=35 // pred_fallthru
          _
        // Predicated region
        $region41: #{cnn_forward.1} parent=35 // pred_check
          %p239 = pneg %p105
        $region42: #{cnn_forward.1} parent=35 // pred_check_branch
          %241 = sbr.rel (%p239) target = $region44
        $region43: #{cnn_forward.1} parent=35 // pred_region
          %242 = dma.done [#allocation5], 128
        $region44: #{cnn_forward.1} parent=35 // pred_fallthru
          _
        // Predicated region
        $region45: #{cnn_forward.1} parent=35 // pred_check
          %p243 = pneg %p126
        $region46: #{cnn_forward.1} parent=35 // pred_check_branch
          %245 = sbr.rel (%p243) target = $region48
        $region47: #{cnn_forward.1} parent=35 // pred_region
          %246 = dma.done [#allocation5], 98304
        $region48: #{cnn_forward.1} parent=35 // pred_fallthru
          _
        %s247 = smul.u32 %s22, 6
        %s248 = sadd.s32 %s247, %s24
        %s249 = smul.u32 16, %s23
        %p250 = scmp.lt.s32.totalorder %s248, 11
        %s251 = scalar_select %p250, %s248, 11
        %p252 = scmp.lt.s32.totalorder %s249, 15
        %s253 = scalar_select %p252, %s249, 15
        %s254 = smul.addr %s253, 2
        %s255 = smul.addr %s251, 32
        %s256 = sadd.s32 %s254, %s255
        %s257 = smul.addr %s256, 4
        %s258 = scalar_lea.vmem %s0, %s257
        %p259 = pneg %p63
        %p260 = pneg %p60
        %p261 = pneg %p84
        %p262 = pneg %p81
        %p263 = pneg %p105
        %p264 = pneg %p102
        %p265 = pneg %p126
        %p266 = pneg %p123
        %p267 = pneg %p154
        %p268 = pneg %p151
        %s269 = smul.u32 16, %s23
        %p270 = scmp.lt.s32.totalorder %s22, 1
        %s271 = scalar_select %p270, %s22, 1
        %p272 = scmp.lt.s32.totalorder %s269, 15
        %s273 = scalar_select %p272, %s269, 15
        %s274 = smul.addr %s271, 16
        %s275 = sadd.s32 %s273, %s274
        %s276 = smul.addr %s275, 8
        %s277 = scalar_lea.vmem %s4, %s276
        %s278 = smul.u32 %s22, 6
        %s279 = sadd.s32 %s278, %s24
        %s280 = smul.u32 16, %s23
        %p281 = scmp.lt.s32.totalorder %s279, 11
        %s282 = scalar_select %p281, %s279, 11
        %p283 = scmp.lt.s32.totalorder %s280, 15
        %s284 = scalar_select %p283, %s280, 15
        %s285 = smul.addr %s284, 2
        %s286 = smul.addr %s282, 32
        %s287 = sadd.s32 %s285, %s286
        %s288 = smul.addr %s287, 4
        %s289 = scalar_lea.vmem %s0, %s288
        %s290 = smul.u32 %s22, 6
        %s291 = sadd.s32 %s290, %s24
        %s292 = smul.u32 16, %s23
        %s293 = smul.u32 16, %s23
        %p294 = scmp.lt.s32.totalorder %s22, 1
        %s295 = scalar_select %p294, %s22, 1
        %p296 = scmp.lt.s32.totalorder %s293, 15
        %s297 = scalar_select %p296, %s293, 15
        %s298 = smul.addr %s295, 16
        %s299 = sadd.s32 %s297, %s298
        %s300 = smul.addr %s299, 8
        %s301 = scalar_lea.vmem %s4, %s300
        %s302 = smul.u32 16, %s23
        %p304 = scmp.eq.s32.totalorder %s24, 0
        // Predicated region
        $region49: #{cnn_forward.1} parent=35 // pred_check
          %p305 = pneg %p304
        $region50: #{cnn_forward.1} parent=35 // pred_check_branch
          %307 = sbr.rel (%p305) target = $region52
        $region51: #{cnn_forward.1} parent=35 // pred_region
          %308 = vst [vmem:[%s301] sm:$0xff] 0.0
          %309 = vst [vmem:[%s301 + $0x8] sm:$0xff] 0.0
          %310 = vst [vmem:[%s301 + $0x10] sm:$0xff] 0.0
          %311 = vst [vmem:[%s301 + $0x18] sm:$0xff] 0.0
          %312 = vst [vmem:[%s301 + $0x20] sm:$0xff] 0.0
          %313 = vst [vmem:[%s301 + $0x28] sm:$0xff] 0.0
          %314 = vst [vmem:[%s301 + $0x30] sm:$0xff] 0.0
          %315 = vst [vmem:[%s301 + $0x38] sm:$0xff] 0.0
          %316 = vst [vmem:[%s301 + $0x40] sm:$0xff] 0.0
          %317 = vst [vmem:[%s301 + $0x48] sm:$0xff] 0.0
          %318 = vst [vmem:[%s301 + $0x50] sm:$0xff] 0.0
          %319 = vst [vmem:[%s301 + $0x58] sm:$0xff] 0.0
          %320 = vst [vmem:[%s301 + $0x60] sm:$0xff] 0.0
          %321 = vst [vmem:[%s301 + $0x68] sm:$0xff] 0.0
          %322 = vst [vmem:[%s301 + $0x70] sm:$0xff] 0.0
          %323 = vst [vmem:[%s301 + $0x78] sm:$0xff] 0.0
        $region52: #{cnn_forward.1} parent=35 // pred_fallthru
          _
        %v324 = vld [vmem:[%s289] sm:$0xff]
        %v325 = vld [vmem:[%s289 + $0x8] sm:$0xff]
        %v326 = vld [vmem:[%s289 + $0x10] sm:$0xff]
        %v327 = vld [vmem:[%s289 + $0x18] sm:$0xff]
        %v328 = vld [vmem:[%s289 + $0x20] sm:$0xff]
        %v329 = vld [vmem:[%s289 + $0x28] sm:$0xff]
        %v330 = vld [vmem:[%s289 + $0x30] sm:$0xff]
        %v331 = vld [vmem:[%s289 + $0x38] sm:$0xff]
        %v332 = vld [vmem:[%s289 + $0x40] sm:$0xff]
        %v333 = vld [vmem:[%s289 + $0x48] sm:$0xff]
        %v334 = vld [vmem:[%s289 + $0x50] sm:$0xff]
        %v335 = vld [vmem:[%s289 + $0x58] sm:$0xff]
        %v336 = vld [vmem:[%s289 + $0x60] sm:$0xff]
        %v337 = vld [vmem:[%s289 + $0x68] sm:$0xff]
        %v338 = vld [vmem:[%s289 + $0x70] sm:$0xff]
        %v339 = vld [vmem:[%s289 + $0x78] sm:$0xff]
        %v340 = vld [vmem:[#allocation2] sm:$0xff]
        %v341 = vld [vmem:[#allocation2 + $0x8] sm:$0xff]
        %v342 = vld [vmem:[#allocation2 + $0x10] sm:$0xff]
        %v343 = vld [vmem:[#allocation2 + $0x18] sm:$0xff]
        %v344 = vld [vmem:[#allocation2 + $0x20] sm:$0xff]
        %v345 = vld [vmem:[#allocation2 + $0x28] sm:$0xff]
        %v346 = vld [vmem:[#allocation2 + $0x30] sm:$0xff]
        %v347 = vld [vmem:[#allocation2 + $0x38] sm:$0xff]
        %v348 = vld [vmem:[#allocation2 + $0x40] sm:$0xff]
        %v349 = vld [vmem:[#allocation2 + $0x48] sm:$0xff]
        %v350 = vld [vmem:[#allocation2 + $0x50] sm:$0xff]
        %v351 = vld [vmem:[#allocation2 + $0x58] sm:$0xff]
        %v352 = vld [vmem:[#allocation2 + $0x60] sm:$0xff]
        %v353 = vld [vmem:[#allocation2 + $0x68] sm:$0xff]
        %v354 = vld [vmem:[#allocation2 + $0x70] sm:$0xff]
        %v355 = vld [vmem:[#allocation2 + $0x78] sm:$0xff]
        %v356 = vld [vmem:[#allocation2 + $0x80] sm:$0xff]
        %v357 = vld [vmem:[#allocation2 + $0x88] sm:$0xff]
        %v358 = vld [vmem:[#allocation2 + $0x90] sm:$0xff]
        %v359 = vld [vmem:[#allocation2 + $0x98] sm:$0xff]
        %v360 = vld [vmem:[#allocation2 + $0xa0] sm:$0xff]
        %v361 = vld [vmem:[#allocation2 + $0xa8] sm:$0xff]
        %v362 = vld [vmem:[#allocation2 + $0xb0] sm:$0xff]
        %v363 = vld [vmem:[#allocation2 + $0xb8] sm:$0xff]
        %v364 = vld [vmem:[#allocation2 + $0xc0] sm:$0xff]
        %v365 = vld [vmem:[#allocation2 + $0xc8] sm:$0xff]
        %v366 = vld [vmem:[#allocation2 + $0xd0] sm:$0xff]
        %v367 = vld [vmem:[#allocation2 + $0xd8] sm:$0xff]
        %v368 = vld [vmem:[#allocation2 + $0xe0] sm:$0xff]
        %v369 = vld [vmem:[#allocation2 + $0xe8] sm:$0xff]
        %v370 = vld [vmem:[#allocation2 + $0xf0] sm:$0xff]
        %v371 = vld [vmem:[#allocation2 + $0xf8] sm:$0xff]
        %v372 = vld [vmem:[#allocation2 + $0x100] sm:$0xff]
        %v373 = vld [vmem:[#allocation2 + $0x108] sm:$0xff]
        %v374 = vld [vmem:[#allocation2 + $0x110] sm:$0xff]
        %v375 = vld [vmem:[#allocation2 + $0x118] sm:$0xff]
        %v376 = vld [vmem:[#allocation2 + $0x120] sm:$0xff]
        %v377 = vld [vmem:[#allocation2 + $0x128] sm:$0xff]
        %v378 = vld [vmem:[#allocation2 + $0x130] sm:$0xff]
        %v379 = vld [vmem:[#allocation2 + $0x138] sm:$0xff]
        %v380 = vld [vmem:[#allocation2 + $0x140] sm:$0xff]
        %v381 = vld [vmem:[#allocation2 + $0x148] sm:$0xff]
        %v382 = vld [vmem:[#allocation2 + $0x150] sm:$0xff]
        %v383 = vld [vmem:[#allocation2 + $0x158] sm:$0xff]
        %v384 = vld [vmem:[#allocation2 + $0x160] sm:$0xff]
        %v385 = vld [vmem:[#allocation2 + $0x168] sm:$0xff]
        %v386 = vld [vmem:[#allocation2 + $0x170] sm:$0xff]
        %v387 = vld [vmem:[#allocation2 + $0x178] sm:$0xff]
        %v388 = vld [vmem:[#allocation2 + $0x180] sm:$0xff]
        %v389 = vld [vmem:[#allocation2 + $0x188] sm:$0xff]
        %v390 = vld [vmem:[#allocation2 + $0x190] sm:$0xff]
        %v391 = vld [vmem:[#allocation2 + $0x198] sm:$0xff]
        %v392 = vld [vmem:[#allocation2 + $0x1a0] sm:$0xff]
        %v393 = vld [vmem:[#allocation2 + $0x1a8] sm:$0xff]
        %v394 = vld [vmem:[#allocation2 + $0x1b0] sm:$0xff]
        %v395 = vld [vmem:[#allocation2 + $0x1b8] sm:$0xff]
        %v396 = vld [vmem:[#allocation2 + $0x1c0] sm:$0xff]
        %v397 = vld [vmem:[#allocation2 + $0x1c8] sm:$0xff]
        %v398 = vld [vmem:[#allocation2 + $0x1d0] sm:$0xff]
        %v399 = vld [vmem:[#allocation2 + $0x1d8] sm:$0xff]
        %v400 = vld [vmem:[#allocation2 + $0x1e0] sm:$0xff]
        %v401 = vld [vmem:[#allocation2 + $0x1e8] sm:$0xff]
        %v402 = vld [vmem:[#allocation2 + $0x1f0] sm:$0xff]
        %v403 = vld [vmem:[#allocation2 + $0x1f8] sm:$0xff]
        %v404 = vld [vmem:[#allocation2 + $0x200] sm:$0xff]
        %v405 = vld [vmem:[#allocation2 + $0x208] sm:$0xff]
        %v406 = vld [vmem:[#allocation2 + $0x210] sm:$0xff]
        %v407 = vld [vmem:[#allocation2 + $0x218] sm:$0xff]
        %v408 = vld [vmem:[#allocation2 + $0x220] sm:$0xff]
        %v409 = vld [vmem:[#allocation2 + $0x228] sm:$0xff]
        %v410 = vld [vmem:[#allocation2 + $0x230] sm:$0xff]
        %v411 = vld [vmem:[#allocation2 + $0x238] sm:$0xff]
        %v412 = vld [vmem:[#allocation2 + $0x240] sm:$0xff]
        %v413 = vld [vmem:[#allocation2 + $0x248] sm:$0xff]
        %v414 = vld [vmem:[#allocation2 + $0x250] sm:$0xff]
        %v415 = vld [vmem:[#allocation2 + $0x258] sm:$0xff]
        %v416 = vld [vmem:[#allocation2 + $0x260] sm:$0xff]
        %v417 = vld [vmem:[#allocation2 + $0x268] sm:$0xff]
        %v418 = vld [vmem:[#allocation2 + $0x270] sm:$0xff]
        %v419 = vld [vmem:[#allocation2 + $0x278] sm:$0xff]
        %v420 = vld [vmem:[#allocation2 + $0x280] sm:$0xff]
        %v421 = vld [vmem:[#allocation2 + $0x288] sm:$0xff]
        %v422 = vld [vmem:[#allocation2 + $0x290] sm:$0xff]
        %v423 = vld [vmem:[#allocation2 + $0x298] sm:$0xff]
        %v424 = vld [vmem:[#allocation2 + $0x2a0] sm:$0xff]
        %v425 = vld [vmem:[#allocation2 + $0x2a8] sm:$0xff]
        %v426 = vld [vmem:[#allocation2 + $0x2b0] sm:$0xff]
        %v427 = vld [vmem:[#allocation2 + $0x2b8] sm:$0xff]
        %v428 = vld [vmem:[#allocation2 + $0x2c0] sm:$0xff]
        %v429 = vld [vmem:[#allocation2 + $0x2c8] sm:$0xff]
        %v430 = vld [vmem:[#allocation2 + $0x2d0] sm:$0xff]
        %v431 = vld [vmem:[#allocation2 + $0x2d8] sm:$0xff]
        %v432 = vld [vmem:[#allocation2 + $0x2e0] sm:$0xff]
        %v433 = vld [vmem:[#allocation2 + $0x2e8] sm:$0xff]
        %v434 = vld [vmem:[#allocation2 + $0x2f0] sm:$0xff]
        %v435 = vld [vmem:[#allocation2 + $0x2f8] sm:$0xff]
        %v436 = vld [vmem:[#allocation2 + $0x300] sm:$0xff]
        %v437 = vld [vmem:[#allocation2 + $0x308] sm:$0xff]
        %v438 = vld [vmem:[#allocation2 + $0x310] sm:$0xff]
        %v439 = vld [vmem:[#allocation2 + $0x318] sm:$0xff]
        %v440 = vld [vmem:[#allocation2 + $0x320] sm:$0xff]
        %v441 = vld [vmem:[#allocation2 + $0x328] sm:$0xff]
        %v442 = vld [vmem:[#allocation2 + $0x330] sm:$0xff]
        %v443 = vld [vmem:[#allocation2 + $0x338] sm:$0xff]
        %v444 = vld [vmem:[#allocation2 + $0x340] sm:$0xff]
        %v445 = vld [vmem:[#allocation2 + $0x348] sm:$0xff]
        %v446 = vld [vmem:[#allocation2 + $0x350] sm:$0xff]
        %v447 = vld [vmem:[#allocation2 + $0x358] sm:$0xff]
        %v448 = vld [vmem:[#allocation2 + $0x360] sm:$0xff]
        %v449 = vld [vmem:[#allocation2 + $0x368] sm:$0xff]
        %v450 = vld [vmem:[#allocation2 + $0x370] sm:$0xff]
        %v451 = vld [vmem:[#allocation2 + $0x378] sm:$0xff]
        %v452 = vld [vmem:[#allocation2 + $0x380] sm:$0xff]
        %v453 = vld [vmem:[#allocation2 + $0x388] sm:$0xff]
        %v454 = vld [vmem:[#allocation2 + $0x390] sm:$0xff]
        %v455 = vld [vmem:[#allocation2 + $0x398] sm:$0xff]
        %v456 = vld [vmem:[#allocation2 + $0x3a0] sm:$0xff]
        %v457 = vld [vmem:[#allocation2 + $0x3a8] sm:$0xff]
        %v458 = vld [vmem:[#allocation2 + $0x3b0] sm:$0xff]
        %v459 = vld [vmem:[#allocation2 + $0x3b8] sm:$0xff]
        %v460 = vld [vmem:[#allocation2 + $0x3c0] sm:$0xff]
        %v461 = vld [vmem:[#allocation2 + $0x3c8] sm:$0xff]
        %v462 = vld [vmem:[#allocation2 + $0x3d0] sm:$0xff]
        %v463 = vld [vmem:[#allocation2 + $0x3d8] sm:$0xff]
        %v464 = vld [vmem:[#allocation2 + $0x3e0] sm:$0xff]
        %v465 = vld [vmem:[#allocation2 + $0x3e8] sm:$0xff]
        %v466 = vld [vmem:[#allocation2 + $0x3f0] sm:$0xff]
        %v467 = vld [vmem:[#allocation2 + $0x3f8] sm:$0xff]
        %v468 = vld [vmem:[#allocation2 + $0x400] sm:$0xff]
        %v469 = vld [vmem:[#allocation2 + $0x408] sm:$0xff]
        %v470 = vld [vmem:[#allocation2 + $0x410] sm:$0xff]
        %v471 = vld [vmem:[#allocation2 + $0x418] sm:$0xff]
        %v472 = vld [vmem:[#allocation2 + $0x420] sm:$0xff]
        %v473 = vld [vmem:[#allocation2 + $0x428] sm:$0xff]
        %v474 = vld [vmem:[#allocation2 + $0x430] sm:$0xff]
        %v475 = vld [vmem:[#allocation2 + $0x438] sm:$0xff]
        %v476 = vld [vmem:[#allocation2 + $0x440] sm:$0xff]
        %v477 = vld [vmem:[#allocation2 + $0x448] sm:$0xff]
        %v478 = vld [vmem:[#allocation2 + $0x450] sm:$0xff]
        %v479 = vld [vmem:[#allocation2 + $0x458] sm:$0xff]
        %v480 = vld [vmem:[#allocation2 + $0x460] sm:$0xff]
        %v481 = vld [vmem:[#allocation2 + $0x468] sm:$0xff]
        %v482 = vld [vmem:[#allocation2 + $0x470] sm:$0xff]
        %v483 = vld [vmem:[#allocation2 + $0x478] sm:$0xff]
        %v484 = vld [vmem:[#allocation2 + $0x480] sm:$0xff]
        %v485 = vld [vmem:[#allocation2 + $0x488] sm:$0xff]
        %v486 = vld [vmem:[#allocation2 + $0x490] sm:$0xff]
        %v487 = vld [vmem:[#allocation2 + $0x498] sm:$0xff]
        %v488 = vld [vmem:[#allocation2 + $0x4a0] sm:$0xff]
        %v489 = vld [vmem:[#allocation2 + $0x4a8] sm:$0xff]
        %v490 = vld [vmem:[#allocation2 + $0x4b0] sm:$0xff]
        %v491 = vld [vmem:[#allocation2 + $0x4b8] sm:$0xff]
        %v492 = vld [vmem:[#allocation2 + $0x4c0] sm:$0xff]
        %v493 = vld [vmem:[#allocation2 + $0x4c8] sm:$0xff]
        %v494 = vld [vmem:[#allocation2 + $0x4d0] sm:$0xff]
        %v495 = vld [vmem:[#allocation2 + $0x4d8] sm:$0xff]
        %v496 = vld [vmem:[#allocation2 + $0x4e0] sm:$0xff]
        %v497 = vld [vmem:[#allocation2 + $0x4e8] sm:$0xff]
        %v498 = vld [vmem:[#allocation2 + $0x4f0] sm:$0xff]
        %v499 = vld [vmem:[#allocation2 + $0x4f8] sm:$0xff]
        %v500 = vld [vmem:[#allocation2 + $0x500] sm:$0xff]
        %v501 = vld [vmem:[#allocation2 + $0x508] sm:$0xff]
        %v502 = vld [vmem:[#allocation2 + $0x510] sm:$0xff]
        %v503 = vld [vmem:[#allocation2 + $0x518] sm:$0xff]
        %v504 = vld [vmem:[#allocation2 + $0x520] sm:$0xff]
        %v505 = vld [vmem:[#allocation2 + $0x528] sm:$0xff]
        %v506 = vld [vmem:[#allocation2 + $0x530] sm:$0xff]
        %v507 = vld [vmem:[#allocation2 + $0x538] sm:$0xff]
        %v508 = vld [vmem:[#allocation2 + $0x540] sm:$0xff]
        %v509 = vld [vmem:[#allocation2 + $0x548] sm:$0xff]
        %v510 = vld [vmem:[#allocation2 + $0x550] sm:$0xff]
        %v511 = vld [vmem:[#allocation2 + $0x558] sm:$0xff]
        %v512 = vld [vmem:[#allocation2 + $0x560] sm:$0xff]
        %v513 = vld [vmem:[#allocation2 + $0x568] sm:$0xff]
        %v514 = vld [vmem:[#allocation2 + $0x570] sm:$0xff]
        %v515 = vld [vmem:[#allocation2 + $0x578] sm:$0xff]
        %v516 = vld [vmem:[#allocation2 + $0x580] sm:$0xff]
        %v517 = vld [vmem:[#allocation2 + $0x588] sm:$0xff]
        %v518 = vld [vmem:[#allocation2 + $0x590] sm:$0xff]
        %v519 = vld [vmem:[#allocation2 + $0x598] sm:$0xff]
        %v520 = vld [vmem:[#allocation2 + $0x5a0] sm:$0xff]
        %v521 = vld [vmem:[#allocation2 + $0x5a8] sm:$0xff]
        %v522 = vld [vmem:[#allocation2 + $0x5b0] sm:$0xff]
        %v523 = vld [vmem:[#allocation2 + $0x5b8] sm:$0xff]
        %v524 = vld [vmem:[#allocation2 + $0x5c0] sm:$0xff]
        %v525 = vld [vmem:[#allocation2 + $0x5c8] sm:$0xff]
        %v526 = vld [vmem:[#allocation2 + $0x5d0] sm:$0xff]
        %v527 = vld [vmem:[#allocation2 + $0x5d8] sm:$0xff]
        %v528 = vld [vmem:[#allocation2 + $0x5e0] sm:$0xff]
        %v529 = vld [vmem:[#allocation2 + $0x5e8] sm:$0xff]
        %v530 = vld [vmem:[#allocation2 + $0x5f0] sm:$0xff]
        %v531 = vld [vmem:[#allocation2 + $0x5f8] sm:$0xff]
        %v532 = vld [vmem:[#allocation2 + $0x600] sm:$0xff]
        %v533 = vld [vmem:[#allocation2 + $0x608] sm:$0xff]
        %v534 = vld [vmem:[#allocation2 + $0x610] sm:$0xff]
        %v535 = vld [vmem:[#allocation2 + $0x618] sm:$0xff]
        %v536 = vld [vmem:[#allocation2 + $0x620] sm:$0xff]
        %v537 = vld [vmem:[#allocation2 + $0x628] sm:$0xff]
        %v538 = vld [vmem:[#allocation2 + $0x630] sm:$0xff]
        %v539 = vld [vmem:[#allocation2 + $0x638] sm:$0xff]
        %v540 = vld [vmem:[#allocation2 + $0x640] sm:$0xff]
        %v541 = vld [vmem:[#allocation2 + $0x648] sm:$0xff]
        %v542 = vld [vmem:[#allocation2 + $0x650] sm:$0xff]
        %v543 = vld [vmem:[#allocation2 + $0x658] sm:$0xff]
        %v544 = vld [vmem:[#allocation2 + $0x660] sm:$0xff]
        %v545 = vld [vmem:[#allocation2 + $0x668] sm:$0xff]
        %v546 = vld [vmem:[#allocation2 + $0x670] sm:$0xff]
        %v547 = vld [vmem:[#allocation2 + $0x678] sm:$0xff]
        %v548 = vld [vmem:[#allocation2 + $0x680] sm:$0xff]
        %v549 = vld [vmem:[#allocation2 + $0x688] sm:$0xff]
        %v550 = vld [vmem:[#allocation2 + $0x690] sm:$0xff]
        %v551 = vld [vmem:[#allocation2 + $0x698] sm:$0xff]
        %v552 = vld [vmem:[#allocation2 + $0x6a0] sm:$0xff]
        %v553 = vld [vmem:[#allocation2 + $0x6a8] sm:$0xff]
        %v554 = vld [vmem:[#allocation2 + $0x6b0] sm:$0xff]
        %v555 = vld [vmem:[#allocation2 + $0x6b8] sm:$0xff]
        %v556 = vld [vmem:[#allocation2 + $0x6c0] sm:$0xff]
        %v557 = vld [vmem:[#allocation2 + $0x6c8] sm:$0xff]
        %v558 = vld [vmem:[#allocation2 + $0x6d0] sm:$0xff]
        %v559 = vld [vmem:[#allocation2 + $0x6d8] sm:$0xff]
        %v560 = vld [vmem:[#allocation2 + $0x6e0] sm:$0xff]
        %v561 = vld [vmem:[#allocation2 + $0x6e8] sm:$0xff]
        %v562 = vld [vmem:[#allocation2 + $0x6f0] sm:$0xff]
        %v563 = vld [vmem:[#allocation2 + $0x6f8] sm:$0xff]
        %v564 = vld [vmem:[#allocation2 + $0x700] sm:$0xff]
        %v565 = vld [vmem:[#allocation2 + $0x708] sm:$0xff]
        %v566 = vld [vmem:[#allocation2 + $0x710] sm:$0xff]
        %v567 = vld [vmem:[#allocation2 + $0x718] sm:$0xff]
        %v568 = vld [vmem:[#allocation2 + $0x720] sm:$0xff]
        %v569 = vld [vmem:[#allocation2 + $0x728] sm:$0xff]
        %v570 = vld [vmem:[#allocation2 + $0x730] sm:$0xff]
        %v571 = vld [vmem:[#allocation2 + $0x738] sm:$0xff]
        %v572 = vld [vmem:[#allocation2 + $0x740] sm:$0xff]
        %v573 = vld [vmem:[#allocation2 + $0x748] sm:$0xff]
        %v574 = vld [vmem:[#allocation2 + $0x750] sm:$0xff]
        %v575 = vld [vmem:[#allocation2 + $0x758] sm:$0xff]
        %v576 = vld [vmem:[#allocation2 + $0x760] sm:$0xff]
        %v577 = vld [vmem:[#allocation2 + $0x768] sm:$0xff]
        %v578 = vld [vmem:[#allocation2 + $0x770] sm:$0xff]
        %v579 = vld [vmem:[#allocation2 + $0x778] sm:$0xff]
        %v580 = vld [vmem:[#allocation2 + $0x780] sm:$0xff]
        %v581 = vld [vmem:[#allocation2 + $0x788] sm:$0xff]
        %v582 = vld [vmem:[#allocation2 + $0x790] sm:$0xff]
        %v583 = vld [vmem:[#allocation2 + $0x798] sm:$0xff]
        %v584 = vld [vmem:[#allocation2 + $0x7a0] sm:$0xff]
        %v585 = vld [vmem:[#allocation2 + $0x7a8] sm:$0xff]
        %v586 = vld [vmem:[#allocation2 + $0x7b0] sm:$0xff]
        %v587 = vld [vmem:[#allocation2 + $0x7b8] sm:$0xff]
        %v588 = vld [vmem:[#allocation2 + $0x7c0] sm:$0xff]
        %v589 = vld [vmem:[#allocation2 + $0x7c8] sm:$0xff]
        %v590 = vld [vmem:[#allocation2 + $0x7d0] sm:$0xff]
        %v591 = vld [vmem:[#allocation2 + $0x7d8] sm:$0xff]
        %v592 = vld [vmem:[#allocation2 + $0x7e0] sm:$0xff]
        %v593 = vld [vmem:[#allocation2 + $0x7e8] sm:$0xff]
        %v594 = vld [vmem:[#allocation2 + $0x7f0] sm:$0xff]
        %v595 = vld [vmem:[#allocation2 + $0x7f8] sm:$0xff]
        %v612 = vunpack.c.l.b16 %v324
        %v613 = vunpack.c.h.b16 %v324
        %v614 = vunpack.c.l.b16 %v325
        %v615 = vunpack.c.h.b16 %v325
        %v616 = vunpack.c.l.b16 %v326
        %v617 = vunpack.c.h.b16 %v326
        %v618 = vunpack.c.l.b16 %v327
        %v619 = vunpack.c.h.b16 %v327
        %v620 = vunpack.c.l.b16 %v328
        %v621 = vunpack.c.h.b16 %v328
        %v622 = vunpack.c.l.b16 %v329
        %v623 = vunpack.c.h.b16 %v329
        %v624 = vunpack.c.l.b16 %v330
        %v625 = vunpack.c.h.b16 %v330
        %v626 = vunpack.c.l.b16 %v331
        %v627 = vunpack.c.h.b16 %v331
        %v628 = vunpack.c.l.b16 %v332
        %v629 = vunpack.c.h.b16 %v332
        %v630 = vunpack.c.l.b16 %v333
        %v631 = vunpack.c.h.b16 %v333
        %v632 = vunpack.c.l.b16 %v334
        %v633 = vunpack.c.h.b16 %v334
        %v634 = vunpack.c.l.b16 %v335
        %v635 = vunpack.c.h.b16 %v335
        %v636 = vunpack.c.l.b16 %v336
        %v637 = vunpack.c.h.b16 %v336
        %v638 = vunpack.c.l.b16 %v337
        %v639 = vunpack.c.h.b16 %v337
        %v640 = vunpack.c.l.b16 %v338
        %v641 = vunpack.c.h.b16 %v338
        %v642 = vunpack.c.l.b16 %v339
        %v643 = vunpack.c.h.b16 %v339
        %v644 = vpack.c.b16 %v614, %v612
        %v645 = vpack.c.b16 %v615, %v613
        %v646 = vpack.c.b16 %v618, %v616
        %v647 = vpack.c.b16 %v619, %v617
        %v648 = vpack.c.b16 %v622, %v620
        %v649 = vpack.c.b16 %v623, %v621
        %v650 = vpack.c.b16 %v626, %v624
        %v651 = vpack.c.b16 %v627, %v625
        %v652 = vpack.c.b16 %v630, %v628
        %v653 = vpack.c.b16 %v631, %v629
        %v654 = vpack.c.b16 %v634, %v632
        %v655 = vpack.c.b16 %v635, %v633
        %v656 = vpack.c.b16 %v638, %v636
        %v657 = vpack.c.b16 %v639, %v637
        %v658 = vpack.c.b16 %v642, %v640
        %v659 = vpack.c.b16 %v643, %v641
        %v932 = vunpack.c.l.b16 %v340
        %v933 = vunpack.c.h.b16 %v340
        %v934 = vunpack.c.l.b16 %v341
        %v935 = vunpack.c.h.b16 %v341
        %v936 = vunpack.c.l.b16 %v342
        %v937 = vunpack.c.h.b16 %v342
        %v938 = vunpack.c.l.b16 %v343
        %v939 = vunpack.c.h.b16 %v343
        %v940 = vunpack.c.l.b16 %v344
        %v941 = vunpack.c.h.b16 %v344
        %v942 = vunpack.c.l.b16 %v345
        %v943 = vunpack.c.h.b16 %v345
        %v944 = vunpack.c.l.b16 %v346
        %v945 = vunpack.c.h.b16 %v346
        %v946 = vunpack.c.l.b16 %v347
        %v947 = vunpack.c.h.b16 %v347
        %v948 = vunpack.c.l.b16 %v348
        %v949 = vunpack.c.h.b16 %v348
        %v950 = vunpack.c.l.b16 %v349
        %v951 = vunpack.c.h.b16 %v349
        %v952 = vunpack.c.l.b16 %v350
        %v953 = vunpack.c.h.b16 %v350
        %v954 = vunpack.c.l.b16 %v351
        %v955 = vunpack.c.h.b16 %v351
        %v956 = vunpack.c.l.b16 %v352
        %v957 = vunpack.c.h.b16 %v352
        %v958 = vunpack.c.l.b16 %v353
        %v959 = vunpack.c.h.b16 %v353
        %v960 = vunpack.c.l.b16 %v354
        %v961 = vunpack.c.h.b16 %v354
        %v962 = vunpack.c.l.b16 %v355
        %v963 = vunpack.c.h.b16 %v355
        %v964 = vunpack.c.l.b16 %v356
        %v965 = vunpack.c.h.b16 %v356
        %v966 = vunpack.c.l.b16 %v357
        %v967 = vunpack.c.h.b16 %v357
        %v968 = vunpack.c.l.b16 %v358
        %v969 = vunpack.c.h.b16 %v358
        %v970 = vunpack.c.l.b16 %v359
        %v971 = vunpack.c.h.b16 %v359
        %v972 = vunpack.c.l.b16 %v360
        %v973 = vunpack.c.h.b16 %v360
        %v974 = vunpack.c.l.b16 %v361
        %v975 = vunpack.c.h.b16 %v361
        %v976 = vunpack.c.l.b16 %v362
        %v977 = vunpack.c.h.b16 %v362
        %v978 = vunpack.c.l.b16 %v363
        %v979 = vunpack.c.h.b16 %v363
        %v980 = vunpack.c.l.b16 %v364
        %v981 = vunpack.c.h.b16 %v364
        %v982 = vunpack.c.l.b16 %v365
        %v983 = vunpack.c.h.b16 %v365
        %v984 = vunpack.c.l.b16 %v366
        %v985 = vunpack.c.h.b16 %v366
        %v986 = vunpack.c.l.b16 %v367
        %v987 = vunpack.c.h.b16 %v367
        %v988 = vunpack.c.l.b16 %v368
        %v989 = vunpack.c.h.b16 %v368
        %v990 = vunpack.c.l.b16 %v369
        %v991 = vunpack.c.h.b16 %v369
        %v992 = vunpack.c.l.b16 %v370
        %v993 = vunpack.c.h.b16 %v370
        %v994 = vunpack.c.l.b16 %v371
        %v995 = vunpack.c.h.b16 %v371
        %v996 = vunpack.c.l.b16 %v372
        %v997 = vunpack.c.h.b16 %v372
        %v998 = vunpack.c.l.b16 %v373
        %v999 = vunpack.c.h.b16 %v373
        %v1000 = vunpack.c.l.b16 %v374
        %v1001 = vunpack.c.h.b16 %v374
        %v1002 = vunpack.c.l.b16 %v375
        %v1003 = vunpack.c.h.b16 %v375
        %v1004 = vunpack.c.l.b16 %v376
        %v1005 = vunpack.c.h.b16 %v376
        %v1006 = vunpack.c.l.b16 %v377
        %v1007 = vunpack.c.h.b16 %v377
        %v1008 = vunpack.c.l.b16 %v378
        %v1009 = vunpack.c.h.b16 %v378
        %v1010 = vunpack.c.l.b16 %v379
        %v1011 = vunpack.c.h.b16 %v379
        %v1012 = vunpack.c.l.b16 %v380
        %v1013 = vunpack.c.h.b16 %v380
        %v1014 = vunpack.c.l.b16 %v381
        %v1015 = vunpack.c.h.b16 %v381
        %v1016 = vunpack.c.l.b16 %v382
        %v1017 = vunpack.c.h.b16 %v382
        %v1018 = vunpack.c.l.b16 %v383
        %v1019 = vunpack.c.h.b16 %v383
        %v1020 = vunpack.c.l.b16 %v384
        %v1021 = vunpack.c.h.b16 %v384
        %v1022 = vunpack.c.l.b16 %v385
        %v1023 = vunpack.c.h.b16 %v385
        %v1024 = vunpack.c.l.b16 %v386
        %v1025 = vunpack.c.h.b16 %v386
        %v1026 = vunpack.c.l.b16 %v387
        %v1027 = vunpack.c.h.b16 %v387
        %v1028 = vunpack.c.l.b16 %v388
        %v1029 = vunpack.c.h.b16 %v388
        %v1030 = vunpack.c.l.b16 %v389
        %v1031 = vunpack.c.h.b16 %v389
        %v1032 = vunpack.c.l.b16 %v390
        %v1033 = vunpack.c.h.b16 %v390
        %v1034 = vunpack.c.l.b16 %v391
        %v1035 = vunpack.c.h.b16 %v391
        %v1036 = vunpack.c.l.b16 %v392
        %v1037 = vunpack.c.h.b16 %v392
        %v1038 = vunpack.c.l.b16 %v393
        %v1039 = vunpack.c.h.b16 %v393
        %v1040 = vunpack.c.l.b16 %v394
        %v1041 = vunpack.c.h.b16 %v394
        %v1042 = vunpack.c.l.b16 %v395
        %v1043 = vunpack.c.h.b16 %v395
        %v1044 = vunpack.c.l.b16 %v396
        %v1045 = vunpack.c.h.b16 %v396
        %v1046 = vunpack.c.l.b16 %v397
        %v1047 = vunpack.c.h.b16 %v397
        %v1048 = vunpack.c.l.b16 %v398
        %v1049 = vunpack.c.h.b16 %v398
        %v1050 = vunpack.c.l.b16 %v399
        %v1051 = vunpack.c.h.b16 %v399
        %v1052 = vunpack.c.l.b16 %v400
        %v1053 = vunpack.c.h.b16 %v400
        %v1054 = vunpack.c.l.b16 %v401
        %v1055 = vunpack.c.h.b16 %v401
        %v1056 = vunpack.c.l.b16 %v402
        %v1057 = vunpack.c.h.b16 %v402
        %v1058 = vunpack.c.l.b16 %v403
        %v1059 = vunpack.c.h.b16 %v403
        %v1060 = vunpack.c.l.b16 %v404
        %v1061 = vunpack.c.h.b16 %v404
        %v1062 = vunpack.c.l.b16 %v405
        %v1063 = vunpack.c.h.b16 %v405
        %v1064 = vunpack.c.l.b16 %v406
        %v1065 = vunpack.c.h.b16 %v406
        %v1066 = vunpack.c.l.b16 %v407
        %v1067 = vunpack.c.h.b16 %v407
        %v1068 = vunpack.c.l.b16 %v408
        %v1069 = vunpack.c.h.b16 %v408
        %v1070 = vunpack.c.l.b16 %v409
        %v1071 = vunpack.c.h.b16 %v409
        %v1072 = vunpack.c.l.b16 %v410
        %v1073 = vunpack.c.h.b16 %v410
        %v1074 = vunpack.c.l.b16 %v411
        %v1075 = vunpack.c.h.b16 %v411
        %v1076 = vunpack.c.l.b16 %v412
        %v1077 = vunpack.c.h.b16 %v412
        %v1078 = vunpack.c.l.b16 %v413
        %v1079 = vunpack.c.h.b16 %v413
        %v1080 = vunpack.c.l.b16 %v414
        %v1081 = vunpack.c.h.b16 %v414
        %v1082 = vunpack.c.l.b16 %v415
        %v1083 = vunpack.c.h.b16 %v415
        %v1084 = vunpack.c.l.b16 %v416
        %v1085 = vunpack.c.h.b16 %v416
        %v1086 = vunpack.c.l.b16 %v417
        %v1087 = vunpack.c.h.b16 %v417
        %v1088 = vunpack.c.l.b16 %v418
        %v1089 = vunpack.c.h.b16 %v418
        %v1090 = vunpack.c.l.b16 %v419
        %v1091 = vunpack.c.h.b16 %v419
        %v1092 = vunpack.c.l.b16 %v420
        %v1093 = vunpack.c.h.b16 %v420
        %v1094 = vunpack.c.l.b16 %v421
        %v1095 = vunpack.c.h.b16 %v421
        %v1096 = vunpack.c.l.b16 %v422
        %v1097 = vunpack.c.h.b16 %v422
        %v1098 = vunpack.c.l.b16 %v423
        %v1099 = vunpack.c.h.b16 %v423
        %v1100 = vunpack.c.l.b16 %v424
        %v1101 = vunpack.c.h.b16 %v424
        %v1102 = vunpack.c.l.b16 %v425
        %v1103 = vunpack.c.h.b16 %v425
        %v1104 = vunpack.c.l.b16 %v426
        %v1105 = vunpack.c.h.b16 %v426
        %v1106 = vunpack.c.l.b16 %v427
        %v1107 = vunpack.c.h.b16 %v427
        %v1108 = vunpack.c.l.b16 %v428
        %v1109 = vunpack.c.h.b16 %v428
        %v1110 = vunpack.c.l.b16 %v429
        %v1111 = vunpack.c.h.b16 %v429
        %v1112 = vunpack.c.l.b16 %v430
        %v1113 = vunpack.c.h.b16 %v430
        %v1114 = vunpack.c.l.b16 %v431
        %v1115 = vunpack.c.h.b16 %v431
        %v1116 = vunpack.c.l.b16 %v432
        %v1117 = vunpack.c.h.b16 %v432
        %v1118 = vunpack.c.l.b16 %v433
        %v1119 = vunpack.c.h.b16 %v433
        %v1120 = vunpack.c.l.b16 %v434
        %v1121 = vunpack.c.h.b16 %v434
        %v1122 = vunpack.c.l.b16 %v435
        %v1123 = vunpack.c.h.b16 %v435
        %v1124 = vunpack.c.l.b16 %v436
        %v1125 = vunpack.c.h.b16 %v436
        %v1126 = vunpack.c.l.b16 %v437
        %v1127 = vunpack.c.h.b16 %v437
        %v1128 = vunpack.c.l.b16 %v438
        %v1129 = vunpack.c.h.b16 %v438
        %v1130 = vunpack.c.l.b16 %v439
        %v1131 = vunpack.c.h.b16 %v439
        %v1132 = vunpack.c.l.b16 %v440
        %v1133 = vunpack.c.h.b16 %v440
        %v1134 = vunpack.c.l.b16 %v441
        %v1135 = vunpack.c.h.b16 %v441
        %v1136 = vunpack.c.l.b16 %v442
        %v1137 = vunpack.c.h.b16 %v442
        %v1138 = vunpack.c.l.b16 %v443
        %v1139 = vunpack.c.h.b16 %v443
        %v1140 = vunpack.c.l.b16 %v444
        %v1141 = vunpack.c.h.b16 %v444
        %v1142 = vunpack.c.l.b16 %v445
        %v1143 = vunpack.c.h.b16 %v445
        %v1144 = vunpack.c.l.b16 %v446
        %v1145 = vunpack.c.h.b16 %v446
        %v1146 = vunpack.c.l.b16 %v447
        %v1147 = vunpack.c.h.b16 %v447
        %v1148 = vunpack.c.l.b16 %v448
        %v1149 = vunpack.c.h.b16 %v448
        %v1150 = vunpack.c.l.b16 %v449
        %v1151 = vunpack.c.h.b16 %v449
        %v1152 = vunpack.c.l.b16 %v450
        %v1153 = vunpack.c.h.b16 %v450
        %v1154 = vunpack.c.l.b16 %v451
        %v1155 = vunpack.c.h.b16 %v451
        %v1156 = vunpack.c.l.b16 %v452
        %v1157 = vunpack.c.h.b16 %v452
        %v1158 = vunpack.c.l.b16 %v453
        %v1159 = vunpack.c.h.b16 %v453
        %v1160 = vunpack.c.l.b16 %v454
        %v1161 = vunpack.c.h.b16 %v454
        %v1162 = vunpack.c.l.b16 %v455
        %v1163 = vunpack.c.h.b16 %v455
        %v1164 = vunpack.c.l.b16 %v456
        %v1165 = vunpack.c.h.b16 %v456
        %v1166 = vunpack.c.l.b16 %v457
        %v1167 = vunpack.c.h.b16 %v457
        %v1168 = vunpack.c.l.b16 %v458
        %v1169 = vunpack.c.h.b16 %v458
        %v1170 = vunpack.c.l.b16 %v459
        %v1171 = vunpack.c.h.b16 %v459
        %v1172 = vunpack.c.l.b16 %v460
        %v1173 = vunpack.c.h.b16 %v460
        %v1174 = vunpack.c.l.b16 %v461
        %v1175 = vunpack.c.h.b16 %v461
        %v1176 = vunpack.c.l.b16 %v462
        %v1177 = vunpack.c.h.b16 %v462
        %v1178 = vunpack.c.l.b16 %v463
        %v1179 = vunpack.c.h.b16 %v463
        %v1180 = vunpack.c.l.b16 %v464
        %v1181 = vunpack.c.h.b16 %v464
        %v1182 = vunpack.c.l.b16 %v465
        %v1183 = vunpack.c.h.b16 %v465
        %v1184 = vunpack.c.l.b16 %v466
        %v1185 = vunpack.c.h.b16 %v466
        %v1186 = vunpack.c.l.b16 %v467
        %v1187 = vunpack.c.h.b16 %v467
        %v1188 = vunpack.c.l.b16 %v468
        %v1189 = vunpack.c.h.b16 %v468
        %v1190 = vunpack.c.l.b16 %v469
        %v1191 = vunpack.c.h.b16 %v469
        %v1192 = vunpack.c.l.b16 %v470
        %v1193 = vunpack.c.h.b16 %v470
        %v1194 = vunpack.c.l.b16 %v471
        %v1195 = vunpack.c.h.b16 %v471
        %v1196 = vunpack.c.l.b16 %v472
        %v1197 = vunpack.c.h.b16 %v472
        %v1198 = vunpack.c.l.b16 %v473
        %v1199 = vunpack.c.h.b16 %v473
        %v1200 = vunpack.c.l.b16 %v474
        %v1201 = vunpack.c.h.b16 %v474
        %v1202 = vunpack.c.l.b16 %v475
        %v1203 = vunpack.c.h.b16 %v475
        %v1204 = vunpack.c.l.b16 %v476
        %v1205 = vunpack.c.h.b16 %v476
        %v1206 = vunpack.c.l.b16 %v477
        %v1207 = vunpack.c.h.b16 %v477
        %v1208 = vunpack.c.l.b16 %v478
        %v1209 = vunpack.c.h.b16 %v478
        %v1210 = vunpack.c.l.b16 %v479
        %v1211 = vunpack.c.h.b16 %v479
        %v1212 = vunpack.c.l.b16 %v480
        %v1213 = vunpack.c.h.b16 %v480
        %v1214 = vunpack.c.l.b16 %v481
        %v1215 = vunpack.c.h.b16 %v481
        %v1216 = vunpack.c.l.b16 %v482
        %v1217 = vunpack.c.h.b16 %v482
        %v1218 = vunpack.c.l.b16 %v483
        %v1219 = vunpack.c.h.b16 %v483
        %v1220 = vunpack.c.l.b16 %v484
        %v1221 = vunpack.c.h.b16 %v484
        %v1222 = vunpack.c.l.b16 %v485
        %v1223 = vunpack.c.h.b16 %v485
        %v1224 = vunpack.c.l.b16 %v486
        %v1225 = vunpack.c.h.b16 %v486
        %v1226 = vunpack.c.l.b16 %v487
        %v1227 = vunpack.c.h.b16 %v487
        %v1228 = vunpack.c.l.b16 %v488
        %v1229 = vunpack.c.h.b16 %v488
        %v1230 = vunpack.c.l.b16 %v489
        %v1231 = vunpack.c.h.b16 %v489
        %v1232 = vunpack.c.l.b16 %v490
        %v1233 = vunpack.c.h.b16 %v490
        %v1234 = vunpack.c.l.b16 %v491
        %v1235 = vunpack.c.h.b16 %v491
        %v1236 = vunpack.c.l.b16 %v492
        %v1237 = vunpack.c.h.b16 %v492
        %v1238 = vunpack.c.l.b16 %v493
        %v1239 = vunpack.c.h.b16 %v493
        %v1240 = vunpack.c.l.b16 %v494
        %v1241 = vunpack.c.h.b16 %v494
        %v1242 = vunpack.c.l.b16 %v495
        %v1243 = vunpack.c.h.b16 %v495
        %v1244 = vunpack.c.l.b16 %v496
        %v1245 = vunpack.c.h.b16 %v496
        %v1246 = vunpack.c.l.b16 %v497
        %v1247 = vunpack.c.h.b16 %v497
        %v1248 = vunpack.c.l.b16 %v498
        %v1249 = vunpack.c.h.b16 %v498
        %v1250 = vunpack.c.l.b16 %v499
        %v1251 = vunpack.c.h.b16 %v499
        %v1252 = vunpack.c.l.b16 %v500
        %v1253 = vunpack.c.h.b16 %v500
        %v1254 = vunpack.c.l.b16 %v501
        %v1255 = vunpack.c.h.b16 %v501
        %v1256 = vunpack.c.l.b16 %v502
        %v1257 = vunpack.c.h.b16 %v502
        %v1258 = vunpack.c.l.b16 %v503
        %v1259 = vunpack.c.h.b16 %v503
        %v1260 = vunpack.c.l.b16 %v504
        %v1261 = vunpack.c.h.b16 %v504
        %v1262 = vunpack.c.l.b16 %v505
        %v1263 = vunpack.c.h.b16 %v505
        %v1264 = vunpack.c.l.b16 %v506
        %v1265 = vunpack.c.h.b16 %v506
        %v1266 = vunpack.c.l.b16 %v507
        %v1267 = vunpack.c.h.b16 %v507
        %v1268 = vunpack.c.l.b16 %v508
        %v1269 = vunpack.c.h.b16 %v508
        %v1270 = vunpack.c.l.b16 %v509
        %v1271 = vunpack.c.h.b16 %v509
        %v1272 = vunpack.c.l.b16 %v510
        %v1273 = vunpack.c.h.b16 %v510
        %v1274 = vunpack.c.l.b16 %v511
        %v1275 = vunpack.c.h.b16 %v511
        %v1276 = vunpack.c.l.b16 %v512
        %v1277 = vunpack.c.h.b16 %v512
        %v1278 = vunpack.c.l.b16 %v513
        %v1279 = vunpack.c.h.b16 %v513
        %v1280 = vunpack.c.l.b16 %v514
        %v1281 = vunpack.c.h.b16 %v514
        %v1282 = vunpack.c.l.b16 %v515
        %v1283 = vunpack.c.h.b16 %v515
        %v1284 = vunpack.c.l.b16 %v516
        %v1285 = vunpack.c.h.b16 %v516
        %v1286 = vunpack.c.l.b16 %v517
        %v1287 = vunpack.c.h.b16 %v517
        %v1288 = vunpack.c.l.b16 %v518
        %v1289 = vunpack.c.h.b16 %v518
        %v1290 = vunpack.c.l.b16 %v519
        %v1291 = vunpack.c.h.b16 %v519
        %v1292 = vunpack.c.l.b16 %v520
        %v1293 = vunpack.c.h.b16 %v520
        %v1294 = vunpack.c.l.b16 %v521
        %v1295 = vunpack.c.h.b16 %v521
        %v1296 = vunpack.c.l.b16 %v522
        %v1297 = vunpack.c.h.b16 %v522
        %v1298 = vunpack.c.l.b16 %v523
        %v1299 = vunpack.c.h.b16 %v523
        %v1300 = vunpack.c.l.b16 %v524
        %v1301 = vunpack.c.h.b16 %v524
        %v1302 = vunpack.c.l.b16 %v525
        %v1303 = vunpack.c.h.b16 %v525
        %v1304 = vunpack.c.l.b16 %v526
        %v1305 = vunpack.c.h.b16 %v526
        %v1306 = vunpack.c.l.b16 %v527
        %v1307 = vunpack.c.h.b16 %v527
        %v1308 = vunpack.c.l.b16 %v528
        %v1309 = vunpack.c.h.b16 %v528
        %v1310 = vunpack.c.l.b16 %v529
        %v1311 = vunpack.c.h.b16 %v529
        %v1312 = vunpack.c.l.b16 %v530
        %v1313 = vunpack.c.h.b16 %v530
        %v1314 = vunpack.c.l.b16 %v531
        %v1315 = vunpack.c.h.b16 %v531
        %v1316 = vunpack.c.l.b16 %v532
        %v1317 = vunpack.c.h.b16 %v532
        %v1318 = vunpack.c.l.b16 %v533
        %v1319 = vunpack.c.h.b16 %v533
        %v1320 = vunpack.c.l.b16 %v534
        %v1321 = vunpack.c.h.b16 %v534
        %v1322 = vunpack.c.l.b16 %v535
        %v1323 = vunpack.c.h.b16 %v535
        %v1324 = vunpack.c.l.b16 %v536
        %v1325 = vunpack.c.h.b16 %v536
        %v1326 = vunpack.c.l.b16 %v537
        %v1327 = vunpack.c.h.b16 %v537
        %v1328 = vunpack.c.l.b16 %v538
        %v1329 = vunpack.c.h.b16 %v538
        %v1330 = vunpack.c.l.b16 %v539
        %v1331 = vunpack.c.h.b16 %v539
        %v1332 = vunpack.c.l.b16 %v540
        %v1333 = vunpack.c.h.b16 %v540
        %v1334 = vunpack.c.l.b16 %v541
        %v1335 = vunpack.c.h.b16 %v541
        %v1336 = vunpack.c.l.b16 %v542
        %v1337 = vunpack.c.h.b16 %v542
        %v1338 = vunpack.c.l.b16 %v543
        %v1339 = vunpack.c.h.b16 %v543
        %v1340 = vunpack.c.l.b16 %v544
        %v1341 = vunpack.c.h.b16 %v544
        %v1342 = vunpack.c.l.b16 %v545
        %v1343 = vunpack.c.h.b16 %v545
        %v1344 = vunpack.c.l.b16 %v546
        %v1345 = vunpack.c.h.b16 %v546
        %v1346 = vunpack.c.l.b16 %v547
        %v1347 = vunpack.c.h.b16 %v547
        %v1348 = vunpack.c.l.b16 %v548
        %v1349 = vunpack.c.h.b16 %v548
        %v1350 = vunpack.c.l.b16 %v549
        %v1351 = vunpack.c.h.b16 %v549
        %v1352 = vunpack.c.l.b16 %v550
        %v1353 = vunpack.c.h.b16 %v550
        %v1354 = vunpack.c.l.b16 %v551
        %v1355 = vunpack.c.h.b16 %v551
        %v1356 = vunpack.c.l.b16 %v552
        %v1357 = vunpack.c.h.b16 %v552
        %v1358 = vunpack.c.l.b16 %v553
        %v1359 = vunpack.c.h.b16 %v553
        %v1360 = vunpack.c.l.b16 %v554
        %v1361 = vunpack.c.h.b16 %v554
        %v1362 = vunpack.c.l.b16 %v555
        %v1363 = vunpack.c.h.b16 %v555
        %v1364 = vunpack.c.l.b16 %v556
        %v1365 = vunpack.c.h.b16 %v556
        %v1366 = vunpack.c.l.b16 %v557
        %v1367 = vunpack.c.h.b16 %v557
        %v1368 = vunpack.c.l.b16 %v558
        %v1369 = vunpack.c.h.b16 %v558
        %v1370 = vunpack.c.l.b16 %v559
        %v1371 = vunpack.c.h.b16 %v559
        %v1372 = vunpack.c.l.b16 %v560
        %v1373 = vunpack.c.h.b16 %v560
        %v1374 = vunpack.c.l.b16 %v561
        %v1375 = vunpack.c.h.b16 %v561
        %v1376 = vunpack.c.l.b16 %v562
        %v1377 = vunpack.c.h.b16 %v562
        %v1378 = vunpack.c.l.b16 %v563
        %v1379 = vunpack.c.h.b16 %v563
        %v1380 = vunpack.c.l.b16 %v564
        %v1381 = vunpack.c.h.b16 %v564
        %v1382 = vunpack.c.l.b16 %v565
        %v1383 = vunpack.c.h.b16 %v565
        %v1384 = vunpack.c.l.b16 %v566
        %v1385 = vunpack.c.h.b16 %v566
        %v1386 = vunpack.c.l.b16 %v567
        %v1387 = vunpack.c.h.b16 %v567
        %v1388 = vunpack.c.l.b16 %v568
        %v1389 = vunpack.c.h.b16 %v568
        %v1390 = vunpack.c.l.b16 %v569
        %v1391 = vunpack.c.h.b16 %v569
        %v1392 = vunpack.c.l.b16 %v570
        %v1393 = vunpack.c.h.b16 %v570
        %v1394 = vunpack.c.l.b16 %v571
        %v1395 = vunpack.c.h.b16 %v571
        %v1396 = vunpack.c.l.b16 %v572
        %v1397 = vunpack.c.h.b16 %v572
        %v1398 = vunpack.c.l.b16 %v573
        %v1399 = vunpack.c.h.b16 %v573
        %v1400 = vunpack.c.l.b16 %v574
        %v1401 = vunpack.c.h.b16 %v574
        %v1402 = vunpack.c.l.b16 %v575
        %v1403 = vunpack.c.h.b16 %v575
        %v1404 = vunpack.c.l.b16 %v576
        %v1405 = vunpack.c.h.b16 %v576
        %v1406 = vunpack.c.l.b16 %v577
        %v1407 = vunpack.c.h.b16 %v577
        %v1408 = vunpack.c.l.b16 %v578
        %v1409 = vunpack.c.h.b16 %v578
        %v1410 = vunpack.c.l.b16 %v579
        %v1411 = vunpack.c.h.b16 %v579
        %v1412 = vunpack.c.l.b16 %v580
        %v1413 = vunpack.c.h.b16 %v580
        %v1414 = vunpack.c.l.b16 %v581
        %v1415 = vunpack.c.h.b16 %v581
        %v1416 = vunpack.c.l.b16 %v582
        %v1417 = vunpack.c.h.b16 %v582
        %v1418 = vunpack.c.l.b16 %v583
        %v1419 = vunpack.c.h.b16 %v583
        %v1420 = vunpack.c.l.b16 %v584
        %v1421 = vunpack.c.h.b16 %v584
        %v1422 = vunpack.c.l.b16 %v585
        %v1423 = vunpack.c.h.b16 %v585
        %v1424 = vunpack.c.l.b16 %v586
        %v1425 = vunpack.c.h.b16 %v586
        %v1426 = vunpack.c.l.b16 %v587
        %v1427 = vunpack.c.h.b16 %v587
        %v1428 = vunpack.c.l.b16 %v588
        %v1429 = vunpack.c.h.b16 %v588
        %v1430 = vunpack.c.l.b16 %v589
        %v1431 = vunpack.c.h.b16 %v589
        %v1432 = vunpack.c.l.b16 %v590
        %v1433 = vunpack.c.h.b16 %v590
        %v1434 = vunpack.c.l.b16 %v591
        %v1435 = vunpack.c.h.b16 %v591
        %v1436 = vunpack.c.l.b16 %v592
        %v1437 = vunpack.c.h.b16 %v592
        %v1438 = vunpack.c.l.b16 %v593
        %v1439 = vunpack.c.h.b16 %v593
        %v1440 = vunpack.c.l.b16 %v594
        %v1441 = vunpack.c.h.b16 %v594
        %v1442 = vunpack.c.l.b16 %v595
        %v1443 = vunpack.c.h.b16 %v595
        %v1444 = vpack.c.b16 %v948, %v932
        %v1445 = vpack.c.b16 %v949, %v933
        %v1446 = vpack.c.b16 %v950, %v934
        %v1447 = vpack.c.b16 %v951, %v935
        %v1448 = vpack.c.b16 %v952, %v936
        %v1449 = vpack.c.b16 %v953, %v937
        %v1450 = vpack.c.b16 %v954, %v938
        %v1451 = vpack.c.b16 %v955, %v939
        %v1452 = vpack.c.b16 %v956, %v940
        %v1453 = vpack.c.b16 %v957, %v941
        %v1454 = vpack.c.b16 %v958, %v942
        %v1455 = vpack.c.b16 %v959, %v943
        %v1456 = vpack.c.b16 %v960, %v944
        %v1457 = vpack.c.b16 %v961, %v945
        %v1458 = vpack.c.b16 %v962, %v946
        %v1459 = vpack.c.b16 %v963, %v947
        %v1460 = vpack.c.b16 %v980, %v964
        %v1461 = vpack.c.b16 %v981, %v965
        %v1462 = vpack.c.b16 %v982, %v966
        %v1463 = vpack.c.b16 %v983, %v967
        %v1464 = vpack.c.b16 %v984, %v968
        %v1465 = vpack.c.b16 %v985, %v969
        %v1466 = vpack.c.b16 %v986, %v970
        %v1467 = vpack.c.b16 %v987, %v971
        %v1468 = vpack.c.b16 %v988, %v972
        %v1469 = vpack.c.b16 %v989, %v973
        %v1470 = vpack.c.b16 %v990, %v974
        %v1471 = vpack.c.b16 %v991, %v975
        %v1472 = vpack.c.b16 %v992, %v976
        %v1473 = vpack.c.b16 %v993, %v977
        %v1474 = vpack.c.b16 %v994, %v978
        %v1475 = vpack.c.b16 %v995, %v979
        %v1476 = vpack.c.b16 %v1012, %v996
        %v1477 = vpack.c.b16 %v1013, %v997
        %v1478 = vpack.c.b16 %v1014, %v998
        %v1479 = vpack.c.b16 %v1015, %v999
        %v1480 = vpack.c.b16 %v1016, %v1000
        %v1481 = vpack.c.b16 %v1017, %v1001
        %v1482 = vpack.c.b16 %v1018, %v1002
        %v1483 = vpack.c.b16 %v1019, %v1003
        %v1484 = vpack.c.b16 %v1020, %v1004
        %v1485 = vpack.c.b16 %v1021, %v1005
        %v1486 = vpack.c.b16 %v1022, %v1006
        %v1487 = vpack.c.b16 %v1023, %v1007
        %v1488 = vpack.c.b16 %v1024, %v1008
        %v1489 = vpack.c.b16 %v1025, %v1009
        %v1490 = vpack.c.b16 %v1026, %v1010
        %v1491 = vpack.c.b16 %v1027, %v1011
        %v1492 = vpack.c.b16 %v1044, %v1028
        %v1493 = vpack.c.b16 %v1045, %v1029
        %v1494 = vpack.c.b16 %v1046, %v1030
        %v1495 = vpack.c.b16 %v1047, %v1031
        %v1496 = vpack.c.b16 %v1048, %v1032
        %v1497 = vpack.c.b16 %v1049, %v1033
        %v1498 = vpack.c.b16 %v1050, %v1034
        %v1499 = vpack.c.b16 %v1051, %v1035
        %v1500 = vpack.c.b16 %v1052, %v1036
        %v1501 = vpack.c.b16 %v1053, %v1037
        %v1502 = vpack.c.b16 %v1054, %v1038
        %v1503 = vpack.c.b16 %v1055, %v1039
        %v1504 = vpack.c.b16 %v1056, %v1040
        %v1505 = vpack.c.b16 %v1057, %v1041
        %v1506 = vpack.c.b16 %v1058, %v1042
        %v1507 = vpack.c.b16 %v1059, %v1043
        %v1508 = vpack.c.b16 %v1076, %v1060
        %v1509 = vpack.c.b16 %v1077, %v1061
        %v1510 = vpack.c.b16 %v1078, %v1062
        %v1511 = vpack.c.b16 %v1079, %v1063
        %v1512 = vpack.c.b16 %v1080, %v1064
        %v1513 = vpack.c.b16 %v1081, %v1065
        %v1514 = vpack.c.b16 %v1082, %v1066
        %v1515 = vpack.c.b16 %v1083, %v1067
        %v1516 = vpack.c.b16 %v1084, %v1068
        %v1517 = vpack.c.b16 %v1085, %v1069
        %v1518 = vpack.c.b16 %v1086, %v1070
        %v1519 = vpack.c.b16 %v1087, %v1071
        %v1520 = vpack.c.b16 %v1088, %v1072
        %v1521 = vpack.c.b16 %v1089, %v1073
        %v1522 = vpack.c.b16 %v1090, %v1074
        %v1523 = vpack.c.b16 %v1091, %v1075
        %v1524 = vpack.c.b16 %v1108, %v1092
        %v1525 = vpack.c.b16 %v1109, %v1093
        %v1526 = vpack.c.b16 %v1110, %v1094
        %v1527 = vpack.c.b16 %v1111, %v1095
        %v1528 = vpack.c.b16 %v1112, %v1096
        %v1529 = vpack.c.b16 %v1113, %v1097
        %v1530 = vpack.c.b16 %v1114, %v1098
        %v1531 = vpack.c.b16 %v1115, %v1099
        %v1532 = vpack.c.b16 %v1116, %v1100
        %v1533 = vpack.c.b16 %v1117, %v1101
        %v1534 = vpack.c.b16 %v1118, %v1102
        %v1535 = vpack.c.b16 %v1119, %v1103
        %v1536 = vpack.c.b16 %v1120, %v1104
        %v1537 = vpack.c.b16 %v1121, %v1105
        %v1538 = vpack.c.b16 %v1122, %v1106
        %v1539 = vpack.c.b16 %v1123, %v1107
        %v1540 = vpack.c.b16 %v1140, %v1124
        %v1541 = vpack.c.b16 %v1141, %v1125
        %v1542 = vpack.c.b16 %v1142, %v1126
        %v1543 = vpack.c.b16 %v1143, %v1127
        %v1544 = vpack.c.b16 %v1144, %v1128
        %v1545 = vpack.c.b16 %v1145, %v1129
        %v1546 = vpack.c.b16 %v1146, %v1130
        %v1547 = vpack.c.b16 %v1147, %v1131
        %v1548 = vpack.c.b16 %v1148, %v1132
        %v1549 = vpack.c.b16 %v1149, %v1133
        %v1550 = vpack.c.b16 %v1150, %v1134
        %v1551 = vpack.c.b16 %v1151, %v1135
        %v1552 = vpack.c.b16 %v1152, %v1136
        %v1553 = vpack.c.b16 %v1153, %v1137
        %v1554 = vpack.c.b16 %v1154, %v1138
        %v1555 = vpack.c.b16 %v1155, %v1139
        %v1556 = vpack.c.b16 %v1172, %v1156
        %v1557 = vpack.c.b16 %v1173, %v1157
        %v1558 = vpack.c.b16 %v1174, %v1158
        %v1559 = vpack.c.b16 %v1175, %v1159
        %v1560 = vpack.c.b16 %v1176, %v1160
        %v1561 = vpack.c.b16 %v1177, %v1161
        %v1562 = vpack.c.b16 %v1178, %v1162
        %v1563 = vpack.c.b16 %v1179, %v1163
        %v1564 = vpack.c.b16 %v1180, %v1164
        %v1565 = vpack.c.b16 %v1181, %v1165
        %v1566 = vpack.c.b16 %v1182, %v1166
        %v1567 = vpack.c.b16 %v1183, %v1167
        %v1568 = vpack.c.b16 %v1184, %v1168
        %v1569 = vpack.c.b16 %v1185, %v1169
        %v1570 = vpack.c.b16 %v1186, %v1170
        %v1571 = vpack.c.b16 %v1187, %v1171
        %v1572 = vpack.c.b16 %v1204, %v1188
        %v1573 = vpack.c.b16 %v1205, %v1189
        %v1574 = vpack.c.b16 %v1206, %v1190
        %v1575 = vpack.c.b16 %v1207, %v1191
        %v1576 = vpack.c.b16 %v1208, %v1192
        %v1577 = vpack.c.b16 %v1209, %v1193
        %v1578 = vpack.c.b16 %v1210, %v1194
        %v1579 = vpack.c.b16 %v1211, %v1195
        %v1580 = vpack.c.b16 %v1212, %v1196
        %v1581 = vpack.c.b16 %v1213, %v1197
        %v1582 = vpack.c.b16 %v1214, %v1198
        %v1583 = vpack.c.b16 %v1215, %v1199
        %v1584 = vpack.c.b16 %v1216, %v1200
        %v1585 = vpack.c.b16 %v1217, %v1201
        %v1586 = vpack.c.b16 %v1218, %v1202
        %v1587 = vpack.c.b16 %v1219, %v1203
        %v1588 = vpack.c.b16 %v1236, %v1220
        %v1589 = vpack.c.b16 %v1237, %v1221
        %v1590 = vpack.c.b16 %v1238, %v1222
        %v1591 = vpack.c.b16 %v1239, %v1223
        %v1592 = vpack.c.b16 %v1240, %v1224
        %v1593 = vpack.c.b16 %v1241, %v1225
        %v1594 = vpack.c.b16 %v1242, %v1226
        %v1595 = vpack.c.b16 %v1243, %v1227
        %v1596 = vpack.c.b16 %v1244, %v1228
        %v1597 = vpack.c.b16 %v1245, %v1229
        %v1598 = vpack.c.b16 %v1246, %v1230
        %v1599 = vpack.c.b16 %v1247, %v1231
        %v1600 = vpack.c.b16 %v1248, %v1232
        %v1601 = vpack.c.b16 %v1249, %v1233
        %v1602 = vpack.c.b16 %v1250, %v1234
        %v1603 = vpack.c.b16 %v1251, %v1235
        %v1604 = vpack.c.b16 %v1268, %v1252
        %v1605 = vpack.c.b16 %v1269, %v1253
        %v1606 = vpack.c.b16 %v1270, %v1254
        %v1607 = vpack.c.b16 %v1271, %v1255
        %v1608 = vpack.c.b16 %v1272, %v1256
        %v1609 = vpack.c.b16 %v1273, %v1257
        %v1610 = vpack.c.b16 %v1274, %v1258
        %v1611 = vpack.c.b16 %v1275, %v1259
        %v1612 = vpack.c.b16 %v1276, %v1260
        %v1613 = vpack.c.b16 %v1277, %v1261
        %v1614 = vpack.c.b16 %v1278, %v1262
        %v1615 = vpack.c.b16 %v1279, %v1263
        %v1616 = vpack.c.b16 %v1280, %v1264
        %v1617 = vpack.c.b16 %v1281, %v1265
        %v1618 = vpack.c.b16 %v1282, %v1266
        %v1619 = vpack.c.b16 %v1283, %v1267
        %v1620 = vpack.c.b16 %v1300, %v1284
        %v1621 = vpack.c.b16 %v1301, %v1285
        %v1622 = vpack.c.b16 %v1302, %v1286
        %v1623 = vpack.c.b16 %v1303, %v1287
        %v1624 = vpack.c.b16 %v1304, %v1288
        %v1625 = vpack.c.b16 %v1305, %v1289
        %v1626 = vpack.c.b16 %v1306, %v1290
        %v1627 = vpack.c.b16 %v1307, %v1291
        %v1628 = vpack.c.b16 %v1308, %v1292
        %v1629 = vpack.c.b16 %v1309, %v1293
        %v1630 = vpack.c.b16 %v1310, %v1294
        %v1631 = vpack.c.b16 %v1311, %v1295
        %v1632 = vpack.c.b16 %v1312, %v1296
        %v1633 = vpack.c.b16 %v1313, %v1297
        %v1634 = vpack.c.b16 %v1314, %v1298
        %v1635 = vpack.c.b16 %v1315, %v1299
        %v1636 = vpack.c.b16 %v1332, %v1316
        %v1637 = vpack.c.b16 %v1333, %v1317
        %v1638 = vpack.c.b16 %v1334, %v1318
        %v1639 = vpack.c.b16 %v1335, %v1319
        %v1640 = vpack.c.b16 %v1336, %v1320
        %v1641 = vpack.c.b16 %v1337, %v1321
        %v1642 = vpack.c.b16 %v1338, %v1322
        %v1643 = vpack.c.b16 %v1339, %v1323
        %v1644 = vpack.c.b16 %v1340, %v1324
        %v1645 = vpack.c.b16 %v1341, %v1325
        %v1646 = vpack.c.b16 %v1342, %v1326
        %v1647 = vpack.c.b16 %v1343, %v1327
        %v1648 = vpack.c.b16 %v1344, %v1328
        %v1649 = vpack.c.b16 %v1345, %v1329
        %v1650 = vpack.c.b16 %v1346, %v1330
        %v1651 = vpack.c.b16 %v1347, %v1331
        %v1652 = vpack.c.b16 %v1364, %v1348
        %v1653 = vpack.c.b16 %v1365, %v1349
        %v1654 = vpack.c.b16 %v1366, %v1350
        %v1655 = vpack.c.b16 %v1367, %v1351
        %v1656 = vpack.c.b16 %v1368, %v1352
        %v1657 = vpack.c.b16 %v1369, %v1353
        %v1658 = vpack.c.b16 %v1370, %v1354
        %v1659 = vpack.c.b16 %v1371, %v1355
        %v1660 = vpack.c.b16 %v1372, %v1356
        %v1661 = vpack.c.b16 %v1373, %v1357
        %v1662 = vpack.c.b16 %v1374, %v1358
        %v1663 = vpack.c.b16 %v1375, %v1359
        %v1664 = vpack.c.b16 %v1376, %v1360
        %v1665 = vpack.c.b16 %v1377, %v1361
        %v1666 = vpack.c.b16 %v1378, %v1362
        %v1667 = vpack.c.b16 %v1379, %v1363
        %v1668 = vpack.c.b16 %v1396, %v1380
        %v1669 = vpack.c.b16 %v1397, %v1381
        %v1670 = vpack.c.b16 %v1398, %v1382
        %v1671 = vpack.c.b16 %v1399, %v1383
        %v1672 = vpack.c.b16 %v1400, %v1384
        %v1673 = vpack.c.b16 %v1401, %v1385
        %v1674 = vpack.c.b16 %v1402, %v1386
        %v1675 = vpack.c.b16 %v1403, %v1387
        %v1676 = vpack.c.b16 %v1404, %v1388
        %v1677 = vpack.c.b16 %v1405, %v1389
        %v1678 = vpack.c.b16 %v1406, %v1390
        %v1679 = vpack.c.b16 %v1407, %v1391
        %v1680 = vpack.c.b16 %v1408, %v1392
        %v1681 = vpack.c.b16 %v1409, %v1393
        %v1682 = vpack.c.b16 %v1410, %v1394
        %v1683 = vpack.c.b16 %v1411, %v1395
        %v1684 = vpack.c.b16 %v1428, %v1412
        %v1685 = vpack.c.b16 %v1429, %v1413
        %v1686 = vpack.c.b16 %v1430, %v1414
        %v1687 = vpack.c.b16 %v1431, %v1415
        %v1688 = vpack.c.b16 %v1432, %v1416
        %v1689 = vpack.c.b16 %v1433, %v1417
        %v1690 = vpack.c.b16 %v1434, %v1418
        %v1691 = vpack.c.b16 %v1435, %v1419
        %v1692 = vpack.c.b16 %v1436, %v1420
        %v1693 = vpack.c.b16 %v1437, %v1421
        %v1694 = vpack.c.b16 %v1438, %v1422
        %v1695 = vpack.c.b16 %v1439, %v1423
        %v1696 = vpack.c.b16 %v1440, %v1424
        %v1697 = vpack.c.b16 %v1441, %v1425
        %v1698 = vpack.c.b16 %v1442, %v1426
        %v1699 = vpack.c.b16 %v1443, %v1427
        %1956 = vmatprep.subr.bf16.mxu0 %v1445
        %1957 = vmatpush1.bf16.msra.mxu0 %v1444
        %1958 = vmatprep.subr.bf16.mxu0 %v1461
        %1959 = vmatpush1.bf16.msra.mxu0 %v1460
        %1960 = vmatprep.subr.bf16.mxu0 %v1477
        %1961 = vmatpush1.bf16.msra.mxu0 %v1476
        %1962 = vmatprep.subr.bf16.mxu0 %v1493
        %1963 = vmatpush1.bf16.msra.mxu0 %v1492
        %1964 = vmatprep.subr.bf16.mxu0 %v1509
        %1965 = vmatpush1.bf16.msra.mxu0 %v1508
        %1966 = vmatprep.subr.bf16.mxu0 %v1525
        %1967 = vmatpush1.bf16.msra.mxu0 %v1524
        %1968 = vmatprep.subr.bf16.mxu0 %v1541
        %1969 = vmatpush1.bf16.msra.mxu0 %v1540
        %1970 = vmatprep.subr.bf16.mxu0 %v1557
        %1971 = vmatpush1.bf16.msra.mxu0 %v1556
        %1972 = vmatprep.subr.bf16.mxu0 %v1573
        %1973 = vmatpush1.bf16.msra.mxu0 %v1572
        %1974 = vmatprep.subr.bf16.mxu0 %v1589
        %1975 = vmatpush1.bf16.msra.mxu0 %v1588
        %1976 = vmatprep.subr.bf16.mxu0 %v1605
        %1977 = vmatpush1.bf16.msra.mxu0 %v1604
        %1978 = vmatprep.subr.bf16.mxu0 %v1621
        %1979 = vmatpush1.bf16.msra.mxu0 %v1620
        %1980 = vmatprep.subr.bf16.mxu0 %v1637
        %1981 = vmatpush1.bf16.msra.mxu0 %v1636
        %1982 = vmatprep.subr.bf16.mxu0 %v1653
        %1983 = vmatpush1.bf16.msra.mxu0 %v1652
        %1984 = vmatprep.subr.bf16.mxu0 %v1669
        %1985 = vmatpush1.bf16.msra.mxu0 %v1668
        %1986 = vmatprep.subr.bf16.mxu0 %v1685
        %1987 = vmatpush1.bf16.msra.mxu0 %v1684
        %1988 = vmatprep.mubr.bf16.mxu0 %v645
        %1989 = vmatmul.mubr.bf16.gmra.mrb[0].mxu0 %v644
        %v1990 = vpop.f32.mrb[0].mxu0
        %v1991 = vadd.f32 0.0, %v1990
        %v1992 = vpop.f32.mrb[0].mxu0
        %v1993 = vadd.f32 0.0, %v1992
        %v1994 = vpop.f32.mrb[0].mxu0
        %v1995 = vadd.f32 0.0, %v1994
        %v1996 = vpop.f32.mrb[0].mxu0
        %v1997 = vadd.f32 0.0, %v1996
        %1998 = vmatprep.mubr.bf16.mxu0 %v647
        %1999 = vmatmul.mubr.bf16.gmra.mrb[0].mxu0 %v646
        %v2000 = vpop.f32.mrb[0].mxu0
        %v2001 = vadd.f32 0.0, %v2000
        %v2002 = vpop.f32.mrb[0].mxu0
        %v2003 = vadd.f32 0.0, %v2002
        %v2004 = vpop.f32.mrb[0].mxu0
        %v2005 = vadd.f32 0.0, %v2004
        %v2006 = vpop.f32.mrb[0].mxu0
        %v2007 = vadd.f32 0.0, %v2006
        %2008 = vmatprep.mubr.bf16.mxu0 %v649
        %2009 = vmatmul.mubr.bf16.gmra.mrb[0].mxu0 %v648
        %v2010 = vpop.f32.mrb[0].mxu0
        %v2011 = vadd.f32 0.0, %v2010
        %v2012 = vpop.f32.mrb[0].mxu0
        %v2013 = vadd.f32 0.0, %v2012
        %v2014 = vpop.f32.mrb[0].mxu0
        %v2015 = vadd.f32 0.0, %v2014
        %v2016 = vpop.f32.mrb[0].mxu0
        %v2017 = vadd.f32 0.0, %v2016
        %2018 = vmatprep.mubr.bf16.mxu0 %v651
        %2019 = vmatmul.mubr.bf16.gmra.mrb[0].mxu0 %v650
        %v2020 = vpop.f32.mrb[0].mxu0
        %v2021 = vadd.f32 0.0, %v2020
        %v2022 = vpop.f32.mrb[0].mxu0
        %v2023 = vadd.f32 0.0, %v2022
        %v2024 = vpop.f32.mrb[0].mxu0
        %v2025 = vadd.f32 0.0, %v2024
        %v2026 = vpop.f32.mrb[0].mxu0
        %v2027 = vadd.f32 0.0, %v2026
        %2028 = vmatprep.mubr.bf16.mxu0 %v653
        %2029 = vmatmul.mubr.bf16.gmra.mrb[0].mxu0 %v652
        %v2030 = vpop.f32.mrb[0].mxu0
        %v2031 = vadd.f32 0.0, %v2030
        %v2032 = vpop.f32.mrb[0].mxu0
        %v2033 = vadd.f32 0.0, %v2032
        %v2034 = vpop.f32.mrb[0].mxu0
        %v2035 = vadd.f32 0.0, %v2034
        %v2036 = vpop.f32.mrb[0].mxu0
        %v2037 = vadd.f32 0.0, %v2036
        %2038 = vmatprep.mubr.bf16.mxu0 %v655
        %2039 = vmatmul.mubr.bf16.gmra.mrb[0].mxu0 %v654
        %v2040 = vpop.f32.mrb[0].mxu0
        %v2041 = vadd.f32 0.0, %v2040
        %v2042 = vpop.f32.mrb[0].mxu0
        %v2043 = vadd.f32 0.0, %v2042
        %v2044 = vpop.f32.mrb[0].mxu0
        %v2045 = vadd.f32 0.0, %v2044
        %v2046 = vpop.f32.mrb[0].mxu0
        %v2047 = vadd.f32 0.0, %v2046
        %2048 = vmatprep.mubr.bf16.mxu0 %v657
        %2049 = vmatmul.mubr.bf16.gmra.mrb[0].mxu0 %v656
        %v2050 = vpop.f32.mrb[0].mxu0
        %v2051 = vadd.f32 0.0, %v2050
        %v2052 = vpop.f32.mrb[0].mxu0
        %v2053 = vadd.f32 0.0, %v2052
        %v2054 = vpop.f32.mrb[0].mxu0
        %v2055 = vadd.f32 0.0, %v2054
        %v2056 = vpop.f32.mrb[0].mxu0
        %v2057 = vadd.f32 0.0, %v2056
        %2058 = vmatprep.mubr.bf16.mxu0 %v659
        %2059 = vmatmul.mubr.bf16.gmra.mrb[0].mxu0 %v658
        %v2060 = vpop.f32.mrb[0].mxu0
        %v2061 = vadd.f32 0.0, %v2060
        %v2062 = vpop.f32.mrb[0].mxu0
        %v2063 = vadd.f32 0.0, %v2062
        %v2064 = vpop.f32.mrb[0].mxu0
        %v2065 = vadd.f32 0.0, %v2064
        %v2066 = vpop.f32.mrb[0].mxu0
        %v2067 = vadd.f32 0.0, %v2066
        %2068 = vdwg.mxu0
        %2069 = vmatprep.subr.bf16.mxu0 %v1447
        %2070 = vmatpush1.bf16.msra.mxu0 %v1446
        %2071 = vmatprep.subr.bf16.mxu0 %v1463
        %2072 = vmatpush1.bf16.msra.mxu0 %v1462
        %2073 = vmatprep.subr.bf16.mxu0 %v1479
        %2074 = vmatpush1.bf16.msra.mxu0 %v1478
        %2075 = vmatprep.subr.bf16.mxu0 %v1495
        %2076 = vmatpush1.bf16.msra.mxu0 %v1494
        %2077 = vmatprep.subr.bf16.mxu0 %v1511
        %2078 = vmatpush1.bf16.msra.mxu0 %v1510
        %2079 = vmatprep.subr.bf16.mxu0 %v1527
        %2080 = vmatpush1.bf16.msra.mxu0 %v1526
        %2081 = vmatprep.subr.bf16.mxu0 %v1543
        %2082 = vmatpush1.bf16.msra.mxu0 %v1542
        %2083 = vmatprep.subr.bf16.mxu0 %v1559
        %2084 = vmatpush1.bf16.msra.mxu0 %v1558
        %2085 = vmatprep.subr.bf16.mxu0 %v1575
        %2086 = vmatpush1.bf16.msra.mxu0 %v1574
        %2087 = vmatprep.subr.bf16.mxu0 %v1591
        %2088 = vmatpush1.bf16.msra.mxu0 %v1590
        %2089 = vmatprep.subr.bf16.mxu0 %v1607
        %2090 = vmatpush1.bf16.msra.mxu0 %v1606
        %2091 = vmatprep.subr.bf16.mxu0 %v1623
        %2092 = vmatpush1.bf16.msra.mxu0 %v1622
        %2093 = vmatprep.subr.bf16.mxu0 %v1639
        %2094 = vmatpush1.bf16.msra.mxu0 %v1638
        %2095 = vmatprep.subr.bf16.mxu0 %v1655
        %2096 = vmatpush1.bf16.msra.mxu0 %v1654
        %2097 = vmatprep.subr.bf16.mxu0 %v1671
        %2098 = vmatpush1.bf16.msra.mxu0 %v1670
        %2099 = vmatprep.subr.bf16.mxu0 %v1687
        %2100 = vmatpush1.bf16.msra.mxu0 %v1686
        %2101 = vmatprep.mubr.bf16.mxu0 %v645
        %2102 = vmatmul.mubr.bf16.gmra.mrb[0].mxu0 %v644
        %v2103 = vpop.f32.mrb[0].mxu0
        %v2104 = vadd.f32 0.0, %v2103
        %v2105 = vpop.f32.mrb[0].mxu0
        %v2106 = vadd.f32 0.0, %v2105
        %v2107 = vpop.f32.mrb[0].mxu0
        %v2108 = vadd.f32 0.0, %v2107
        %v2109 = vpop.f32.mrb[0].mxu0
        %v2110 = vadd.f32 0.0, %v2109
        %2111 = vmatprep.mubr.bf16.mxu0 %v647
        %2112 = vmatmul.mubr.bf16.gmra.mrb[0].mxu0 %v646
        %v2113 = vpop.f32.mrb[0].mxu0
        %v2114 = vadd.f32 0.0, %v2113
        %v2115 = vpop.f32.mrb[0].mxu0
        %v2116 = vadd.f32 0.0, %v2115
        %v2117 = vpop.f32.mrb[0].mxu0
        %v2118 = vadd.f32 0.0, %v2117
        %v2119 = vpop.f32.mrb[0].mxu0
        %v2120 = vadd.f32 0.0, %v2119
        %2121 = vmatprep.mubr.bf16.mxu0 %v649
        %2122 = vmatmul.mubr.bf16.gmra.mrb[0].mxu0 %v648
        %v2123 = vpop.f32.mrb[0].mxu0
        %v2124 = vadd.f32 0.0, %v2123
        %v2125 = vpop.f32.mrb[0].mxu0
        %v2126 = vadd.f32 0.0, %v2125
        %v2127 = vpop.f32.mrb[0].mxu0
        %v2128 = vadd.f32 0.0, %v2127
        %v2129 = vpop.f32.mrb[0].mxu0
        %v2130 = vadd.f32 0.0, %v2129
        %2131 = vmatprep.mubr.bf16.mxu0 %v651
        %2132 = vmatmul.mubr.bf16.gmra.mrb[0].mxu0 %v650
        %v2133 = vpop.f32.mrb[0].mxu0
        %v2134 = vadd.f32 0.0, %v2133
        %v2135 = vpop.f32.mrb[0].mxu0
        %v2136 = vadd.f32 0.0, %v2135
        %v2137 = vpop.f32.mrb[0].mxu0
        %v2138 = vadd.f32 0.0, %v2137
        %v2139 = vpop.f32.mrb[0].mxu0
        %v2140 = vadd.f32 0.0, %v2139
        %2141 = vmatprep.mubr.bf16.mxu0 %v653
        %2142 = vmatmul.mubr.bf16.gmra.mrb[0].mxu0 %v652
        %v2143 = vpop.f32.mrb[0].mxu0
        %v2144 = vadd.f32 0.0, %v2143
        %v2145 = vpop.f32.mrb[0].mxu0
        %v2146 = vadd.f32 0.0, %v2145
        %v2147 = vpop.f32.mrb[0].mxu0
        %v2148 = vadd.f32 0.0, %v2147
        %v2149 = vpop.f32.mrb[0].mxu0
        %v2150 = vadd.f32 0.0, %v2149
        %2151 = vmatprep.mubr.bf16.mxu0 %v655
        %2152 = vmatmul.mubr.bf16.gmra.mrb[0].mxu0 %v654
        %v2153 = vpop.f32.mrb[0].mxu0
        %v2154 = vadd.f32 0.0, %v2153
        %v2155 = vpop.f32.mrb[0].mxu0
        %v2156 = vadd.f32 0.0, %v2155
        %v2157 = vpop.f32.mrb[0].mxu0
        %v2158 = vadd.f32 0.0, %v2157
        %v2159 = vpop.f32.mrb[0].mxu0
        %v2160 = vadd.f32 0.0, %v2159
        %2161 = vmatprep.mubr.bf16.mxu0 %v657
        %2162 = vmatmul.mubr.bf16.gmra.mrb[0].mxu0 %v656
        %v2163 = vpop.f32.mrb[0].mxu0
        %v2164 = vadd.f32 0.0, %v2163
        %v2165 = vpop.f32.mrb[0].mxu0
        %v2166 = vadd.f32 0.0, %v2165
        %v2167 = vpop.f32.mrb[0].mxu0
        %v2168 = vadd.f32 0.0, %v2167
        %v2169 = vpop.f32.mrb[0].mxu0
        %v2170 = vadd.f32 0.0, %v2169
        %2171 = vmatprep.mubr.bf16.mxu0 %v659
        %2172 = vmatmul.mubr.bf16.gmra.mrb[0].mxu0 %v658
        %v2173 = vpop.f32.mrb[0].mxu0
        %v2174 = vadd.f32 0.0, %v2173
        %v2175 = vpop.f32.mrb[0].mxu0
        %v2176 = vadd.f32 0.0, %v2175
        %v2177 = vpop.f32.mrb[0].mxu0
        %v2178 = vadd.f32 0.0, %v2177
        %v2179 = vpop.f32.mrb[0].mxu0
        %v2180 = vadd.f32 0.0, %v2179
        %2181 = vdwg.mxu0
        %2182 = vmatprep.subr.bf16.mxu0 %v1449
        %2183 = vmatpush1.bf16.msra.mxu0 %v1448
        %2184 = vmatprep.subr.bf16.mxu0 %v1465
        %2185 = vmatpush1.bf16.msra.mxu0 %v1464
        %2186 = vmatprep.subr.bf16.mxu0 %v1481
        %2187 = vmatpush1.bf16.msra.mxu0 %v1480
        %2188 = vmatprep.subr.bf16.mxu0 %v1497
        %2189 = vmatpush1.bf16.msra.mxu0 %v1496
        %2190 = vmatprep.subr.bf16.mxu0 %v1513
        %2191 = vmatpush1.bf16.msra.mxu0 %v1512
        %2192 = vmatprep.subr.bf16.mxu0 %v1529
        %2193 = vmatpush1.bf16.msra.mxu0 %v1528
        %2194 = vmatprep.subr.bf16.mxu0 %v1545
        %2195 = vmatpush1.bf16.msra.mxu0 %v1544
        %2196 = vmatprep.subr.bf16.mxu0 %v1561
        %2197 = vmatpush1.bf16.msra.mxu0 %v1560
        %2198 = vmatprep.subr.bf16.mxu0 %v1577
        %2199 = vmatpush1.bf16.msra.mxu0 %v1576
        %2200 = vmatprep.subr.bf16.mxu0 %v1593
        %2201 = vmatpush1.bf16.msra.mxu0 %v1592
        %2202 = vmatprep.subr.bf16.mxu0 %v1609
        %2203 = vmatpush1.bf16.msra.mxu0 %v1608
        %2204 = vmatprep.subr.bf16.mxu0 %v1625
        %2205 = vmatpush1.bf16.msra.mxu0 %v1624
        %2206 = vmatprep.subr.bf16.mxu0 %v1641
        %2207 = vmatpush1.bf16.msra.mxu0 %v1640
        %2208 = vmatprep.subr.bf16.mxu0 %v1657
        %2209 = vmatpush1.bf16.msra.mxu0 %v1656
        %2210 = vmatprep.subr.bf16.mxu0 %v1673
        %2211 = vmatpush1.bf16.msra.mxu0 %v1672
        %2212 = vmatprep.subr.bf16.mxu0 %v1689
        %2213 = vmatpush1.bf16.msra.mxu0 %v1688
        %2214 = vmatprep.mubr.bf16.mxu0 %v645
        %2215 = vmatmul.mubr.bf16.gmra.mrb[0].mxu0 %v644
        %v2216 = vpop.f32.mrb[0].mxu0
        %v2217 = vadd.f32 0.0, %v2216
        %v2218 = vpop.f32.mrb[0].mxu0
        %v2219 = vadd.f32 0.0, %v2218
        %v2220 = vpop.f32.mrb[0].mxu0
        %v2221 = vadd.f32 0.0, %v2220
        %v2222 = vpop.f32.mrb[0].mxu0
        %v2223 = vadd.f32 0.0, %v2222
        %2224 = vmatprep.mubr.bf16.mxu0 %v647
        %2225 = vmatmul.mubr.bf16.gmra.mrb[0].mxu0 %v646
        %v2226 = vpop.f32.mrb[0].mxu0
        %v2227 = vadd.f32 0.0, %v2226
        %v2228 = vpop.f32.mrb[0].mxu0
        %v2229 = vadd.f32 0.0, %v2228
        %v2230 = vpop.f32.mrb[0].mxu0
        %v2231 = vadd.f32 0.0, %v2230
        %v2232 = vpop.f32.mrb[0].mxu0
        %v2233 = vadd.f32 0.0, %v2232
        %2234 = vmatprep.mubr.bf16.mxu0 %v649
        %2235 = vmatmul.mubr.bf16.gmra.mrb[0].mxu0 %v648
        %v2236 = vpop.f32.mrb[0].mxu0
        %v2237 = vadd.f32 0.0, %v2236
        %v2238 = vpop.f32.mrb[0].mxu0
        %v2239 = vadd.f32 0.0, %v2238
        %v2240 = vpop.f32.mrb[0].mxu0
        %v2241 = vadd.f32 0.0, %v2240
        %v2242 = vpop.f32.mrb[0].mxu0
        %v2243 = vadd.f32 0.0, %v2242
        %2244 = vmatprep.mubr.bf16.mxu0 %v651
        %2245 = vmatmul.mubr.bf16.gmra.mrb[0].mxu0 %v650
        %v2246 = vpop.f32.mrb[0].mxu0
        %v2247 = vadd.f32 0.0, %v2246
        %v2248 = vpop.f32.mrb[0].mxu0
        %v2249 = vadd.f32 0.0, %v2248
        %v2250 = vpop.f32.mrb[0].mxu0
        %v2251 = vadd.f32 0.0, %v2250
        %v2252 = vpop.f32.mrb[0].mxu0
        %v2253 = vadd.f32 0.0, %v2252
        %2254 = vmatprep.mubr.bf16.mxu0 %v653
        %2255 = vmatmul.mubr.bf16.gmra.mrb[0].mxu0 %v652
        %v2256 = vpop.f32.mrb[0].mxu0
        %v2257 = vadd.f32 0.0, %v2256
        %v2258 = vpop.f32.mrb[0].mxu0
        %v2259 = vadd.f32 0.0, %v2258
        %v2260 = vpop.f32.mrb[0].mxu0
        %v2261 = vadd.f32 0.0, %v2260
        %v2262 = vpop.f32.mrb[0].mxu0
        %v2263 = vadd.f32 0.0, %v2262
        %2264 = vmatprep.mubr.bf16.mxu0 %v655
        %2265 = vmatmul.mubr.bf16.gmra.mrb[0].mxu0 %v654
        %v2266 = vpop.f32.mrb[0].mxu0
        %v2267 = vadd.f32 0.0, %v2266
        %v2268 = vpop.f32.mrb[0].mxu0
        %v2269 = vadd.f32 0.0, %v2268
        %v2270 = vpop.f32.mrb[0].mxu0
        %v2271 = vadd.f32 0.0, %v2270
        %v2272 = vpop.f32.mrb[0].mxu0
        %v2273 = vadd.f32 0.0, %v2272
        %2274 = vmatprep.mubr.bf16.mxu0 %v657
        %2275 = vmatmul.mubr.bf16.gmra.mrb[0].mxu0 %v656
        %v2276 = vpop.f32.mrb[0].mxu0
        %v2277 = vadd.f32 0.0, %v2276
        %v2278 = vpop.f32.mrb[0].mxu0
        %v2279 = vadd.f32 0.0, %v2278
        %v2280 = vpop.f32.mrb[0].mxu0
        %v2281 = vadd.f32 0.0, %v2280
        %v2282 = vpop.f32.mrb[0].mxu0
        %v2283 = vadd.f32 0.0, %v2282
        %2284 = vmatprep.mubr.bf16.mxu0 %v659
        %2285 = vmatmul.mubr.bf16.gmra.mrb[0].mxu0 %v658
        %v2286 = vpop.f32.mrb[0].mxu0
        %v2287 = vadd.f32 0.0, %v2286
        %v2288 = vpop.f32.mrb[0].mxu0
        %v2289 = vadd.f32 0.0, %v2288
        %v2290 = vpop.f32.mrb[0].mxu0
        %v2291 = vadd.f32 0.0, %v2290
        %v2292 = vpop.f32.mrb[0].mxu0
        %v2293 = vadd.f32 0.0, %v2292
        %2294 = vdwg.mxu0
        %2295 = vmatprep.subr.bf16.mxu0 %v1451
        %2296 = vmatpush1.bf16.msra.mxu0 %v1450
        %2297 = vmatprep.subr.bf16.mxu0 %v1467
        %2298 = vmatpush1.bf16.msra.mxu0 %v1466
        %2299 = vmatprep.subr.bf16.mxu0 %v1483
        %2300 = vmatpush1.bf16.msra.mxu0 %v1482
        %2301 = vmatprep.subr.bf16.mxu0 %v1499
        %2302 = vmatpush1.bf16.msra.mxu0 %v1498
        %2303 = vmatprep.subr.bf16.mxu0 %v1515
        %2304 = vmatpush1.bf16.msra.mxu0 %v1514
        %2305 = vmatprep.subr.bf16.mxu0 %v1531
        %2306 = vmatpush1.bf16.msra.mxu0 %v1530
        %2307 = vmatprep.subr.bf16.mxu0 %v1547
        %2308 = vmatpush1.bf16.msra.mxu0 %v1546
        %2309 = vmatprep.subr.bf16.mxu0 %v1563
        %2310 = vmatpush1.bf16.msra.mxu0 %v1562
        %2311 = vmatprep.subr.bf16.mxu0 %v1579
        %2312 = vmatpush1.bf16.msra.mxu0 %v1578
        %2313 = vmatprep.subr.bf16.mxu0 %v1595
        %2314 = vmatpush1.bf16.msra.mxu0 %v1594
        %2315 = vmatprep.subr.bf16.mxu0 %v1611
        %2316 = vmatpush1.bf16.msra.mxu0 %v1610
        %2317 = vmatprep.subr.bf16.mxu0 %v1627
        %2318 = vmatpush1.bf16.msra.mxu0 %v1626
        %2319 = vmatprep.subr.bf16.mxu0 %v1643
        %2320 = vmatpush1.bf16.msra.mxu0 %v1642
        %2321 = vmatprep.subr.bf16.mxu0 %v1659
        %2322 = vmatpush1.bf16.msra.mxu0 %v1658
        %2323 = vmatprep.subr.bf16.mxu0 %v1675
        %2324 = vmatpush1.bf16.msra.mxu0 %v1674
        %2325 = vmatprep.subr.bf16.mxu0 %v1691
        %2326 = vmatpush1.bf16.msra.mxu0 %v1690
        %2327 = vmatprep.mubr.bf16.mxu0 %v645
        %2328 = vmatmul.mubr.bf16.gmra.mrb[0].mxu0 %v644
        %v2329 = vpop.f32.mrb[0].mxu0
        %v2330 = vadd.f32 0.0, %v2329
        %v2331 = vpop.f32.mrb[0].mxu0
        %v2332 = vadd.f32 0.0, %v2331
        %v2333 = vpop.f32.mrb[0].mxu0
        %v2334 = vadd.f32 0.0, %v2333
        %v2335 = vpop.f32.mrb[0].mxu0
        %v2336 = vadd.f32 0.0, %v2335
        %2337 = vmatprep.mubr.bf16.mxu0 %v647
        %2338 = vmatmul.mubr.bf16.gmra.mrb[0].mxu0 %v646
        %v2339 = vpop.f32.mrb[0].mxu0
        %v2340 = vadd.f32 0.0, %v2339
        %v2341 = vpop.f32.mrb[0].mxu0
        %v2342 = vadd.f32 0.0, %v2341
        %v2343 = vpop.f32.mrb[0].mxu0
        %v2344 = vadd.f32 0.0, %v2343
        %v2345 = vpop.f32.mrb[0].mxu0
        %v2346 = vadd.f32 0.0, %v2345
        %2347 = vmatprep.mubr.bf16.mxu0 %v649
        %2348 = vmatmul.mubr.bf16.gmra.mrb[0].mxu0 %v648
        %v2349 = vpop.f32.mrb[0].mxu0
        %v2350 = vadd.f32 0.0, %v2349
        %v2351 = vpop.f32.mrb[0].mxu0
        %v2352 = vadd.f32 0.0, %v2351
        %v2353 = vpop.f32.mrb[0].mxu0
        %v2354 = vadd.f32 0.0, %v2353
        %v2355 = vpop.f32.mrb[0].mxu0
        %v2356 = vadd.f32 0.0, %v2355
        %2357 = vmatprep.mubr.bf16.mxu0 %v651
        %2358 = vmatmul.mubr.bf16.gmra.mrb[0].mxu0 %v650
        %v2359 = vpop.f32.mrb[0].mxu0
        %v2360 = vadd.f32 0.0, %v2359
        %v2361 = vpop.f32.mrb[0].mxu0
        %v2362 = vadd.f32 0.0, %v2361
        %v2363 = vpop.f32.mrb[0].mxu0
        %v2364 = vadd.f32 0.0, %v2363
        %v2365 = vpop.f32.mrb[0].mxu0
        %v2366 = vadd.f32 0.0, %v2365
        %2367 = vmatprep.mubr.bf16.mxu0 %v653
        %2368 = vmatmul.mubr.bf16.gmra.mrb[0].mxu0 %v652
        %v2369 = vpop.f32.mrb[0].mxu0
        %v2370 = vadd.f32 0.0, %v2369
        %v2371 = vpop.f32.mrb[0].mxu0
        %v2372 = vadd.f32 0.0, %v2371
        %v2373 = vpop.f32.mrb[0].mxu0
        %v2374 = vadd.f32 0.0, %v2373
        %v2375 = vpop.f32.mrb[0].mxu0
        %v2376 = vadd.f32 0.0, %v2375
        %2377 = vmatprep.mubr.bf16.mxu0 %v655
        %2378 = vmatmul.mubr.bf16.gmra.mrb[0].mxu0 %v654
        %v2379 = vpop.f32.mrb[0].mxu0
        %v2380 = vadd.f32 0.0, %v2379
        %v2381 = vpop.f32.mrb[0].mxu0
        %v2382 = vadd.f32 0.0, %v2381
        %v2383 = vpop.f32.mrb[0].mxu0
        %v2384 = vadd.f32 0.0, %v2383
        %v2385 = vpop.f32.mrb[0].mxu0
        %v2386 = vadd.f32 0.0, %v2385
        %2387 = vmatprep.mubr.bf16.mxu0 %v657
        %2388 = vmatmul.mubr.bf16.gmra.mrb[0].mxu0 %v656
        %v2389 = vpop.f32.mrb[0].mxu0
        %v2390 = vadd.f32 0.0, %v2389
        %v2391 = vpop.f32.mrb[0].mxu0
        %v2392 = vadd.f32 0.0, %v2391
        %v2393 = vpop.f32.mrb[0].mxu0
        %v2394 = vadd.f32 0.0, %v2393
        %v2395 = vpop.f32.mrb[0].mxu0
        %v2396 = vadd.f32 0.0, %v2395
        %2397 = vmatprep.mubr.bf16.mxu0 %v659
        %2398 = vmatmul.mubr.bf16.gmra.mrb[0].mxu0 %v658
        %v2399 = vpop.f32.mrb[0].mxu0
        %v2400 = vadd.f32 0.0, %v2399
        %v2401 = vpop.f32.mrb[0].mxu0
        %v2402 = vadd.f32 0.0, %v2401
        %v2403 = vpop.f32.mrb[0].mxu0
        %v2404 = vadd.f32 0.0, %v2403
        %v2405 = vpop.f32.mrb[0].mxu0
        %v2406 = vadd.f32 0.0, %v2405
        %2407 = vdwg.mxu0
        %2408 = vmatprep.subr.bf16.mxu0 %v1453
        %2409 = vmatpush1.bf16.msra.mxu0 %v1452
        %2410 = vmatprep.subr.bf16.mxu0 %v1469
        %2411 = vmatpush1.bf16.msra.mxu0 %v1468
        %2412 = vmatprep.subr.bf16.mxu0 %v1485
        %2413 = vmatpush1.bf16.msra.mxu0 %v1484
        %2414 = vmatprep.subr.bf16.mxu0 %v1501
        %2415 = vmatpush1.bf16.msra.mxu0 %v1500
        %2416 = vmatprep.subr.bf16.mxu0 %v1517
        %2417 = vmatpush1.bf16.msra.mxu0 %v1516
        %2418 = vmatprep.subr.bf16.mxu0 %v1533
        %2419 = vmatpush1.bf16.msra.mxu0 %v1532
        %2420 = vmatprep.subr.bf16.mxu0 %v1549
        %2421 = vmatpush1.bf16.msra.mxu0 %v1548
        %2422 = vmatprep.subr.bf16.mxu0 %v1565
        %2423 = vmatpush1.bf16.msra.mxu0 %v1564
        %2424 = vmatprep.subr.bf16.mxu0 %v1581
        %2425 = vmatpush1.bf16.msra.mxu0 %v1580
        %2426 = vmatprep.subr.bf16.mxu0 %v1597
        %2427 = vmatpush1.bf16.msra.mxu0 %v1596
        %2428 = vmatprep.subr.bf16.mxu0 %v1613
        %2429 = vmatpush1.bf16.msra.mxu0 %v1612
        %2430 = vmatprep.subr.bf16.mxu0 %v1629
        %2431 = vmatpush1.bf16.msra.mxu0 %v1628
        %2432 = vmatprep.subr.bf16.mxu0 %v1645
        %2433 = vmatpush1.bf16.msra.mxu0 %v1644
        %2434 = vmatprep.subr.bf16.mxu0 %v1661
        %2435 = vmatpush1.bf16.msra.mxu0 %v1660
        %2436 = vmatprep.subr.bf16.mxu0 %v1677
        %2437 = vmatpush1.bf16.msra.mxu0 %v1676
        %2438 = vmatprep.subr.bf16.mxu0 %v1693
        %2439 = vmatpush1.bf16.msra.mxu0 %v1692
        %2440 = vmatprep.mubr.bf16.mxu0 %v645
        %2441 = vmatmul.mubr.bf16.gmra.mrb[0].mxu0 %v644
        %v2442 = vpop.f32.mrb[0].mxu0
        %v2443 = vadd.f32 0.0, %v2442
        %v2444 = vpop.f32.mrb[0].mxu0
        %v2445 = vadd.f32 0.0, %v2444
        %v2446 = vpop.f32.mrb[0].mxu0
        %v2447 = vadd.f32 0.0, %v2446
        %v2448 = vpop.f32.mrb[0].mxu0
        %v2449 = vadd.f32 0.0, %v2448
        %2450 = vmatprep.mubr.bf16.mxu0 %v647
        %2451 = vmatmul.mubr.bf16.gmra.mrb[0].mxu0 %v646
        %v2452 = vpop.f32.mrb[0].mxu0
        %v2453 = vadd.f32 0.0, %v2452
        %v2454 = vpop.f32.mrb[0].mxu0
        %v2455 = vadd.f32 0.0, %v2454
        %v2456 = vpop.f32.mrb[0].mxu0
        %v2457 = vadd.f32 0.0, %v2456
        %v2458 = vpop.f32.mrb[0].mxu0
        %v2459 = vadd.f32 0.0, %v2458
        %2460 = vmatprep.mubr.bf16.mxu0 %v649
        %2461 = vmatmul.mubr.bf16.gmra.mrb[0].mxu0 %v648
        %v2462 = vpop.f32.mrb[0].mxu0
        %v2463 = vadd.f32 0.0, %v2462
        %v2464 = vpop.f32.mrb[0].mxu0
        %v2465 = vadd.f32 0.0, %v2464
        %v2466 = vpop.f32.mrb[0].mxu0
        %v2467 = vadd.f32 0.0, %v2466
        %v2468 = vpop.f32.mrb[0].mxu0
        %v2469 = vadd.f32 0.0, %v2468
        %2470 = vmatprep.mubr.bf16.mxu0 %v651
        %2471 = vmatmul.mubr.bf16.gmra.mrb[0].mxu0 %v650
        %v2472 = vpop.f32.mrb[0].mxu0
        %v2473 = vadd.f32 0.0, %v2472
        %v2474 = vpop.f32.mrb[0].mxu0
        %v2475 = vadd.f32 0.0, %v2474
        %v2476 = vpop.f32.mrb[0].mxu0
        %v2477 = vadd.f32 0.0, %v2476
        %v2478 = vpop.f32.mrb[0].mxu0
        %v2479 = vadd.f32 0.0, %v2478
        %2480 = vmatprep.mubr.bf16.mxu0 %v653
        %2481 = vmatmul.mubr.bf16.gmra.mrb[0].mxu0 %v652
        %v2482 = vpop.f32.mrb[0].mxu0
        %v2483 = vadd.f32 0.0, %v2482
        %v2484 = vpop.f32.mrb[0].mxu0
        %v2485 = vadd.f32 0.0, %v2484
        %v2486 = vpop.f32.mrb[0].mxu0
        %v2487 = vadd.f32 0.0, %v2486
        %v2488 = vpop.f32.mrb[0].mxu0
        %v2489 = vadd.f32 0.0, %v2488
        %2490 = vmatprep.mubr.bf16.mxu0 %v655
        %2491 = vmatmul.mubr.bf16.gmra.mrb[0].mxu0 %v654
        %v2492 = vpop.f32.mrb[0].mxu0
        %v2493 = vadd.f32 0.0, %v2492
        %v2494 = vpop.f32.mrb[0].mxu0
        %v2495 = vadd.f32 0.0, %v2494
        %v2496 = vpop.f32.mrb[0].mxu0
        %v2497 = vadd.f32 0.0, %v2496
        %v2498 = vpop.f32.mrb[0].mxu0
        %v2499 = vadd.f32 0.0, %v2498
        %2500 = vmatprep.mubr.bf16.mxu0 %v657
        %2501 = vmatmul.mubr.bf16.gmra.mrb[0].mxu0 %v656
        %v2502 = vpop.f32.mrb[0].mxu0
        %v2503 = vadd.f32 0.0, %v2502
        %v2504 = vpop.f32.mrb[0].mxu0
        %v2505 = vadd.f32 0.0, %v2504
        %v2506 = vpop.f32.mrb[0].mxu0
        %v2507 = vadd.f32 0.0, %v2506
        %v2508 = vpop.f32.mrb[0].mxu0
        %v2509 = vadd.f32 0.0, %v2508
        %2510 = vmatprep.mubr.bf16.mxu0 %v659
        %2511 = vmatmul.mubr.bf16.gmra.mrb[0].mxu0 %v658
        %v2512 = vpop.f32.mrb[0].mxu0
        %v2513 = vadd.f32 0.0, %v2512
        %v2514 = vpop.f32.mrb[0].mxu0
        %v2515 = vadd.f32 0.0, %v2514
        %v2516 = vpop.f32.mrb[0].mxu0
        %v2517 = vadd.f32 0.0, %v2516
        %v2518 = vpop.f32.mrb[0].mxu0
        %v2519 = vadd.f32 0.0, %v2518
        %2520 = vdwg.mxu0
        %2521 = vmatprep.subr.bf16.mxu0 %v1455
        %2522 = vmatpush1.bf16.msra.mxu0 %v1454
        %2523 = vmatprep.subr.bf16.mxu0 %v1471
        %2524 = vmatpush1.bf16.msra.mxu0 %v1470
        %2525 = vmatprep.subr.bf16.mxu0 %v1487
        %2526 = vmatpush1.bf16.msra.mxu0 %v1486
        %2527 = vmatprep.subr.bf16.mxu0 %v1503
        %2528 = vmatpush1.bf16.msra.mxu0 %v1502
        %2529 = vmatprep.subr.bf16.mxu0 %v1519
        %2530 = vmatpush1.bf16.msra.mxu0 %v1518
        %2531 = vmatprep.subr.bf16.mxu0 %v1535
        %2532 = vmatpush1.bf16.msra.mxu0 %v1534
        %2533 = vmatprep.subr.bf16.mxu0 %v1551
        %2534 = vmatpush1.bf16.msra.mxu0 %v1550
        %2535 = vmatprep.subr.bf16.mxu0 %v1567
        %2536 = vmatpush1.bf16.msra.mxu0 %v1566
        %2537 = vmatprep.subr.bf16.mxu0 %v1583
        %2538 = vmatpush1.bf16.msra.mxu0 %v1582
        %2539 = vmatprep.subr.bf16.mxu0 %v1599
        %2540 = vmatpush1.bf16.msra.mxu0 %v1598
        %2541 = vmatprep.subr.bf16.mxu0 %v1615
        %2542 = vmatpush1.bf16.msra.mxu0 %v1614
        %2543 = vmatprep.subr.bf16.mxu0 %v1631
        %2544 = vmatpush1.bf16.msra.mxu0 %v1630
        %2545 = vmatprep.subr.bf16.mxu0 %v1647
        %2546 = vmatpush1.bf16.msra.mxu0 %v1646
        %2547 = vmatprep.subr.bf16.mxu0 %v1663
        %2548 = vmatpush1.bf16.msra.mxu0 %v1662
        %2549 = vmatprep.subr.bf16.mxu0 %v1679
        %2550 = vmatpush1.bf16.msra.mxu0 %v1678
        %2551 = vmatprep.subr.bf16.mxu0 %v1695
        %2552 = vmatpush1.bf16.msra.mxu0 %v1694
        %2553 = vmatprep.mubr.bf16.mxu0 %v645
        %2554 = vmatmul.mubr.bf16.gmra.mrb[0].mxu0 %v644
        %v2555 = vpop.f32.mrb[0].mxu0
        %v2556 = vadd.f32 0.0, %v2555
        %v2557 = vpop.f32.mrb[0].mxu0
        %v2558 = vadd.f32 0.0, %v2557
        %v2559 = vpop.f32.mrb[0].mxu0
        %v2560 = vadd.f32 0.0, %v2559
        %v2561 = vpop.f32.mrb[0].mxu0
        %v2562 = vadd.f32 0.0, %v2561
        %2563 = vmatprep.mubr.bf16.mxu0 %v647
        %2564 = vmatmul.mubr.bf16.gmra.mrb[0].mxu0 %v646
        %v2565 = vpop.f32.mrb[0].mxu0
        %v2566 = vadd.f32 0.0, %v2565
        %v2567 = vpop.f32.mrb[0].mxu0
        %v2568 = vadd.f32 0.0, %v2567
        %v2569 = vpop.f32.mrb[0].mxu0
        %v2570 = vadd.f32 0.0, %v2569
        %v2571 = vpop.f32.mrb[0].mxu0
        %v2572 = vadd.f32 0.0, %v2571
        %2573 = vmatprep.mubr.bf16.mxu0 %v649
        %2574 = vmatmul.mubr.bf16.gmra.mrb[0].mxu0 %v648
        %v2575 = vpop.f32.mrb[0].mxu0
        %v2576 = vadd.f32 0.0, %v2575
        %v2577 = vpop.f32.mrb[0].mxu0
        %v2578 = vadd.f32 0.0, %v2577
        %v2579 = vpop.f32.mrb[0].mxu0
        %v2580 = vadd.f32 0.0, %v2579
        %v2581 = vpop.f32.mrb[0].mxu0
        %v2582 = vadd.f32 0.0, %v2581
        %2583 = vmatprep.mubr.bf16.mxu0 %v651
        %2584 = vmatmul.mubr.bf16.gmra.mrb[0].mxu0 %v650
        %v2585 = vpop.f32.mrb[0].mxu0
        %v2586 = vadd.f32 0.0, %v2585
        %v2587 = vpop.f32.mrb[0].mxu0
        %v2588 = vadd.f32 0.0, %v2587
        %v2589 = vpop.f32.mrb[0].mxu0
        %v2590 = vadd.f32 0.0, %v2589
        %v2591 = vpop.f32.mrb[0].mxu0
        %v2592 = vadd.f32 0.0, %v2591
        %2593 = vmatprep.mubr.bf16.mxu0 %v653
        %2594 = vmatmul.mubr.bf16.gmra.mrb[0].mxu0 %v652
        %v2595 = vpop.f32.mrb[0].mxu0
        %v2596 = vadd.f32 0.0, %v2595
        %v2597 = vpop.f32.mrb[0].mxu0
        %v2598 = vadd.f32 0.0, %v2597
        %v2599 = vpop.f32.mrb[0].mxu0
        %v2600 = vadd.f32 0.0, %v2599
        %v2601 = vpop.f32.mrb[0].mxu0
        %v2602 = vadd.f32 0.0, %v2601
        %2603 = vmatprep.mubr.bf16.mxu0 %v655
        %2604 = vmatmul.mubr.bf16.gmra.mrb[0].mxu0 %v654
        %v2605 = vpop.f32.mrb[0].mxu0
        %v2606 = vadd.f32 0.0, %v2605
        %v2607 = vpop.f32.mrb[0].mxu0
        %v2608 = vadd.f32 0.0, %v2607
        %v2609 = vpop.f32.mrb[0].mxu0
        %v2610 = vadd.f32 0.0, %v2609
        %v2611 = vpop.f32.mrb[0].mxu0
        %v2612 = vadd.f32 0.0, %v2611
        %2613 = vmatprep.mubr.bf16.mxu0 %v657
        %2614 = vmatmul.mubr.bf16.gmra.mrb[0].mxu0 %v656
        %v2615 = vpop.f32.mrb[0].mxu0
        %v2616 = vadd.f32 0.0, %v2615
        %v2617 = vpop.f32.mrb[0].mxu0
        %v2618 = vadd.f32 0.0, %v2617
        %v2619 = vpop.f32.mrb[0].mxu0
        %v2620 = vadd.f32 0.0, %v2619
        %v2621 = vpop.f32.mrb[0].mxu0
        %v2622 = vadd.f32 0.0, %v2621
        %2623 = vmatprep.mubr.bf16.mxu0 %v659
        %2624 = vmatmul.mubr.bf16.gmra.mrb[0].mxu0 %v658
        %v2625 = vpop.f32.mrb[0].mxu0
        %v2626 = vadd.f32 0.0, %v2625
        %v2627 = vpop.f32.mrb[0].mxu0
        %v2628 = vadd.f32 0.0, %v2627
        %v2629 = vpop.f32.mrb[0].mxu0
        %v2630 = vadd.f32 0.0, %v2629
        %v2631 = vpop.f32.mrb[0].mxu0
        %v2632 = vadd.f32 0.0, %v2631
        %2633 = vdwg.mxu0
        %2634 = vmatprep.subr.bf16.mxu0 %v1457
        %2635 = vmatpush1.bf16.msra.mxu0 %v1456
        %2636 = vmatprep.subr.bf16.mxu0 %v1473
        %2637 = vmatpush1.bf16.msra.mxu0 %v1472
        %2638 = vmatprep.subr.bf16.mxu0 %v1489
        %2639 = vmatpush1.bf16.msra.mxu0 %v1488
        %2640 = vmatprep.subr.bf16.mxu0 %v1505
        %2641 = vmatpush1.bf16.msra.mxu0 %v1504
        %2642 = vmatprep.subr.bf16.mxu0 %v1521
        %2643 = vmatpush1.bf16.msra.mxu0 %v1520
        %2644 = vmatprep.subr.bf16.mxu0 %v1537
        %2645 = vmatpush1.bf16.msra.mxu0 %v1536
        %2646 = vmatprep.subr.bf16.mxu0 %v1553
        %2647 = vmatpush1.bf16.msra.mxu0 %v1552
        %2648 = vmatprep.subr.bf16.mxu0 %v1569
        %2649 = vmatpush1.bf16.msra.mxu0 %v1568
        %2650 = vmatprep.subr.bf16.mxu0 %v1585
        %2651 = vmatpush1.bf16.msra.mxu0 %v1584
        %2652 = vmatprep.subr.bf16.mxu0 %v1601
        %2653 = vmatpush1.bf16.msra.mxu0 %v1600
        %2654 = vmatprep.subr.bf16.mxu0 %v1617
        %2655 = vmatpush1.bf16.msra.mxu0 %v1616
        %2656 = vmatprep.subr.bf16.mxu0 %v1633
        %2657 = vmatpush1.bf16.msra.mxu0 %v1632
        %2658 = vmatprep.subr.bf16.mxu0 %v1649
        %2659 = vmatpush1.bf16.msra.mxu0 %v1648
        %2660 = vmatprep.subr.bf16.mxu0 %v1665
        %2661 = vmatpush1.bf16.msra.mxu0 %v1664
        %2662 = vmatprep.subr.bf16.mxu0 %v1681
        %2663 = vmatpush1.bf16.msra.mxu0 %v1680
        %2664 = vmatprep.subr.bf16.mxu0 %v1697
        %2665 = vmatpush1.bf16.msra.mxu0 %v1696
        %2666 = vmatprep.mubr.bf16.mxu0 %v645
        %2667 = vmatmul.mubr.bf16.gmra.mrb[0].mxu0 %v644
        %v2668 = vpop.f32.mrb[0].mxu0
        %v2669 = vadd.f32 0.0, %v2668
        %v2670 = vpop.f32.mrb[0].mxu0
        %v2671 = vadd.f32 0.0, %v2670
        %v2672 = vpop.f32.mrb[0].mxu0
        %v2673 = vadd.f32 0.0, %v2672
        %v2674 = vpop.f32.mrb[0].mxu0
        %v2675 = vadd.f32 0.0, %v2674
        %2676 = vmatprep.mubr.bf16.mxu0 %v647
        %2677 = vmatmul.mubr.bf16.gmra.mrb[0].mxu0 %v646
        %v2678 = vpop.f32.mrb[0].mxu0
        %v2679 = vadd.f32 0.0, %v2678
        %v2680 = vpop.f32.mrb[0].mxu0
        %v2681 = vadd.f32 0.0, %v2680
        %v2682 = vpop.f32.mrb[0].mxu0
        %v2683 = vadd.f32 0.0, %v2682
        %v2684 = vpop.f32.mrb[0].mxu0
        %v2685 = vadd.f32 0.0, %v2684
        %2686 = vmatprep.mubr.bf16.mxu0 %v649
        %2687 = vmatmul.mubr.bf16.gmra.mrb[0].mxu0 %v648
        %v2688 = vpop.f32.mrb[0].mxu0
        %v2689 = vadd.f32 0.0, %v2688
        %v2690 = vpop.f32.mrb[0].mxu0
        %v2691 = vadd.f32 0.0, %v2690
        %v2692 = vpop.f32.mrb[0].mxu0
        %v2693 = vadd.f32 0.0, %v2692
        %v2694 = vpop.f32.mrb[0].mxu0
        %v2695 = vadd.f32 0.0, %v2694
        %2696 = vmatprep.mubr.bf16.mxu0 %v651
        %2697 = vmatmul.mubr.bf16.gmra.mrb[0].mxu0 %v650
        %v2698 = vpop.f32.mrb[0].mxu0
        %v2699 = vadd.f32 0.0, %v2698
        %v2700 = vpop.f32.mrb[0].mxu0
        %v2701 = vadd.f32 0.0, %v2700
        %v2702 = vpop.f32.mrb[0].mxu0
        %v2703 = vadd.f32 0.0, %v2702
        %v2704 = vpop.f32.mrb[0].mxu0
        %v2705 = vadd.f32 0.0, %v2704
        %2706 = vmatprep.mubr.bf16.mxu0 %v653
        %2707 = vmatmul.mubr.bf16.gmra.mrb[0].mxu0 %v652
        %v2708 = vpop.f32.mrb[0].mxu0
        %v2709 = vadd.f32 0.0, %v2708
        %v2710 = vpop.f32.mrb[0].mxu0
        %v2711 = vadd.f32 0.0, %v2710
        %v2712 = vpop.f32.mrb[0].mxu0
        %v2713 = vadd.f32 0.0, %v2712
        %v2714 = vpop.f32.mrb[0].mxu0
        %v2715 = vadd.f32 0.0, %v2714
        %2716 = vmatprep.mubr.bf16.mxu0 %v655
        %2717 = vmatmul.mubr.bf16.gmra.mrb[0].mxu0 %v654
        %v2718 = vpop.f32.mrb[0].mxu0
        %v2719 = vadd.f32 0.0, %v2718
        %v2720 = vpop.f32.mrb[0].mxu0
        %v2721 = vadd.f32 0.0, %v2720
        %v2722 = vpop.f32.mrb[0].mxu0
        %v2723 = vadd.f32 0.0, %v2722
        %v2724 = vpop.f32.mrb[0].mxu0
        %v2725 = vadd.f32 0.0, %v2724
        %2726 = vmatprep.mubr.bf16.mxu0 %v657
        %2727 = vmatmul.mubr.bf16.gmra.mrb[0].mxu0 %v656
        %v2728 = vpop.f32.mrb[0].mxu0
        %v2729 = vadd.f32 0.0, %v2728
        %v2730 = vpop.f32.mrb[0].mxu0
        %v2731 = vadd.f32 0.0, %v2730
        %v2732 = vpop.f32.mrb[0].mxu0
        %v2733 = vadd.f32 0.0, %v2732
        %v2734 = vpop.f32.mrb[0].mxu0
        %v2735 = vadd.f32 0.0, %v2734
        %2736 = vmatprep.mubr.bf16.mxu0 %v659
        %2737 = vmatmul.mubr.bf16.gmra.mrb[0].mxu0 %v658
        %v2738 = vpop.f32.mrb[0].mxu0
        %v2739 = vadd.f32 0.0, %v2738
        %v2740 = vpop.f32.mrb[0].mxu0
        %v2741 = vadd.f32 0.0, %v2740
        %v2742 = vpop.f32.mrb[0].mxu0
        %v2743 = vadd.f32 0.0, %v2742
        %v2744 = vpop.f32.mrb[0].mxu0
        %v2745 = vadd.f32 0.0, %v2744
        %2746 = vdwg.mxu0
        %2747 = vmatprep.subr.bf16.mxu0 %v1459
        %2748 = vmatpush1.bf16.msra.mxu0 %v1458
        %2749 = vmatprep.subr.bf16.mxu0 %v1475
        %2750 = vmatpush1.bf16.msra.mxu0 %v1474
        %2751 = vmatprep.subr.bf16.mxu0 %v1491
        %2752 = vmatpush1.bf16.msra.mxu0 %v1490
        %2753 = vmatprep.subr.bf16.mxu0 %v1507
        %2754 = vmatpush1.bf16.msra.mxu0 %v1506
        %2755 = vmatprep.subr.bf16.mxu0 %v1523
        %2756 = vmatpush1.bf16.msra.mxu0 %v1522
        %2757 = vmatprep.subr.bf16.mxu0 %v1539
        %2758 = vmatpush1.bf16.msra.mxu0 %v1538
        %2759 = vmatprep.subr.bf16.mxu0 %v1555
        %2760 = vmatpush1.bf16.msra.mxu0 %v1554
        %2761 = vmatprep.subr.bf16.mxu0 %v1571
        %2762 = vmatpush1.bf16.msra.mxu0 %v1570
        %2763 = vmatprep.subr.bf16.mxu0 %v1587
        %2764 = vmatpush1.bf16.msra.mxu0 %v1586
        %2765 = vmatprep.subr.bf16.mxu0 %v1603
        %2766 = vmatpush1.bf16.msra.mxu0 %v1602
        %2767 = vmatprep.subr.bf16.mxu0 %v1619
        %2768 = vmatpush1.bf16.msra.mxu0 %v1618
        %2769 = vmatprep.subr.bf16.mxu0 %v1635
        %2770 = vmatpush1.bf16.msra.mxu0 %v1634
        %2771 = vmatprep.subr.bf16.mxu0 %v1651
        %2772 = vmatpush1.bf16.msra.mxu0 %v1650
        %2773 = vmatprep.subr.bf16.mxu0 %v1667
        %2774 = vmatpush1.bf16.msra.mxu0 %v1666
        %2775 = vmatprep.subr.bf16.mxu0 %v1683
        %2776 = vmatpush1.bf16.msra.mxu0 %v1682
        %2777 = vmatprep.subr.bf16.mxu0 %v1699
        %2778 = vmatpush1.bf16.msra.mxu0 %v1698
        %2779 = vmatprep.mubr.bf16.mxu0 %v645
        %2780 = vmatmul.mubr.bf16.gmra.mrb[0].mxu0 %v644
        %v2781 = vpop.f32.mrb[0].mxu0
        %v2782 = vadd.f32 0.0, %v2781
        %v2783 = vpop.f32.mrb[0].mxu0
        %v2784 = vadd.f32 0.0, %v2783
        %v2785 = vpop.f32.mrb[0].mxu0
        %v2786 = vadd.f32 0.0, %v2785
        %v2787 = vpop.f32.mrb[0].mxu0
        %v2788 = vadd.f32 0.0, %v2787
        %2789 = vmatprep.mubr.bf16.mxu0 %v647
        %2790 = vmatmul.mubr.bf16.gmra.mrb[0].mxu0 %v646
        %v2791 = vpop.f32.mrb[0].mxu0
        %v2792 = vadd.f32 0.0, %v2791
        %v2793 = vpop.f32.mrb[0].mxu0
        %v2794 = vadd.f32 0.0, %v2793
        %v2795 = vpop.f32.mrb[0].mxu0
        %v2796 = vadd.f32 0.0, %v2795
        %v2797 = vpop.f32.mrb[0].mxu0
        %v2798 = vadd.f32 0.0, %v2797
        %2799 = vmatprep.mubr.bf16.mxu0 %v649
        %2800 = vmatmul.mubr.bf16.gmra.mrb[0].mxu0 %v648
        %v2801 = vpop.f32.mrb[0].mxu0
        %v2802 = vadd.f32 0.0, %v2801
        %v2803 = vpop.f32.mrb[0].mxu0
        %v2804 = vadd.f32 0.0, %v2803
        %v2805 = vpop.f32.mrb[0].mxu0
        %v2806 = vadd.f32 0.0, %v2805
        %v2807 = vpop.f32.mrb[0].mxu0
        %v2808 = vadd.f32 0.0, %v2807
        %2809 = vmatprep.mubr.bf16.mxu0 %v651
        %2810 = vmatmul.mubr.bf16.gmra.mrb[0].mxu0 %v650
        %v2811 = vpop.f32.mrb[0].mxu0
        %v2812 = vadd.f32 0.0, %v2811
        %v2813 = vpop.f32.mrb[0].mxu0
        %v2814 = vadd.f32 0.0, %v2813
        %v2815 = vpop.f32.mrb[0].mxu0
        %v2816 = vadd.f32 0.0, %v2815
        %v2817 = vpop.f32.mrb[0].mxu0
        %v2818 = vadd.f32 0.0, %v2817
        %2819 = vmatprep.mubr.bf16.mxu0 %v653
        %2820 = vmatmul.mubr.bf16.gmra.mrb[0].mxu0 %v652
        %v2821 = vpop.f32.mrb[0].mxu0
        %v2822 = vadd.f32 0.0, %v2821
        %v2823 = vpop.f32.mrb[0].mxu0
        %v2824 = vadd.f32 0.0, %v2823
        %v2825 = vpop.f32.mrb[0].mxu0
        %v2826 = vadd.f32 0.0, %v2825
        %v2827 = vpop.f32.mrb[0].mxu0
        %v2828 = vadd.f32 0.0, %v2827
        %2829 = vmatprep.mubr.bf16.mxu0 %v655
        %2830 = vmatmul.mubr.bf16.gmra.mrb[0].mxu0 %v654
        %v2831 = vpop.f32.mrb[0].mxu0
        %v2832 = vadd.f32 0.0, %v2831
        %v2833 = vpop.f32.mrb[0].mxu0
        %v2834 = vadd.f32 0.0, %v2833
        %v2835 = vpop.f32.mrb[0].mxu0
        %v2836 = vadd.f32 0.0, %v2835
        %v2837 = vpop.f32.mrb[0].mxu0
        %v2838 = vadd.f32 0.0, %v2837
        %2839 = vmatprep.mubr.bf16.mxu0 %v657
        %2840 = vmatmul.mubr.bf16.gmra.mrb[0].mxu0 %v656
        %v2841 = vpop.f32.mrb[0].mxu0
        %v2842 = vadd.f32 0.0, %v2841
        %v2843 = vpop.f32.mrb[0].mxu0
        %v2844 = vadd.f32 0.0, %v2843
        %v2845 = vpop.f32.mrb[0].mxu0
        %v2846 = vadd.f32 0.0, %v2845
        %v2847 = vpop.f32.mrb[0].mxu0
        %v2848 = vadd.f32 0.0, %v2847
        %2849 = vmatprep.mubr.bf16.mxu0 %v659
        %2850 = vmatmul.mubr.bf16.gmra.mrb[0].mxu0 %v658
        %v2851 = vpop.f32.mrb[0].mxu0
        %v2852 = vadd.f32 0.0, %v2851
        %v2853 = vpop.f32.mrb[0].mxu0
        %v2854 = vadd.f32 0.0, %v2853
        %v2855 = vpop.f32.mrb[0].mxu0
        %v2856 = vadd.f32 0.0, %v2855
        %v2857 = vpop.f32.mrb[0].mxu0
        %v2858 = vadd.f32 0.0, %v2857
        %2859 = vdwg.mxu0
        %v2860 = vmax.f32 %v1991, %v2443
        %v2861 = vmax.f32 %v1993, %v2445
        %v2862 = vmax.f32 %v2104, %v2556
        %v2863 = vmax.f32 %v2106, %v2558
        %v2864 = vmax.f32 %v2217, %v2669
        %v2865 = vmax.f32 %v2219, %v2671
        %v2866 = vmax.f32 %v2330, %v2782
        %v2867 = vmax.f32 %v2332, %v2784
        %v2868 = vmax.f32 %v1995, %v2447
        %v2869 = vmax.f32 %v1997, %v2449
        %v2870 = vmax.f32 %v2108, %v2560
        %v2871 = vmax.f32 %v2110, %v2562
        %v2872 = vmax.f32 %v2221, %v2673
        %v2873 = vmax.f32 %v2223, %v2675
        %v2874 = vmax.f32 %v2334, %v2786
        %v2875 = vmax.f32 %v2336, %v2788
        %v2876 = vmax.f32 %v2001, %v2453
        %v2877 = vmax.f32 %v2003, %v2455
        %v2878 = vmax.f32 %v2114, %v2566
        %v2879 = vmax.f32 %v2116, %v2568
        %v2880 = vmax.f32 %v2227, %v2679
        %v2881 = vmax.f32 %v2229, %v2681
        %v2882 = vmax.f32 %v2340, %v2792
        %v2883 = vmax.f32 %v2342, %v2794
        %v2884 = vmax.f32 %v2005, %v2457
        %v2885 = vmax.f32 %v2007, %v2459
        %v2886 = vmax.f32 %v2118, %v2570
        %v2887 = vmax.f32 %v2120, %v2572
        %v2888 = vmax.f32 %v2231, %v2683
        %v2889 = vmax.f32 %v2233, %v2685
        %v2890 = vmax.f32 %v2344, %v2796
        %v2891 = vmax.f32 %v2346, %v2798
        %v2892 = vmax.f32 %v2011, %v2463
        %v2893 = vmax.f32 %v2013, %v2465
        %v2894 = vmax.f32 %v2124, %v2576
        %v2895 = vmax.f32 %v2126, %v2578
        %v2896 = vmax.f32 %v2237, %v2689
        %v2897 = vmax.f32 %v2239, %v2691
        %v2898 = vmax.f32 %v2350, %v2802
        %v2899 = vmax.f32 %v2352, %v2804
        %v2900 = vmax.f32 %v2015, %v2467
        %v2901 = vmax.f32 %v2017, %v2469
        %v2902 = vmax.f32 %v2128, %v2580
        %v2903 = vmax.f32 %v2130, %v2582
        %v2904 = vmax.f32 %v2241, %v2693
        %v2905 = vmax.f32 %v2243, %v2695
        %v2906 = vmax.f32 %v2354, %v2806
        %v2907 = vmax.f32 %v2356, %v2808
        %v2908 = vmax.f32 %v2021, %v2473
        %v2909 = vmax.f32 %v2023, %v2475
        %v2910 = vmax.f32 %v2134, %v2586
        %v2911 = vmax.f32 %v2136, %v2588
        %v2912 = vmax.f32 %v2247, %v2699
        %v2913 = vmax.f32 %v2249, %v2701
        %v2914 = vmax.f32 %v2360, %v2812
        %v2915 = vmax.f32 %v2362, %v2814
        %v2916 = vmax.f32 %v2025, %v2477
        %v2917 = vmax.f32 %v2027, %v2479
        %v2918 = vmax.f32 %v2138, %v2590
        %v2919 = vmax.f32 %v2140, %v2592
        %v2920 = vmax.f32 %v2251, %v2703
        %v2921 = vmax.f32 %v2253, %v2705
        %v2922 = vmax.f32 %v2364, %v2816
        %v2923 = vmax.f32 %v2366, %v2818
        %v2924 = vmax.f32 %v2031, %v2483
        %v2925 = vmax.f32 %v2033, %v2485
        %v2926 = vmax.f32 %v2144, %v2596
        %v2927 = vmax.f32 %v2146, %v2598
        %v2928 = vmax.f32 %v2257, %v2709
        %v2929 = vmax.f32 %v2259, %v2711
        %v2930 = vmax.f32 %v2370, %v2822
        %v2931 = vmax.f32 %v2372, %v2824
        %v2932 = vmax.f32 %v2035, %v2487
        %v2933 = vmax.f32 %v2037, %v2489
        %v2934 = vmax.f32 %v2148, %v2600
        %v2935 = vmax.f32 %v2150, %v2602
        %v2936 = vmax.f32 %v2261, %v2713
        %v2937 = vmax.f32 %v2263, %v2715
        %v2938 = vmax.f32 %v2374, %v2826
        %v2939 = vmax.f32 %v2376, %v2828
        %v2940 = vmax.f32 %v2041, %v2493
        %v2941 = vmax.f32 %v2043, %v2495
        %v2942 = vmax.f32 %v2154, %v2606
        %v2943 = vmax.f32 %v2156, %v2608
        %v2944 = vmax.f32 %v2267, %v2719
        %v2945 = vmax.f32 %v2269, %v2721
        %v2946 = vmax.f32 %v2380, %v2832
        %v2947 = vmax.f32 %v2382, %v2834
        %v2948 = vmax.f32 %v2045, %v2497
        %v2949 = vmax.f32 %v2047, %v2499
        %v2950 = vmax.f32 %v2158, %v2610
        %v2951 = vmax.f32 %v2160, %v2612
        %v2952 = vmax.f32 %v2271, %v2723
        %v2953 = vmax.f32 %v2273, %v2725
        %v2954 = vmax.f32 %v2384, %v2836
        %v2955 = vmax.f32 %v2386, %v2838
        %v2956 = vmax.f32 %v2051, %v2503
        %v2957 = vmax.f32 %v2053, %v2505
        %v2958 = vmax.f32 %v2164, %v2616
        %v2959 = vmax.f32 %v2166, %v2618
        %v2960 = vmax.f32 %v2277, %v2729
        %v2961 = vmax.f32 %v2279, %v2731
        %v2962 = vmax.f32 %v2390, %v2842
        %v2963 = vmax.f32 %v2392, %v2844
        %v2964 = vmax.f32 %v2055, %v2507
        %v2965 = vmax.f32 %v2057, %v2509
        %v2966 = vmax.f32 %v2168, %v2620
        %v2967 = vmax.f32 %v2170, %v2622
        %v2968 = vmax.f32 %v2281, %v2733
        %v2969 = vmax.f32 %v2283, %v2735
        %v2970 = vmax.f32 %v2394, %v2846
        %v2971 = vmax.f32 %v2396, %v2848
        %v2972 = vmax.f32 %v2061, %v2513
        %v2973 = vmax.f32 %v2063, %v2515
        %v2974 = vmax.f32 %v2174, %v2626
        %v2975 = vmax.f32 %v2176, %v2628
        %v2976 = vmax.f32 %v2287, %v2739
        %v2977 = vmax.f32 %v2289, %v2741
        %v2978 = vmax.f32 %v2400, %v2852
        %v2979 = vmax.f32 %v2402, %v2854
        %v2980 = vmax.f32 %v2065, %v2517
        %v2981 = vmax.f32 %v2067, %v2519
        %v2982 = vmax.f32 %v2178, %v2630
        %v2983 = vmax.f32 %v2180, %v2632
        %v2984 = vmax.f32 %v2291, %v2743
        %v2985 = vmax.f32 %v2293, %v2745
        %v2986 = vmax.f32 %v2404, %v2856
        %v2987 = vmax.f32 %v2406, %v2858
        %v2988 = vld [vmem:[#allocation4] sm:$0xff]
        %v2990 = vlaneseq
        %v2991 = vshrl.u32 %v2990, 7
        %v2992 = vsub.s32 0, %v2991
        %v2993 = vrot.slane %v2988, %v2992
        %v2994 = vlaneseq
        %v2995 = vshrl.u32 %v2994, 7
        %v2996 = vsub.s32 1, %v2995
        %v2997 = vrot.slane %v2988, %v2996
        %v2998 = vlaneseq
        %v2999 = vshrl.u32 %v2998, 7
        %v3000 = vsub.s32 2, %v2999
        %v3001 = vrot.slane %v2988, %v3000
        %v3002 = vlaneseq
        %v3003 = vshrl.u32 %v3002, 7
        %v3004 = vsub.s32 3, %v3003
        %v3005 = vrot.slane %v2988, %v3004
        %v3006 = vlaneseq
        %v3007 = vshrl.u32 %v3006, 7
        %v3008 = vsub.s32 4, %v3007
        %v3009 = vrot.slane %v2988, %v3008
        %v3010 = vlaneseq
        %v3011 = vshrl.u32 %v3010, 7
        %v3012 = vsub.s32 5, %v3011
        %v3013 = vrot.slane %v2988, %v3012
        %v3014 = vlaneseq
        %v3015 = vshrl.u32 %v3014, 7
        %v3016 = vsub.s32 6, %v3015
        %v3017 = vrot.slane %v2988, %v3016
        %v3018 = vlaneseq
        %v3019 = vshrl.u32 %v3018, 7
        %v3020 = vsub.s32 7, %v3019
        %v3021 = vrot.slane %v2988, %v3020
        %v3030 = vadd.f32 %v2860, %v2993
        %v3031 = vadd.f32 %v2861, %v2997
        %v3032 = vadd.f32 %v2862, %v3001
        %v3033 = vadd.f32 %v2863, %v3005
        %v3034 = vadd.f32 %v2864, %v3009
        %v3035 = vadd.f32 %v2865, %v3013
        %v3036 = vadd.f32 %v2866, %v3017
        %v3037 = vadd.f32 %v2867, %v3021
        %v3038 = vadd.f32 %v2868, %v2993
        %v3039 = vadd.f32 %v2869, %v2997
        %v3040 = vadd.f32 %v2870, %v3001
        %v3041 = vadd.f32 %v2871, %v3005
        %v3042 = vadd.f32 %v2872, %v3009
        %v3043 = vadd.f32 %v2873, %v3013
        %v3044 = vadd.f32 %v2874, %v3017
        %v3045 = vadd.f32 %v2875, %v3021
        %v3046 = vadd.f32 %v2876, %v2993
        %v3047 = vadd.f32 %v2877, %v2997
        %v3048 = vadd.f32 %v2878, %v3001
        %v3049 = vadd.f32 %v2879, %v3005
        %v3050 = vadd.f32 %v2880, %v3009
        %v3051 = vadd.f32 %v2881, %v3013
        %v3052 = vadd.f32 %v2882, %v3017
        %v3053 = vadd.f32 %v2883, %v3021
        %v3054 = vadd.f32 %v2884, %v2993
        %v3055 = vadd.f32 %v2885, %v2997
        %v3056 = vadd.f32 %v2886, %v3001
        %v3057 = vadd.f32 %v2887, %v3005
        %v3058 = vadd.f32 %v2888, %v3009
        %v3059 = vadd.f32 %v2889, %v3013
        %v3060 = vadd.f32 %v2890, %v3017
        %v3061 = vadd.f32 %v2891, %v3021
        %v3062 = vadd.f32 %v2892, %v2993
        %v3063 = vadd.f32 %v2893, %v2997
        %v3064 = vadd.f32 %v2894, %v3001
        %v3065 = vadd.f32 %v2895, %v3005
        %v3066 = vadd.f32 %v2896, %v3009
        %v3067 = vadd.f32 %v2897, %v3013
        %v3068 = vadd.f32 %v2898, %v3017
        %v3069 = vadd.f32 %v2899, %v3021
        %v3070 = vadd.f32 %v2900, %v2993
        %v3071 = vadd.f32 %v2901, %v2997
        %v3072 = vadd.f32 %v2902, %v3001
        %v3073 = vadd.f32 %v2903, %v3005
        %v3074 = vadd.f32 %v2904, %v3009
        %v3075 = vadd.f32 %v2905, %v3013
        %v3076 = vadd.f32 %v2906, %v3017
        %v3077 = vadd.f32 %v2907, %v3021
        %v3078 = vadd.f32 %v2908, %v2993
        %v3079 = vadd.f32 %v2909, %v2997
        %v3080 = vadd.f32 %v2910, %v3001
        %v3081 = vadd.f32 %v2911, %v3005
        %v3082 = vadd.f32 %v2912, %v3009
        %v3083 = vadd.f32 %v2913, %v3013
        %v3084 = vadd.f32 %v2914, %v3017
        %v3085 = vadd.f32 %v2915, %v3021
        %v3086 = vadd.f32 %v2916, %v2993
        %v3087 = vadd.f32 %v2917, %v2997
        %v3088 = vadd.f32 %v2918, %v3001
        %v3089 = vadd.f32 %v2919, %v3005
        %v3090 = vadd.f32 %v2920, %v3009
        %v3091 = vadd.f32 %v2921, %v3013
        %v3092 = vadd.f32 %v2922, %v3017
        %v3093 = vadd.f32 %v2923, %v3021
        %v3094 = vadd.f32 %v2924, %v2993
        %v3095 = vadd.f32 %v2925, %v2997
        %v3096 = vadd.f32 %v2926, %v3001
        %v3097 = vadd.f32 %v2927, %v3005
        %v3098 = vadd.f32 %v2928, %v3009
        %v3099 = vadd.f32 %v2929, %v3013
        %v3100 = vadd.f32 %v2930, %v3017
        %v3101 = vadd.f32 %v2931, %v3021
        %v3102 = vadd.f32 %v2932, %v2993
        %v3103 = vadd.f32 %v2933, %v2997
        %v3104 = vadd.f32 %v2934, %v3001
        %v3105 = vadd.f32 %v2935, %v3005
        %v3106 = vadd.f32 %v2936, %v3009
        %v3107 = vadd.f32 %v2937, %v3013
        %v3108 = vadd.f32 %v2938, %v3017
        %v3109 = vadd.f32 %v2939, %v3021
        %v3110 = vadd.f32 %v2940, %v2993
        %v3111 = vadd.f32 %v2941, %v2997
        %v3112 = vadd.f32 %v2942, %v3001
        %v3113 = vadd.f32 %v2943, %v3005
        %v3114 = vadd.f32 %v2944, %v3009
        %v3115 = vadd.f32 %v2945, %v3013
        %v3116 = vadd.f32 %v2946, %v3017
        %v3117 = vadd.f32 %v2947, %v3021
        %v3118 = vadd.f32 %v2948, %v2993
        %v3119 = vadd.f32 %v2949, %v2997
        %v3120 = vadd.f32 %v2950, %v3001
        %v3121 = vadd.f32 %v2951, %v3005
        %v3122 = vadd.f32 %v2952, %v3009
        %v3123 = vadd.f32 %v2953, %v3013
        %v3124 = vadd.f32 %v2954, %v3017
        %v3125 = vadd.f32 %v2955, %v3021
        %v3126 = vadd.f32 %v2956, %v2993
        %v3127 = vadd.f32 %v2957, %v2997
        %v3128 = vadd.f32 %v2958, %v3001
        %v3129 = vadd.f32 %v2959, %v3005
        %v3130 = vadd.f32 %v2960, %v3009
        %v3131 = vadd.f32 %v2961, %v3013
        %v3132 = vadd.f32 %v2962, %v3017
        %v3133 = vadd.f32 %v2963, %v3021
        %v3134 = vadd.f32 %v2964, %v2993
        %v3135 = vadd.f32 %v2965, %v2997
        %v3136 = vadd.f32 %v2966, %v3001
        %v3137 = vadd.f32 %v2967, %v3005
        %v3138 = vadd.f32 %v2968, %v3009
        %v3139 = vadd.f32 %v2969, %v3013
        %v3140 = vadd.f32 %v2970, %v3017
        %v3141 = vadd.f32 %v2971, %v3021
        %v3142 = vadd.f32 %v2972, %v2993
        %v3143 = vadd.f32 %v2973, %v2997
        %v3144 = vadd.f32 %v2974, %v3001
        %v3145 = vadd.f32 %v2975, %v3005
        %v3146 = vadd.f32 %v2976, %v3009
        %v3147 = vadd.f32 %v2977, %v3013
        %v3148 = vadd.f32 %v2978, %v3017
        %v3149 = vadd.f32 %v2979, %v3021
        %v3150 = vadd.f32 %v2980, %v2993
        %v3151 = vadd.f32 %v2981, %v2997
        %v3152 = vadd.f32 %v2982, %v3001
        %v3153 = vadd.f32 %v2983, %v3005
        %v3154 = vadd.f32 %v2984, %v3009
        %v3155 = vadd.f32 %v2985, %v3013
        %v3156 = vadd.f32 %v2986, %v3017
        %v3157 = vadd.f32 %v2987, %v3021
        %v3158 = vmax.f32 %v3030, 0.0
        %v3159 = vmax.f32 %v3031, 0.0
        %v3160 = vmax.f32 %v3032, 0.0
        %v3161 = vmax.f32 %v3033, 0.0
        %v3162 = vmax.f32 %v3034, 0.0
        %v3163 = vmax.f32 %v3035, 0.0
        %v3164 = vmax.f32 %v3036, 0.0
        %v3165 = vmax.f32 %v3037, 0.0
        %v3166 = vmax.f32 %v3038, 0.0
        %v3167 = vmax.f32 %v3039, 0.0
        %v3168 = vmax.f32 %v3040, 0.0
        %v3169 = vmax.f32 %v3041, 0.0
        %v3170 = vmax.f32 %v3042, 0.0
        %v3171 = vmax.f32 %v3043, 0.0
        %v3172 = vmax.f32 %v3044, 0.0
        %v3173 = vmax.f32 %v3045, 0.0
        %v3174 = vmax.f32 %v3046, 0.0
        %v3175 = vmax.f32 %v3047, 0.0
        %v3176 = vmax.f32 %v3048, 0.0
        %v3177 = vmax.f32 %v3049, 0.0
        %v3178 = vmax.f32 %v3050, 0.0
        %v3179 = vmax.f32 %v3051, 0.0
        %v3180 = vmax.f32 %v3052, 0.0
        %v3181 = vmax.f32 %v3053, 0.0
        %v3182 = vmax.f32 %v3054, 0.0
        %v3183 = vmax.f32 %v3055, 0.0
        %v3184 = vmax.f32 %v3056, 0.0
        %v3185 = vmax.f32 %v3057, 0.0
        %v3186 = vmax.f32 %v3058, 0.0
        %v3187 = vmax.f32 %v3059, 0.0
        %v3188 = vmax.f32 %v3060, 0.0
        %v3189 = vmax.f32 %v3061, 0.0
        %v3190 = vmax.f32 %v3062, 0.0
        %v3191 = vmax.f32 %v3063, 0.0
        %v3192 = vmax.f32 %v3064, 0.0
        %v3193 = vmax.f32 %v3065, 0.0
        %v3194 = vmax.f32 %v3066, 0.0
        %v3195 = vmax.f32 %v3067, 0.0
        %v3196 = vmax.f32 %v3068, 0.0
        %v3197 = vmax.f32 %v3069, 0.0
        %v3198 = vmax.f32 %v3070, 0.0
        %v3199 = vmax.f32 %v3071, 0.0
        %v3200 = vmax.f32 %v3072, 0.0
        %v3201 = vmax.f32 %v3073, 0.0
        %v3202 = vmax.f32 %v3074, 0.0
        %v3203 = vmax.f32 %v3075, 0.0
        %v3204 = vmax.f32 %v3076, 0.0
        %v3205 = vmax.f32 %v3077, 0.0
        %v3206 = vmax.f32 %v3078, 0.0
        %v3207 = vmax.f32 %v3079, 0.0
        %v3208 = vmax.f32 %v3080, 0.0
        %v3209 = vmax.f32 %v3081, 0.0
        %v3210 = vmax.f32 %v3082, 0.0
        %v3211 = vmax.f32 %v3083, 0.0
        %v3212 = vmax.f32 %v3084, 0.0
        %v3213 = vmax.f32 %v3085, 0.0
        %v3214 = vmax.f32 %v3086, 0.0
        %v3215 = vmax.f32 %v3087, 0.0
        %v3216 = vmax.f32 %v3088, 0.0
        %v3217 = vmax.f32 %v3089, 0.0
        %v3218 = vmax.f32 %v3090, 0.0
        %v3219 = vmax.f32 %v3091, 0.0
        %v3220 = vmax.f32 %v3092, 0.0
        %v3221 = vmax.f32 %v3093, 0.0
        %v3222 = vmax.f32 %v3094, 0.0
        %v3223 = vmax.f32 %v3095, 0.0
        %v3224 = vmax.f32 %v3096, 0.0
        %v3225 = vmax.f32 %v3097, 0.0
        %v3226 = vmax.f32 %v3098, 0.0
        %v3227 = vmax.f32 %v3099, 0.0
        %v3228 = vmax.f32 %v3100, 0.0
        %v3229 = vmax.f32 %v3101, 0.0
        %v3230 = vmax.f32 %v3102, 0.0
        %v3231 = vmax.f32 %v3103, 0.0
        %v3232 = vmax.f32 %v3104, 0.0
        %v3233 = vmax.f32 %v3105, 0.0
        %v3234 = vmax.f32 %v3106, 0.0
        %v3235 = vmax.f32 %v3107, 0.0
        %v3236 = vmax.f32 %v3108, 0.0
        %v3237 = vmax.f32 %v3109, 0.0
        %v3238 = vmax.f32 %v3110, 0.0
        %v3239 = vmax.f32 %v3111, 0.0
        %v3240 = vmax.f32 %v3112, 0.0
        %v3241 = vmax.f32 %v3113, 0.0
        %v3242 = vmax.f32 %v3114, 0.0
        %v3243 = vmax.f32 %v3115, 0.0
        %v3244 = vmax.f32 %v3116, 0.0
        %v3245 = vmax.f32 %v3117, 0.0
        %v3246 = vmax.f32 %v3118, 0.0
        %v3247 = vmax.f32 %v3119, 0.0
        %v3248 = vmax.f32 %v3120, 0.0
        %v3249 = vmax.f32 %v3121, 0.0
        %v3250 = vmax.f32 %v3122, 0.0
        %v3251 = vmax.f32 %v3123, 0.0
        %v3252 = vmax.f32 %v3124, 0.0
        %v3253 = vmax.f32 %v3125, 0.0
        %v3254 = vmax.f32 %v3126, 0.0
        %v3255 = vmax.f32 %v3127, 0.0
        %v3256 = vmax.f32 %v3128, 0.0
        %v3257 = vmax.f32 %v3129, 0.0
        %v3258 = vmax.f32 %v3130, 0.0
        %v3259 = vmax.f32 %v3131, 0.0
        %v3260 = vmax.f32 %v3132, 0.0
        %v3261 = vmax.f32 %v3133, 0.0
        %v3262 = vmax.f32 %v3134, 0.0
        %v3263 = vmax.f32 %v3135, 0.0
        %v3264 = vmax.f32 %v3136, 0.0
        %v3265 = vmax.f32 %v3137, 0.0
        %v3266 = vmax.f32 %v3138, 0.0
        %v3267 = vmax.f32 %v3139, 0.0
        %v3268 = vmax.f32 %v3140, 0.0
        %v3269 = vmax.f32 %v3141, 0.0
        %v3270 = vmax.f32 %v3142, 0.0
        %v3271 = vmax.f32 %v3143, 0.0
        %v3272 = vmax.f32 %v3144, 0.0
        %v3273 = vmax.f32 %v3145, 0.0
        %v3274 = vmax.f32 %v3146, 0.0
        %v3275 = vmax.f32 %v3147, 0.0
        %v3276 = vmax.f32 %v3148, 0.0
        %v3277 = vmax.f32 %v3149, 0.0
        %v3278 = vmax.f32 %v3150, 0.0
        %v3279 = vmax.f32 %v3151, 0.0
        %v3280 = vmax.f32 %v3152, 0.0
        %v3281 = vmax.f32 %v3153, 0.0
        %v3282 = vmax.f32 %v3154, 0.0
        %v3283 = vmax.f32 %v3155, 0.0
        %v3284 = vmax.f32 %v3156, 0.0
        %v3285 = vmax.f32 %v3157, 0.0
        %s3286 = smul.u32 %s22, 6
        %s3287 = sadd.s32 %s3286, %s24
        %s3288 = smul.u32 %s3287, 1024
        %v3289 = vld [vmem:[%s301] sm:$0xff]
        %v3290 = vld [vmem:[%s301 + $0x8] sm:$0xff]
        %v3291 = vld [vmem:[%s301 + $0x10] sm:$0xff]
        %v3292 = vld [vmem:[%s301 + $0x18] sm:$0xff]
        %v3293 = vld [vmem:[%s301 + $0x20] sm:$0xff]
        %v3294 = vld [vmem:[%s301 + $0x28] sm:$0xff]
        %v3295 = vld [vmem:[%s301 + $0x30] sm:$0xff]
        %v3296 = vld [vmem:[%s301 + $0x38] sm:$0xff]
        %v3297 = vld [vmem:[%s301 + $0x40] sm:$0xff]
        %v3298 = vld [vmem:[%s301 + $0x48] sm:$0xff]
        %v3299 = vld [vmem:[%s301 + $0x50] sm:$0xff]
        %v3300 = vld [vmem:[%s301 + $0x58] sm:$0xff]
        %v3301 = vld [vmem:[%s301 + $0x60] sm:$0xff]
        %v3302 = vld [vmem:[%s301 + $0x68] sm:$0xff]
        %v3303 = vld [vmem:[%s301 + $0x70] sm:$0xff]
        %v3304 = vld [vmem:[%s301 + $0x78] sm:$0xff]
        %v3305 = vpack.c.bf16 %v3166, %v3158
        %v3306 = vpack.c.bf16 %v3167, %v3159
        %v3307 = vpack.c.bf16 %v3168, %v3160
        %v3308 = vpack.c.bf16 %v3169, %v3161
        %v3309 = vpack.c.bf16 %v3170, %v3162
        %v3310 = vpack.c.bf16 %v3171, %v3163
        %v3311 = vpack.c.bf16 %v3172, %v3164
        %v3312 = vpack.c.bf16 %v3173, %v3165
        %v3313 = vpack.c.bf16 %v3182, %v3174
        %v3314 = vpack.c.bf16 %v3183, %v3175
        %v3315 = vpack.c.bf16 %v3184, %v3176
        %v3316 = vpack.c.bf16 %v3185, %v3177
        %v3317 = vpack.c.bf16 %v3186, %v3178
        %v3318 = vpack.c.bf16 %v3187, %v3179
        %v3319 = vpack.c.bf16 %v3188, %v3180
        %v3320 = vpack.c.bf16 %v3189, %v3181
        %v3321 = vpack.c.bf16 %v3198, %v3190
        %v3322 = vpack.c.bf16 %v3199, %v3191
        %v3323 = vpack.c.bf16 %v3200, %v3192
        %v3324 = vpack.c.bf16 %v3201, %v3193
        %v3325 = vpack.c.bf16 %v3202, %v3194
        %v3326 = vpack.c.bf16 %v3203, %v3195
        %v3327 = vpack.c.bf16 %v3204, %v3196
        %v3328 = vpack.c.bf16 %v3205, %v3197
        %v3329 = vpack.c.bf16 %v3214, %v3206
        %v3330 = vpack.c.bf16 %v3215, %v3207
        %v3331 = vpack.c.bf16 %v3216, %v3208
        %v3332 = vpack.c.bf16 %v3217, %v3209
        %v3333 = vpack.c.bf16 %v3218, %v3210
        %v3334 = vpack.c.bf16 %v3219, %v3211
        %v3335 = vpack.c.bf16 %v3220, %v3212
        %v3336 = vpack.c.bf16 %v3221, %v3213
        %v3337 = vpack.c.bf16 %v3230, %v3222
        %v3338 = vpack.c.bf16 %v3231, %v3223
        %v3339 = vpack.c.bf16 %v3232, %v3224
        %v3340 = vpack.c.bf16 %v3233, %v3225
        %v3341 = vpack.c.bf16 %v3234, %v3226
        %v3342 = vpack.c.bf16 %v3235, %v3227
        %v3343 = vpack.c.bf16 %v3236, %v3228
        %v3344 = vpack.c.bf16 %v3237, %v3229
        %v3345 = vpack.c.bf16 %v3246, %v3238
        %v3346 = vpack.c.bf16 %v3247, %v3239
        %v3347 = vpack.c.bf16 %v3248, %v3240
        %v3348 = vpack.c.bf16 %v3249, %v3241
        %v3349 = vpack.c.bf16 %v3250, %v3242
        %v3350 = vpack.c.bf16 %v3251, %v3243
        %v3351 = vpack.c.bf16 %v3252, %v3244
        %v3352 = vpack.c.bf16 %v3253, %v3245
        %v3353 = vpack.c.bf16 %v3262, %v3254
        %v3354 = vpack.c.bf16 %v3263, %v3255
        %v3355 = vpack.c.bf16 %v3264, %v3256
        %v3356 = vpack.c.bf16 %v3265, %v3257
        %v3357 = vpack.c.bf16 %v3266, %v3258
        %v3358 = vpack.c.bf16 %v3267, %v3259
        %v3359 = vpack.c.bf16 %v3268, %v3260
        %v3360 = vpack.c.bf16 %v3269, %v3261
        %v3361 = vpack.c.bf16 %v3278, %v3270
        %v3362 = vpack.c.bf16 %v3279, %v3271
        %v3363 = vpack.c.bf16 %v3280, %v3272
        %v3364 = vpack.c.bf16 %v3281, %v3273
        %v3365 = vpack.c.bf16 %v3282, %v3274
        %v3366 = vpack.c.bf16 %v3283, %v3275
        %v3367 = vpack.c.bf16 %v3284, %v3276
        %v3368 = vpack.c.bf16 %v3285, %v3277
        %s3369 = sshra.s32 %s3288, 3
        %s3370 = sand.u32 %s3288, 7
        %s3371 = smul.addr %s3369, 4
        %s3372 = scalar_lea.vmem [#allocation6], %s3371
        %v3373 = vld [vmem:[%s3372] sm:$0xf]
        %v3374 = vld [vmem:[%s3372 + $0x4] sm:$0xf]
        %v3375 = vld [vmem:[%s3372 + $0x8] sm:$0xf]
        %v3376 = vld [vmem:[%s3372 + $0xc] sm:$0xf]
        %v3377 = vld [vmem:[%s3372 + $0x10] sm:$0xf]
        %v3378 = vld [vmem:[%s3372 + $0x14] sm:$0xf]
        %v3379 = vld [vmem:[%s3372 + $0x18] sm:$0xf]
        %v3380 = vld [vmem:[%s3372 + $0x1c] sm:$0xf]
        %v3381 = vld [vmem:[%s3372 + $0x20] sm:$0xf]
        %v3382 = vld [vmem:[%s3372 + $0x24] sm:$0xf]
        %v3383 = vld [vmem:[%s3372 + $0x28] sm:$0xf]
        %v3384 = vld [vmem:[%s3372 + $0x2c] sm:$0xf]
        %v3385 = vld [vmem:[%s3372 + $0x30] sm:$0xf]
        %v3386 = vld [vmem:[%s3372 + $0x34] sm:$0xf]
        %v3387 = vld [vmem:[%s3372 + $0x38] sm:$0xf]
        %v3388 = vld [vmem:[%s3372 + $0x3c] sm:$0xf]
        %v3389 = vld [vmem:[%s3372 + $0x40] sm:$0xf]
        %v3390 = vld [vmem:[%s3372 + $0x44] sm:$0xf]
        %v3391 = vld [vmem:[%s3372 + $0x48] sm:$0xf]
        %v3392 = vld [vmem:[%s3372 + $0x4c] sm:$0xf]
        %v3393 = vld [vmem:[%s3372 + $0x50] sm:$0xf]
        %v3394 = vld [vmem:[%s3372 + $0x54] sm:$0xf]
        %v3395 = vld [vmem:[%s3372 + $0x58] sm:$0xf]
        %v3396 = vld [vmem:[%s3372 + $0x5c] sm:$0xf]
        %v3397 = vld [vmem:[%s3372 + $0x60] sm:$0xf]
        %v3398 = vld [vmem:[%s3372 + $0x64] sm:$0xf]
        %v3399 = vld [vmem:[%s3372 + $0x68] sm:$0xf]
        %v3400 = vld [vmem:[%s3372 + $0x6c] sm:$0xf]
        %v3401 = vld [vmem:[%s3372 + $0x70] sm:$0xf]
        %v3402 = vld [vmem:[%s3372 + $0x74] sm:$0xf]
        %v3403 = vld [vmem:[%s3372 + $0x78] sm:$0xf]
        %v3404 = vld [vmem:[%s3372 + $0x7c] sm:$0xf]
        %v3405 = vld [vmem:[%s3372 + $0x80] sm:$0xf]
        %v3406 = vld [vmem:[%s3372 + $0x84] sm:$0xf]
        %v3407 = vld [vmem:[%s3372 + $0x88] sm:$0xf]
        %v3408 = vld [vmem:[%s3372 + $0x8c] sm:$0xf]
        %v3409 = vld [vmem:[%s3372 + $0x90] sm:$0xf]
        %v3410 = vld [vmem:[%s3372 + $0x94] sm:$0xf]
        %v3411 = vld [vmem:[%s3372 + $0x98] sm:$0xf]
        %v3412 = vld [vmem:[%s3372 + $0x9c] sm:$0xf]
        %v3413 = vld [vmem:[%s3372 + $0xa0] sm:$0xf]
        %v3414 = vld [vmem:[%s3372 + $0xa4] sm:$0xf]
        %v3415 = vld [vmem:[%s3372 + $0xa8] sm:$0xf]
        %v3416 = vld [vmem:[%s3372 + $0xac] sm:$0xf]
        %v3417 = vld [vmem:[%s3372 + $0xb0] sm:$0xf]
        %v3418 = vld [vmem:[%s3372 + $0xb4] sm:$0xf]
        %v3419 = vld [vmem:[%s3372 + $0xb8] sm:$0xf]
        %v3420 = vld [vmem:[%s3372 + $0xbc] sm:$0xf]
        %v3421 = vld [vmem:[%s3372 + $0xc0] sm:$0xf]
        %v3422 = vld [vmem:[%s3372 + $0xc4] sm:$0xf]
        %v3423 = vld [vmem:[%s3372 + $0xc8] sm:$0xf]
        %v3424 = vld [vmem:[%s3372 + $0xcc] sm:$0xf]
        %v3425 = vld [vmem:[%s3372 + $0xd0] sm:$0xf]
        %v3426 = vld [vmem:[%s3372 + $0xd4] sm:$0xf]
        %v3427 = vld [vmem:[%s3372 + $0xd8] sm:$0xf]
        %v3428 = vld [vmem:[%s3372 + $0xdc] sm:$0xf]
        %v3429 = vld [vmem:[%s3372 + $0xe0] sm:$0xf]
        %v3430 = vld [vmem:[%s3372 + $0xe4] sm:$0xf]
        %v3431 = vld [vmem:[%s3372 + $0xe8] sm:$0xf]
        %v3432 = vld [vmem:[%s3372 + $0xec] sm:$0xf]
        %v3433 = vld [vmem:[%s3372 + $0xf0] sm:$0xf]
        %v3434 = vld [vmem:[%s3372 + $0xf4] sm:$0xf]
        %v3435 = vld [vmem:[%s3372 + $0xf8] sm:$0xf]
        %v3436 = vld [vmem:[%s3372 + $0xfc] sm:$0xf]
        %v3437 = vld [vmem:[%s3372 + $0x100] sm:$0xf]
        %v3438 = vld [vmem:[%s3372 + $0x104] sm:$0xf]
        %v3439 = vld [vmem:[%s3372 + $0x108] sm:$0xf]
        %v3440 = vld [vmem:[%s3372 + $0x10c] sm:$0xf]
        %v3441 = vld [vmem:[%s3372 + $0x110] sm:$0xf]
        %v3442 = vld [vmem:[%s3372 + $0x114] sm:$0xf]
        %v3443 = vld [vmem:[%s3372 + $0x118] sm:$0xf]
        %v3444 = vld [vmem:[%s3372 + $0x11c] sm:$0xf]
        %v3445 = vld [vmem:[%s3372 + $0x120] sm:$0xf]
        %v3446 = vld [vmem:[%s3372 + $0x124] sm:$0xf]
        %v3447 = vld [vmem:[%s3372 + $0x128] sm:$0xf]
        %v3448 = vld [vmem:[%s3372 + $0x12c] sm:$0xf]
        %v3449 = vld [vmem:[%s3372 + $0x130] sm:$0xf]
        %v3450 = vld [vmem:[%s3372 + $0x134] sm:$0xf]
        %v3451 = vld [vmem:[%s3372 + $0x138] sm:$0xf]
        %v3452 = vld [vmem:[%s3372 + $0x13c] sm:$0xf]
        %v3453 = vld [vmem:[%s3372 + $0x140] sm:$0xf]
        %v3454 = vld [vmem:[%s3372 + $0x144] sm:$0xf]
        %v3455 = vld [vmem:[%s3372 + $0x148] sm:$0xf]
        %v3456 = vld [vmem:[%s3372 + $0x14c] sm:$0xf]
        %v3457 = vld [vmem:[%s3372 + $0x150] sm:$0xf]
        %v3458 = vld [vmem:[%s3372 + $0x154] sm:$0xf]
        %v3459 = vld [vmem:[%s3372 + $0x158] sm:$0xf]
        %v3460 = vld [vmem:[%s3372 + $0x15c] sm:$0xf]
        %v3461 = vld [vmem:[%s3372 + $0x160] sm:$0xf]
        %v3462 = vld [vmem:[%s3372 + $0x164] sm:$0xf]
        %v3463 = vld [vmem:[%s3372 + $0x168] sm:$0xf]
        %v3464 = vld [vmem:[%s3372 + $0x16c] sm:$0xf]
        %v3465 = vld [vmem:[%s3372 + $0x170] sm:$0xf]
        %v3466 = vld [vmem:[%s3372 + $0x174] sm:$0xf]
        %v3467 = vld [vmem:[%s3372 + $0x178] sm:$0xf]
        %v3468 = vld [vmem:[%s3372 + $0x17c] sm:$0xf]
        %v3469 = vld [vmem:[%s3372 + $0x180] sm:$0xf]
        %v3470 = vld [vmem:[%s3372 + $0x184] sm:$0xf]
        %v3471 = vld [vmem:[%s3372 + $0x188] sm:$0xf]
        %v3472 = vld [vmem:[%s3372 + $0x18c] sm:$0xf]
        %v3473 = vld [vmem:[%s3372 + $0x190] sm:$0xf]
        %v3474 = vld [vmem:[%s3372 + $0x194] sm:$0xf]
        %v3475 = vld [vmem:[%s3372 + $0x198] sm:$0xf]
        %v3476 = vld [vmem:[%s3372 + $0x19c] sm:$0xf]
        %v3477 = vld [vmem:[%s3372 + $0x1a0] sm:$0xf]
        %v3478 = vld [vmem:[%s3372 + $0x1a4] sm:$0xf]
        %v3479 = vld [vmem:[%s3372 + $0x1a8] sm:$0xf]
        %v3480 = vld [vmem:[%s3372 + $0x1ac] sm:$0xf]
        %v3481 = vld [vmem:[%s3372 + $0x1b0] sm:$0xf]
        %v3482 = vld [vmem:[%s3372 + $0x1b4] sm:$0xf]
        %v3483 = vld [vmem:[%s3372 + $0x1b8] sm:$0xf]
        %v3484 = vld [vmem:[%s3372 + $0x1bc] sm:$0xf]
        %v3485 = vld [vmem:[%s3372 + $0x1c0] sm:$0xf]
        %v3486 = vld [vmem:[%s3372 + $0x1c4] sm:$0xf]
        %v3487 = vld [vmem:[%s3372 + $0x1c8] sm:$0xf]
        %v3488 = vld [vmem:[%s3372 + $0x1cc] sm:$0xf]
        %v3489 = vld [vmem:[%s3372 + $0x1d0] sm:$0xf]
        %v3490 = vld [vmem:[%s3372 + $0x1d4] sm:$0xf]
        %v3491 = vld [vmem:[%s3372 + $0x1d8] sm:$0xf]
        %v3492 = vld [vmem:[%s3372 + $0x1dc] sm:$0xf]
        %v3493 = vld [vmem:[%s3372 + $0x1e0] sm:$0xf]
        %v3494 = vld [vmem:[%s3372 + $0x1e4] sm:$0xf]
        %v3495 = vld [vmem:[%s3372 + $0x1e8] sm:$0xf]
        %v3496 = vld [vmem:[%s3372 + $0x1ec] sm:$0xf]
        %v3497 = vld [vmem:[%s3372 + $0x1f0] sm:$0xf]
        %v3498 = vld [vmem:[%s3372 + $0x1f4] sm:$0xf]
        %v3499 = vld [vmem:[%s3372 + $0x1f8] sm:$0xf]
        %v3500 = vld [vmem:[%s3372 + $0x1fc] sm:$0xf]
        %v3629 = vunpack.c.l.b16 %v3373
        %v3630 = vunpack.c.l.b16 %v3374
        %v3631 = vunpack.c.l.b16 %v3375
        %v3632 = vunpack.c.l.b16 %v3376
        %v3633 = vunpack.c.l.b16 %v3377
        %v3634 = vunpack.c.l.b16 %v3378
        %v3635 = vunpack.c.l.b16 %v3379
        %v3636 = vunpack.c.l.b16 %v3380
        %v3637 = vunpack.c.l.b16 %v3381
        %v3638 = vunpack.c.l.b16 %v3382
        %v3639 = vunpack.c.l.b16 %v3383
        %v3640 = vunpack.c.l.b16 %v3384
        %v3641 = vunpack.c.l.b16 %v3385
        %v3642 = vunpack.c.l.b16 %v3386
        %v3643 = vunpack.c.l.b16 %v3387
        %v3644 = vunpack.c.l.b16 %v3388
        %v3645 = vunpack.c.l.b16 %v3389
        %v3646 = vunpack.c.l.b16 %v3390
        %v3647 = vunpack.c.l.b16 %v3391
        %v3648 = vunpack.c.l.b16 %v3392
        %v3649 = vunpack.c.l.b16 %v3393
        %v3650 = vunpack.c.l.b16 %v3394
        %v3651 = vunpack.c.l.b16 %v3395
        %v3652 = vunpack.c.l.b16 %v3396
        %v3653 = vunpack.c.l.b16 %v3397
        %v3654 = vunpack.c.l.b16 %v3398
        %v3655 = vunpack.c.l.b16 %v3399
        %v3656 = vunpack.c.l.b16 %v3400
        %v3657 = vunpack.c.l.b16 %v3401
        %v3658 = vunpack.c.l.b16 %v3402
        %v3659 = vunpack.c.l.b16 %v3403
        %v3660 = vunpack.c.l.b16 %v3404
        %v3661 = vunpack.c.l.b16 %v3405
        %v3662 = vunpack.c.l.b16 %v3406
        %v3663 = vunpack.c.l.b16 %v3407
        %v3664 = vunpack.c.l.b16 %v3408
        %v3665 = vunpack.c.l.b16 %v3409
        %v3666 = vunpack.c.l.b16 %v3410
        %v3667 = vunpack.c.l.b16 %v3411
        %v3668 = vunpack.c.l.b16 %v3412
        %v3669 = vunpack.c.l.b16 %v3413
        %v3670 = vunpack.c.l.b16 %v3414
        %v3671 = vunpack.c.l.b16 %v3415
        %v3672 = vunpack.c.l.b16 %v3416
        %v3673 = vunpack.c.l.b16 %v3417
        %v3674 = vunpack.c.l.b16 %v3418
        %v3675 = vunpack.c.l.b16 %v3419
        %v3676 = vunpack.c.l.b16 %v3420
        %v3677 = vunpack.c.l.b16 %v3421
        %v3678 = vunpack.c.l.b16 %v3422
        %v3679 = vunpack.c.l.b16 %v3423
        %v3680 = vunpack.c.l.b16 %v3424
        %v3681 = vunpack.c.l.b16 %v3425
        %v3682 = vunpack.c.l.b16 %v3426
        %v3683 = vunpack.c.l.b16 %v3427
        %v3684 = vunpack.c.l.b16 %v3428
        %v3685 = vunpack.c.l.b16 %v3429
        %v3686 = vunpack.c.l.b16 %v3430
        %v3687 = vunpack.c.l.b16 %v3431
        %v3688 = vunpack.c.l.b16 %v3432
        %v3689 = vunpack.c.l.b16 %v3433
        %v3690 = vunpack.c.l.b16 %v3434
        %v3691 = vunpack.c.l.b16 %v3435
        %v3692 = vunpack.c.l.b16 %v3436
        %v3693 = vunpack.c.l.b16 %v3437
        %v3694 = vunpack.c.l.b16 %v3438
        %v3695 = vunpack.c.l.b16 %v3439
        %v3696 = vunpack.c.l.b16 %v3440
        %v3697 = vunpack.c.l.b16 %v3441
        %v3698 = vunpack.c.l.b16 %v3442
        %v3699 = vunpack.c.l.b16 %v3443
        %v3700 = vunpack.c.l.b16 %v3444
        %v3701 = vunpack.c.l.b16 %v3445
        %v3702 = vunpack.c.l.b16 %v3446
        %v3703 = vunpack.c.l.b16 %v3447
        %v3704 = vunpack.c.l.b16 %v3448
        %v3705 = vunpack.c.l.b16 %v3449
        %v3706 = vunpack.c.l.b16 %v3450
        %v3707 = vunpack.c.l.b16 %v3451
        %v3708 = vunpack.c.l.b16 %v3452
        %v3709 = vunpack.c.l.b16 %v3453
        %v3710 = vunpack.c.l.b16 %v3454
        %v3711 = vunpack.c.l.b16 %v3455
        %v3712 = vunpack.c.l.b16 %v3456
        %v3713 = vunpack.c.l.b16 %v3457
        %v3714 = vunpack.c.l.b16 %v3458
        %v3715 = vunpack.c.l.b16 %v3459
        %v3716 = vunpack.c.l.b16 %v3460
        %v3717 = vunpack.c.l.b16 %v3461
        %v3718 = vunpack.c.l.b16 %v3462
        %v3719 = vunpack.c.l.b16 %v3463
        %v3720 = vunpack.c.l.b16 %v3464
        %v3721 = vunpack.c.l.b16 %v3465
        %v3722 = vunpack.c.l.b16 %v3466
        %v3723 = vunpack.c.l.b16 %v3467
        %v3724 = vunpack.c.l.b16 %v3468
        %v3725 = vunpack.c.l.b16 %v3469
        %v3726 = vunpack.c.l.b16 %v3470
        %v3727 = vunpack.c.l.b16 %v3471
        %v3728 = vunpack.c.l.b16 %v3472
        %v3729 = vunpack.c.l.b16 %v3473
        %v3730 = vunpack.c.l.b16 %v3474
        %v3731 = vunpack.c.l.b16 %v3475
        %v3732 = vunpack.c.l.b16 %v3476
        %v3733 = vunpack.c.l.b16 %v3477
        %v3734 = vunpack.c.l.b16 %v3478
        %v3735 = vunpack.c.l.b16 %v3479
        %v3736 = vunpack.c.l.b16 %v3480
        %v3737 = vunpack.c.l.b16 %v3481
        %v3738 = vunpack.c.l.b16 %v3482
        %v3739 = vunpack.c.l.b16 %v3483
        %v3740 = vunpack.c.l.b16 %v3484
        %v3741 = vunpack.c.l.b16 %v3485
        %v3742 = vunpack.c.l.b16 %v3486
        %v3743 = vunpack.c.l.b16 %v3487
        %v3744 = vunpack.c.l.b16 %v3488
        %v3745 = vunpack.c.l.b16 %v3489
        %v3746 = vunpack.c.l.b16 %v3490
        %v3747 = vunpack.c.l.b16 %v3491
        %v3748 = vunpack.c.l.b16 %v3492
        %v3749 = vunpack.c.l.b16 %v3493
        %v3750 = vunpack.c.l.b16 %v3494
        %v3751 = vunpack.c.l.b16 %v3495
        %v3752 = vunpack.c.l.b16 %v3496
        %v3753 = vunpack.c.l.b16 %v3497
        %v3754 = vunpack.c.l.b16 %v3498
        %v3755 = vunpack.c.l.b16 %v3499
        %v3756 = vunpack.c.l.b16 %v3500
        %v3757 = vpack.c.b16 %v3630, %v3629
        %v3758 = vpack.c.b16 %v3632, %v3631
        %v3759 = vpack.c.b16 %v3634, %v3633
        %v3760 = vpack.c.b16 %v3636, %v3635
        %v3761 = vpack.c.b16 %v3638, %v3637
        %v3762 = vpack.c.b16 %v3640, %v3639
        %v3763 = vpack.c.b16 %v3642, %v3641
        %v3764 = vpack.c.b16 %v3644, %v3643
        %v3765 = vpack.c.b16 %v3646, %v3645
        %v3766 = vpack.c.b16 %v3648, %v3647
        %v3767 = vpack.c.b16 %v3650, %v3649
        %v3768 = vpack.c.b16 %v3652, %v3651
        %v3769 = vpack.c.b16 %v3654, %v3653
        %v3770 = vpack.c.b16 %v3656, %v3655
        %v3771 = vpack.c.b16 %v3658, %v3657
        %v3772 = vpack.c.b16 %v3660, %v3659
        %v3773 = vpack.c.b16 %v3662, %v3661
        %v3774 = vpack.c.b16 %v3664, %v3663
        %v3775 = vpack.c.b16 %v3666, %v3665
        %v3776 = vpack.c.b16 %v3668, %v3667
        %v3777 = vpack.c.b16 %v3670, %v3669
        %v3778 = vpack.c.b16 %v3672, %v3671
        %v3779 = vpack.c.b16 %v3674, %v3673
        %v3780 = vpack.c.b16 %v3676, %v3675
        %v3781 = vpack.c.b16 %v3678, %v3677
        %v3782 = vpack.c.b16 %v3680, %v3679
        %v3783 = vpack.c.b16 %v3682, %v3681
        %v3784 = vpack.c.b16 %v3684, %v3683
        %v3785 = vpack.c.b16 %v3686, %v3685
        %v3786 = vpack.c.b16 %v3688, %v3687
        %v3787 = vpack.c.b16 %v3690, %v3689
        %v3788 = vpack.c.b16 %v3692, %v3691
        %v3789 = vpack.c.b16 %v3694, %v3693
        %v3790 = vpack.c.b16 %v3696, %v3695
        %v3791 = vpack.c.b16 %v3698, %v3697
        %v3792 = vpack.c.b16 %v3700, %v3699
        %v3793 = vpack.c.b16 %v3702, %v3701
        %v3794 = vpack.c.b16 %v3704, %v3703
        %v3795 = vpack.c.b16 %v3706, %v3705
        %v3796 = vpack.c.b16 %v3708, %v3707
        %v3797 = vpack.c.b16 %v3710, %v3709
        %v3798 = vpack.c.b16 %v3712, %v3711
        %v3799 = vpack.c.b16 %v3714, %v3713
        %v3800 = vpack.c.b16 %v3716, %v3715
        %v3801 = vpack.c.b16 %v3718, %v3717
        %v3802 = vpack.c.b16 %v3720, %v3719
        %v3803 = vpack.c.b16 %v3722, %v3721
        %v3804 = vpack.c.b16 %v3724, %v3723
        %v3805 = vpack.c.b16 %v3726, %v3725
        %v3806 = vpack.c.b16 %v3728, %v3727
        %v3807 = vpack.c.b16 %v3730, %v3729
        %v3808 = vpack.c.b16 %v3732, %v3731
        %v3809 = vpack.c.b16 %v3734, %v3733
        %v3810 = vpack.c.b16 %v3736, %v3735
        %v3811 = vpack.c.b16 %v3738, %v3737
        %v3812 = vpack.c.b16 %v3740, %v3739
        %v3813 = vpack.c.b16 %v3742, %v3741
        %v3814 = vpack.c.b16 %v3744, %v3743
        %v3815 = vpack.c.b16 %v3746, %v3745
        %v3816 = vpack.c.b16 %v3748, %v3747
        %v3817 = vpack.c.b16 %v3750, %v3749
        %v3818 = vpack.c.b16 %v3752, %v3751
        %v3819 = vpack.c.b16 %v3754, %v3753
        %v3820 = vpack.c.b16 %v3756, %v3755
        %3885 = vmatprep.subr.bf16.mxu0 0
        %3886 = vmatpush1.bf16.msra.mxu0 %v3757
        %3887 = vmatprep.subr.bf16.mxu0 0
        %3888 = vmatpush1.bf16.msra.mxu0 %v3758
        %3889 = vmatprep.subr.bf16.mxu0 0
        %3890 = vmatpush1.bf16.msra.mxu0 %v3759
        %3891 = vmatprep.subr.bf16.mxu0 0
        %3892 = vmatpush1.bf16.msra.mxu0 %v3760
        %3893 = vmatprep.subr.bf16.mxu0 0
        %3894 = vmatpush1.bf16.msra.mxu0 %v3761
        %3895 = vmatprep.subr.bf16.mxu0 0
        %3896 = vmatpush1.bf16.msra.mxu0 %v3762
        %3897 = vmatprep.subr.bf16.mxu0 0
        %3898 = vmatpush1.bf16.msra.mxu0 %v3763
        %3899 = vmatprep.subr.bf16.mxu0 0
        %3900 = vmatpush1.bf16.msra.mxu0 %v3764
        %3901 = vmatprep.subr.bf16.mxu0 0
        %3902 = vmatpush1.bf16.msra.mxu0 %v3765
        %3903 = vmatprep.subr.bf16.mxu0 0
        %3904 = vmatpush1.bf16.msra.mxu0 %v3766
        %3905 = vmatprep.subr.bf16.mxu0 0
        %3906 = vmatpush1.bf16.msra.mxu0 %v3767
        %3907 = vmatprep.subr.bf16.mxu0 0
        %3908 = vmatpush1.bf16.msra.mxu0 %v3768
        %3909 = vmatprep.subr.bf16.mxu0 0
        %3910 = vmatpush1.bf16.msra.mxu0 %v3769
        %3911 = vmatprep.subr.bf16.mxu0 0
        %3912 = vmatpush1.bf16.msra.mxu0 %v3770
        %3913 = vmatprep.subr.bf16.mxu0 0
        %3914 = vmatpush1.bf16.msra.mxu0 %v3771
        %3915 = vmatprep.subr.bf16.mxu0 0
        %3916 = vmatpush1.bf16.msra.mxu0 %v3772
        %3917 = vmatprep.mubr.bf16.mxu0 %v3306
        %3918 = vmatmul.mubr.bf16.gmra.mrb[0].mxu0 %v3305
        %v3919 = vpop.f32.mrb[0].mxu0
        %v3920 = vadd.f32 0.0, %v3919
        %v3921 = vpop.f32.mrb[0].mxu0
        %v3922 = vpop.f32.mrb[0].mxu0
        %v3923 = vadd.f32 0.0, %v3922
        %v3924 = vpop.f32.mrb[0].mxu0
        %3925 = vmatprep.mubr.bf16.mxu0 %v3314
        %3926 = vmatmul.mubr.bf16.gmra.mrb[0].mxu0 %v3313
        %v3927 = vpop.f32.mrb[0].mxu0
        %v3928 = vadd.f32 0.0, %v3927
        %v3929 = vpop.f32.mrb[0].mxu0
        %v3930 = vpop.f32.mrb[0].mxu0
        %v3931 = vadd.f32 0.0, %v3930
        %v3932 = vpop.f32.mrb[0].mxu0
        %3933 = vmatprep.mubr.bf16.mxu0 %v3322
        %3934 = vmatmul.mubr.bf16.gmra.mrb[0].mxu0 %v3321
        %v3935 = vpop.f32.mrb[0].mxu0
        %v3936 = vadd.f32 0.0, %v3935
        %v3937 = vpop.f32.mrb[0].mxu0
        %v3938 = vpop.f32.mrb[0].mxu0
        %v3939 = vadd.f32 0.0, %v3938
        %v3940 = vpop.f32.mrb[0].mxu0
        %3941 = vmatprep.mubr.bf16.mxu0 %v3330
        %3942 = vmatmul.mubr.bf16.gmra.mrb[0].mxu0 %v3329
        %v3943 = vpop.f32.mrb[0].mxu0
        %v3944 = vadd.f32 0.0, %v3943
        %v3945 = vpop.f32.mrb[0].mxu0
        %v3946 = vpop.f32.mrb[0].mxu0
        %v3947 = vadd.f32 0.0, %v3946
        %v3948 = vpop.f32.mrb[0].mxu0
        %3949 = vmatprep.mubr.bf16.mxu0 %v3338
        %3950 = vmatmul.mubr.bf16.gmra.mrb[0].mxu0 %v3337
        %v3951 = vpop.f32.mrb[0].mxu0
        %v3952 = vadd.f32 0.0, %v3951
        %v3953 = vpop.f32.mrb[0].mxu0
        %v3954 = vpop.f32.mrb[0].mxu0
        %v3955 = vadd.f32 0.0, %v3954
        %v3956 = vpop.f32.mrb[0].mxu0
        %3957 = vmatprep.mubr.bf16.mxu0 %v3346
        %3958 = vmatmul.mubr.bf16.gmra.mrb[0].mxu0 %v3345
        %v3959 = vpop.f32.mrb[0].mxu0
        %v3960 = vadd.f32 0.0, %v3959
        %v3961 = vpop.f32.mrb[0].mxu0
        %v3962 = vpop.f32.mrb[0].mxu0
        %v3963 = vadd.f32 0.0, %v3962
        %v3964 = vpop.f32.mrb[0].mxu0
        %3965 = vmatprep.mubr.bf16.mxu0 %v3354
        %3966 = vmatmul.mubr.bf16.gmra.mrb[0].mxu0 %v3353
        %v3967 = vpop.f32.mrb[0].mxu0
        %v3968 = vadd.f32 0.0, %v3967
        %v3969 = vpop.f32.mrb[0].mxu0
        %v3970 = vpop.f32.mrb[0].mxu0
        %v3971 = vadd.f32 0.0, %v3970
        %v3972 = vpop.f32.mrb[0].mxu0
        %3973 = vmatprep.mubr.bf16.mxu0 %v3362
        %3974 = vmatmul.mubr.bf16.gmra.mrb[0].mxu0 %v3361
        %v3975 = vpop.f32.mrb[0].mxu0
        %v3976 = vadd.f32 0.0, %v3975
        %v3977 = vpop.f32.mrb[0].mxu0
        %v3978 = vpop.f32.mrb[0].mxu0
        %v3979 = vadd.f32 0.0, %v3978
        %v3980 = vpop.f32.mrb[0].mxu0
        %3981 = vdwg.mxu0
        %3982 = vmatprep.subr.bf16.mxu0 0
        %3983 = vmatpush1.bf16.msra.mxu0 %v3773
        %3984 = vmatprep.subr.bf16.mxu0 0
        %3985 = vmatpush1.bf16.msra.mxu0 %v3774
        %3986 = vmatprep.subr.bf16.mxu0 0
        %3987 = vmatpush1.bf16.msra.mxu0 %v3775
        %3988 = vmatprep.subr.bf16.mxu0 0
        %3989 = vmatpush1.bf16.msra.mxu0 %v3776
        %3990 = vmatprep.subr.bf16.mxu0 0
        %3991 = vmatpush1.bf16.msra.mxu0 %v3777
        %3992 = vmatprep.subr.bf16.mxu0 0
        %3993 = vmatpush1.bf16.msra.mxu0 %v3778
        %3994 = vmatprep.subr.bf16.mxu0 0
        %3995 = vmatpush1.bf16.msra.mxu0 %v3779
        %3996 = vmatprep.subr.bf16.mxu0 0
        %3997 = vmatpush1.bf16.msra.mxu0 %v3780
        %3998 = vmatprep.subr.bf16.mxu0 0
        %3999 = vmatpush1.bf16.msra.mxu0 %v3781
        %4000 = vmatprep.subr.bf16.mxu0 0
        %4001 = vmatpush1.bf16.msra.mxu0 %v3782
        %4002 = vmatprep.subr.bf16.mxu0 0
        %4003 = vmatpush1.bf16.msra.mxu0 %v3783
        %4004 = vmatprep.subr.bf16.mxu0 0
        %4005 = vmatpush1.bf16.msra.mxu0 %v3784
        %4006 = vmatprep.subr.bf16.mxu0 0
        %4007 = vmatpush1.bf16.msra.mxu0 %v3785
        %4008 = vmatprep.subr.bf16.mxu0 0
        %4009 = vmatpush1.bf16.msra.mxu0 %v3786
        %4010 = vmatprep.subr.bf16.mxu0 0
        %4011 = vmatpush1.bf16.msra.mxu0 %v3787
        %4012 = vmatprep.subr.bf16.mxu0 0
        %4013 = vmatpush1.bf16.msra.mxu0 %v3788
        %4014 = vmatprep.mubr.bf16.mxu0 %v3308
        %4015 = vmatmul.mubr.bf16.gmra.mrb[0].mxu0 %v3307
        %v4016 = vpop.f32.mrb[0].mxu0
        %v4017 = vadd.f32 %v3920, %v4016
        %v4018 = vpop.f32.mrb[0].mxu0
        %v4019 = vpop.f32.mrb[0].mxu0
        %v4020 = vadd.f32 %v3923, %v4019
        %v4021 = vpop.f32.mrb[0].mxu0
        %4022 = vmatprep.mubr.bf16.mxu0 %v3316
        %4023 = vmatmul.mubr.bf16.gmra.mrb[0].mxu0 %v3315
        %v4024 = vpop.f32.mrb[0].mxu0
        %v4025 = vadd.f32 %v3928, %v4024
        %v4026 = vpop.f32.mrb[0].mxu0
        %v4027 = vpop.f32.mrb[0].mxu0
        %v4028 = vadd.f32 %v3931, %v4027
        %v4029 = vpop.f32.mrb[0].mxu0
        %4030 = vmatprep.mubr.bf16.mxu0 %v3324
        %4031 = vmatmul.mubr.bf16.gmra.mrb[0].mxu0 %v3323
        %v4032 = vpop.f32.mrb[0].mxu0
        %v4033 = vadd.f32 %v3936, %v4032
        %v4034 = vpop.f32.mrb[0].mxu0
        %v4035 = vpop.f32.mrb[0].mxu0
        %v4036 = vadd.f32 %v3939, %v4035
        %v4037 = vpop.f32.mrb[0].mxu0
        %4038 = vmatprep.mubr.bf16.mxu0 %v3332
        %4039 = vmatmul.mubr.bf16.gmra.mrb[0].mxu0 %v3331
        %v4040 = vpop.f32.mrb[0].mxu0
        %v4041 = vadd.f32 %v3944, %v4040
        %v4042 = vpop.f32.mrb[0].mxu0
        %v4043 = vpop.f32.mrb[0].mxu0
        %v4044 = vadd.f32 %v3947, %v4043
        %v4045 = vpop.f32.mrb[0].mxu0
        %4046 = vmatprep.mubr.bf16.mxu0 %v3340
        %4047 = vmatmul.mubr.bf16.gmra.mrb[0].mxu0 %v3339
        %v4048 = vpop.f32.mrb[0].mxu0
        %v4049 = vadd.f32 %v3952, %v4048
        %v4050 = vpop.f32.mrb[0].mxu0
        %v4051 = vpop.f32.mrb[0].mxu0
        %v4052 = vadd.f32 %v3955, %v4051
        %v4053 = vpop.f32.mrb[0].mxu0
        %4054 = vmatprep.mubr.bf16.mxu0 %v3348
        %4055 = vmatmul.mubr.bf16.gmra.mrb[0].mxu0 %v3347
        %v4056 = vpop.f32.mrb[0].mxu0
        %v4057 = vadd.f32 %v3960, %v4056
        %v4058 = vpop.f32.mrb[0].mxu0
        %v4059 = vpop.f32.mrb[0].mxu0
        %v4060 = vadd.f32 %v3963, %v4059
        %v4061 = vpop.f32.mrb[0].mxu0
        %4062 = vmatprep.mubr.bf16.mxu0 %v3356
        %4063 = vmatmul.mubr.bf16.gmra.mrb[0].mxu0 %v3355
        %v4064 = vpop.f32.mrb[0].mxu0
        %v4065 = vadd.f32 %v3968, %v4064
        %v4066 = vpop.f32.mrb[0].mxu0
        %v4067 = vpop.f32.mrb[0].mxu0
        %v4068 = vadd.f32 %v3971, %v4067
        %v4069 = vpop.f32.mrb[0].mxu0
        %4070 = vmatprep.mubr.bf16.mxu0 %v3364
        %4071 = vmatmul.mubr.bf16.gmra.mrb[0].mxu0 %v3363
        %v4072 = vpop.f32.mrb[0].mxu0
        %v4073 = vadd.f32 %v3976, %v4072
        %v4074 = vpop.f32.mrb[0].mxu0
        %v4075 = vpop.f32.mrb[0].mxu0
        %v4076 = vadd.f32 %v3979, %v4075
        %v4077 = vpop.f32.mrb[0].mxu0
        %4078 = vdwg.mxu0
        %4079 = vmatprep.subr.bf16.mxu0 0
        %4080 = vmatpush1.bf16.msra.mxu0 %v3789
        %4081 = vmatprep.subr.bf16.mxu0 0
        %4082 = vmatpush1.bf16.msra.mxu0 %v3790
        %4083 = vmatprep.subr.bf16.mxu0 0
        %4084 = vmatpush1.bf16.msra.mxu0 %v3791
        %4085 = vmatprep.subr.bf16.mxu0 0
        %4086 = vmatpush1.bf16.msra.mxu0 %v3792
        %4087 = vmatprep.subr.bf16.mxu0 0
        %4088 = vmatpush1.bf16.msra.mxu0 %v3793
        %4089 = vmatprep.subr.bf16.mxu0 0
        %4090 = vmatpush1.bf16.msra.mxu0 %v3794
        %4091 = vmatprep.subr.bf16.mxu0 0
        %4092 = vmatpush1.bf16.msra.mxu0 %v3795
        %4093 = vmatprep.subr.bf16.mxu0 0
        %4094 = vmatpush1.bf16.msra.mxu0 %v3796
        %4095 = vmatprep.subr.bf16.mxu0 0
        %4096 = vmatpush1.bf16.msra.mxu0 %v3797
        %4097 = vmatprep.subr.bf16.mxu0 0
        %4098 = vmatpush1.bf16.msra.mxu0 %v3798
        %4099 = vmatprep.subr.bf16.mxu0 0
        %4100 = vmatpush1.bf16.msra.mxu0 %v3799
        %4101 = vmatprep.subr.bf16.mxu0 0
        %4102 = vmatpush1.bf16.msra.mxu0 %v3800
        %4103 = vmatprep.subr.bf16.mxu0 0
        %4104 = vmatpush1.bf16.msra.mxu0 %v3801
        %4105 = vmatprep.subr.bf16.mxu0 0
        %4106 = vmatpush1.bf16.msra.mxu0 %v3802
        %4107 = vmatprep.subr.bf16.mxu0 0
        %4108 = vmatpush1.bf16.msra.mxu0 %v3803
        %4109 = vmatprep.subr.bf16.mxu0 0
        %4110 = vmatpush1.bf16.msra.mxu0 %v3804
        %4111 = vmatprep.mubr.bf16.mxu0 %v3310
        %4112 = vmatmul.mubr.bf16.gmra.mrb[0].mxu0 %v3309
        %v4113 = vpop.f32.mrb[0].mxu0
        %v4114 = vadd.f32 %v4017, %v4113
        %v4115 = vpop.f32.mrb[0].mxu0
        %v4116 = vpop.f32.mrb[0].mxu0
        %v4117 = vadd.f32 %v4020, %v4116
        %v4118 = vpop.f32.mrb[0].mxu0
        %4119 = vmatprep.mubr.bf16.mxu0 %v3318
        %4120 = vmatmul.mubr.bf16.gmra.mrb[0].mxu0 %v3317
        %v4121 = vpop.f32.mrb[0].mxu0
        %v4122 = vadd.f32 %v4025, %v4121
        %v4123 = vpop.f32.mrb[0].mxu0
        %v4124 = vpop.f32.mrb[0].mxu0
        %v4125 = vadd.f32 %v4028, %v4124
        %v4126 = vpop.f32.mrb[0].mxu0
        %4127 = vmatprep.mubr.bf16.mxu0 %v3326
        %4128 = vmatmul.mubr.bf16.gmra.mrb[0].mxu0 %v3325
        %v4129 = vpop.f32.mrb[0].mxu0
        %v4130 = vadd.f32 %v4033, %v4129
        %v4131 = vpop.f32.mrb[0].mxu0
        %v4132 = vpop.f32.mrb[0].mxu0
        %v4133 = vadd.f32 %v4036, %v4132
        %v4134 = vpop.f32.mrb[0].mxu0
        %4135 = vmatprep.mubr.bf16.mxu0 %v3334
        %4136 = vmatmul.mubr.bf16.gmra.mrb[0].mxu0 %v3333
        %v4137 = vpop.f32.mrb[0].mxu0
        %v4138 = vadd.f32 %v4041, %v4137
        %v4139 = vpop.f32.mrb[0].mxu0
        %v4140 = vpop.f32.mrb[0].mxu0
        %v4141 = vadd.f32 %v4044, %v4140
        %v4142 = vpop.f32.mrb[0].mxu0
        %4143 = vmatprep.mubr.bf16.mxu0 %v3342
        %4144 = vmatmul.mubr.bf16.gmra.mrb[0].mxu0 %v3341
        %v4145 = vpop.f32.mrb[0].mxu0
        %v4146 = vadd.f32 %v4049, %v4145
        %v4147 = vpop.f32.mrb[0].mxu0
        %v4148 = vpop.f32.mrb[0].mxu0
        %v4149 = vadd.f32 %v4052, %v4148
        %v4150 = vpop.f32.mrb[0].mxu0
        %4151 = vmatprep.mubr.bf16.mxu0 %v3350
        %4152 = vmatmul.mubr.bf16.gmra.mrb[0].mxu0 %v3349
        %v4153 = vpop.f32.mrb[0].mxu0
        %v4154 = vadd.f32 %v4057, %v4153
        %v4155 = vpop.f32.mrb[0].mxu0
        %v4156 = vpop.f32.mrb[0].mxu0
        %v4157 = vadd.f32 %v4060, %v4156
        %v4158 = vpop.f32.mrb[0].mxu0
        %4159 = vmatprep.mubr.bf16.mxu0 %v3358
        %4160 = vmatmul.mubr.bf16.gmra.mrb[0].mxu0 %v3357
        %v4161 = vpop.f32.mrb[0].mxu0
        %v4162 = vadd.f32 %v4065, %v4161
        %v4163 = vpop.f32.mrb[0].mxu0
        %v4164 = vpop.f32.mrb[0].mxu0
        %v4165 = vadd.f32 %v4068, %v4164
        %v4166 = vpop.f32.mrb[0].mxu0
        %4167 = vmatprep.mubr.bf16.mxu0 %v3366
        %4168 = vmatmul.mubr.bf16.gmra.mrb[0].mxu0 %v3365
        %v4169 = vpop.f32.mrb[0].mxu0
        %v4170 = vadd.f32 %v4073, %v4169
        %v4171 = vpop.f32.mrb[0].mxu0
        %v4172 = vpop.f32.mrb[0].mxu0
        %v4173 = vadd.f32 %v4076, %v4172
        %v4174 = vpop.f32.mrb[0].mxu0
        %4175 = vdwg.mxu0
        %4176 = vmatprep.subr.bf16.mxu0 0
        %4177 = vmatpush1.bf16.msra.mxu0 %v3805
        %4178 = vmatprep.subr.bf16.mxu0 0
        %4179 = vmatpush1.bf16.msra.mxu0 %v3806
        %4180 = vmatprep.subr.bf16.mxu0 0
        %4181 = vmatpush1.bf16.msra.mxu0 %v3807
        %4182 = vmatprep.subr.bf16.mxu0 0
        %4183 = vmatpush1.bf16.msra.mxu0 %v3808
        %4184 = vmatprep.subr.bf16.mxu0 0
        %4185 = vmatpush1.bf16.msra.mxu0 %v3809
        %4186 = vmatprep.subr.bf16.mxu0 0
        %4187 = vmatpush1.bf16.msra.mxu0 %v3810
        %4188 = vmatprep.subr.bf16.mxu0 0
        %4189 = vmatpush1.bf16.msra.mxu0 %v3811
        %4190 = vmatprep.subr.bf16.mxu0 0
        %4191 = vmatpush1.bf16.msra.mxu0 %v3812
        %4192 = vmatprep.subr.bf16.mxu0 0
        %4193 = vmatpush1.bf16.msra.mxu0 %v3813
        %4194 = vmatprep.subr.bf16.mxu0 0
        %4195 = vmatpush1.bf16.msra.mxu0 %v3814
        %4196 = vmatprep.subr.bf16.mxu0 0
        %4197 = vmatpush1.bf16.msra.mxu0 %v3815
        %4198 = vmatprep.subr.bf16.mxu0 0
        %4199 = vmatpush1.bf16.msra.mxu0 %v3816
        %4200 = vmatprep.subr.bf16.mxu0 0
        %4201 = vmatpush1.bf16.msra.mxu0 %v3817
        %4202 = vmatprep.subr.bf16.mxu0 0
        %4203 = vmatpush1.bf16.msra.mxu0 %v3818
        %4204 = vmatprep.subr.bf16.mxu0 0
        %4205 = vmatpush1.bf16.msra.mxu0 %v3819
        %4206 = vmatprep.subr.bf16.mxu0 0
        %4207 = vmatpush1.bf16.msra.mxu0 %v3820
        %4208 = vmatprep.mubr.bf16.mxu0 %v3312
        %4209 = vmatmul.mubr.bf16.gmra.mrb[0].mxu0 %v3311
        %v4210 = vpop.f32.mrb[0].mxu0
        %v4211 = vadd.f32 %v4114, %v4210
        %v4212 = vpop.f32.mrb[0].mxu0
        %v4213 = vpop.f32.mrb[0].mxu0
        %v4214 = vadd.f32 %v4117, %v4213
        %v4215 = vpop.f32.mrb[0].mxu0
        %4216 = vmatprep.mubr.bf16.mxu0 %v3320
        %4217 = vmatmul.mubr.bf16.gmra.mrb[0].mxu0 %v3319
        %v4218 = vpop.f32.mrb[0].mxu0
        %v4219 = vadd.f32 %v4122, %v4218
        %v4220 = vpop.f32.mrb[0].mxu0
        %v4221 = vpop.f32.mrb[0].mxu0
        %v4222 = vadd.f32 %v4125, %v4221
        %v4223 = vpop.f32.mrb[0].mxu0
        %4224 = vmatprep.mubr.bf16.mxu0 %v3328
        %4225 = vmatmul.mubr.bf16.gmra.mrb[0].mxu0 %v3327
        %v4226 = vpop.f32.mrb[0].mxu0
        %v4227 = vadd.f32 %v4130, %v4226
        %v4228 = vpop.f32.mrb[0].mxu0
        %v4229 = vpop.f32.mrb[0].mxu0
        %v4230 = vadd.f32 %v4133, %v4229
        %v4231 = vpop.f32.mrb[0].mxu0
        %4232 = vmatprep.mubr.bf16.mxu0 %v3336
        %4233 = vmatmul.mubr.bf16.gmra.mrb[0].mxu0 %v3335
        %v4234 = vpop.f32.mrb[0].mxu0
        %v4235 = vadd.f32 %v4138, %v4234
        %v4236 = vpop.f32.mrb[0].mxu0
        %v4237 = vpop.f32.mrb[0].mxu0
        %v4238 = vadd.f32 %v4141, %v4237
        %v4239 = vpop.f32.mrb[0].mxu0
        %4240 = vmatprep.mubr.bf16.mxu0 %v3344
        %4241 = vmatmul.mubr.bf16.gmra.mrb[0].mxu0 %v3343
        %v4242 = vpop.f32.mrb[0].mxu0
        %v4243 = vadd.f32 %v4146, %v4242
        %v4244 = vpop.f32.mrb[0].mxu0
        %v4245 = vpop.f32.mrb[0].mxu0
        %v4246 = vadd.f32 %v4149, %v4245
        %v4247 = vpop.f32.mrb[0].mxu0
        %4248 = vmatprep.mubr.bf16.mxu0 %v3352
        %4249 = vmatmul.mubr.bf16.gmra.mrb[0].mxu0 %v3351
        %v4250 = vpop.f32.mrb[0].mxu0
        %v4251 = vadd.f32 %v4154, %v4250
        %v4252 = vpop.f32.mrb[0].mxu0
        %v4253 = vpop.f32.mrb[0].mxu0
        %v4254 = vadd.f32 %v4157, %v4253
        %v4255 = vpop.f32.mrb[0].mxu0
        %4256 = vmatprep.mubr.bf16.mxu0 %v3360
        %4257 = vmatmul.mubr.bf16.gmra.mrb[0].mxu0 %v3359
        %v4258 = vpop.f32.mrb[0].mxu0
        %v4259 = vadd.f32 %v4162, %v4258
        %v4260 = vpop.f32.mrb[0].mxu0
        %v4261 = vpop.f32.mrb[0].mxu0
        %v4262 = vadd.f32 %v4165, %v4261
        %v4263 = vpop.f32.mrb[0].mxu0
        %4264 = vmatprep.mubr.bf16.mxu0 %v3368
        %4265 = vmatmul.mubr.bf16.gmra.mrb[0].mxu0 %v3367
        %v4266 = vpop.f32.mrb[0].mxu0
        %v4267 = vadd.f32 %v4170, %v4266
        %v4268 = vpop.f32.mrb[0].mxu0
        %v4269 = vpop.f32.mrb[0].mxu0
        %v4270 = vadd.f32 %v4173, %v4269
        %v4271 = vpop.f32.mrb[0].mxu0
        %4272 = vdwg.mxu0
        %v4273 = vadd.f32 %v3289, %v4211
        %v4274 = vadd.f32 %v3290, %v4214
        %v4275 = vadd.f32 %v3291, %v4219
        %v4276 = vadd.f32 %v3292, %v4222
        %v4277 = vadd.f32 %v3293, %v4227
        %v4278 = vadd.f32 %v3294, %v4230
        %v4279 = vadd.f32 %v3295, %v4235
        %v4280 = vadd.f32 %v3296, %v4238
        %v4281 = vadd.f32 %v3297, %v4243
        %v4282 = vadd.f32 %v3298, %v4246
        %v4283 = vadd.f32 %v3299, %v4251
        %v4284 = vadd.f32 %v3300, %v4254
        %v4285 = vadd.f32 %v3301, %v4259
        %v4286 = vadd.f32 %v3302, %v4262
        %v4287 = vadd.f32 %v3303, %v4267
        %v4288 = vadd.f32 %v3304, %v4270
        %4289 = vst [vmem:[%s301] sm:$0xff] %v4273
        %4290 = vst [vmem:[%s301 + $0x8] sm:$0xff] %v4274
        %4291 = vst [vmem:[%s301 + $0x10] sm:$0xff] %v4275
        %4292 = vst [vmem:[%s301 + $0x18] sm:$0xff] %v4276
        %4293 = vst [vmem:[%s301 + $0x20] sm:$0xff] %v4277
        %4294 = vst [vmem:[%s301 + $0x28] sm:$0xff] %v4278
        %4295 = vst [vmem:[%s301 + $0x30] sm:$0xff] %v4279
        %4296 = vst [vmem:[%s301 + $0x38] sm:$0xff] %v4280
        %4297 = vst [vmem:[%s301 + $0x40] sm:$0xff] %v4281
        %4298 = vst [vmem:[%s301 + $0x48] sm:$0xff] %v4282
        %4299 = vst [vmem:[%s301 + $0x50] sm:$0xff] %v4283
        %4300 = vst [vmem:[%s301 + $0x58] sm:$0xff] %v4284
        %4301 = vst [vmem:[%s301 + $0x60] sm:$0xff] %v4285
        %4302 = vst [vmem:[%s301 + $0x68] sm:$0xff] %v4286
        %4303 = vst [vmem:[%s301 + $0x70] sm:$0xff] %v4287
        %4304 = vst [vmem:[%s301 + $0x78] sm:$0xff] %v4288
        %s4305 = smul.u32 16, %s23
        %p4306 = scmp.lt.s32.totalorder %s22, 1
        %s4307 = scalar_select %p4306, %s22, 1
        %p4308 = scmp.lt.s32.totalorder %s4305, 15
        %s4309 = scalar_select %p4308, %s4305, 15
        %s4310 = smul.addr %s4307, 16
        %s4311 = sadd.s32 %s4309, %s4310
        %s4312 = smul.addr %s4311, 8
        %s4313 = scalar_lea.vmem %s4, %s4312
        // Predicated region
        $region53: #{cnn_forward.1} parent=35 // pred_check
          %p4314 = pneg %p151
        $region54: #{cnn_forward.1} parent=35 // pred_check_branch
          %4316 = sbr.rel (%p4314) target = $region56
        $region55: #{cnn_forward.1} parent=35 // pred_region
          %s4317 = smul.u32 16, %s23
        $region56: #{cnn_forward.1} parent=35 // pred_fallthru
          _
      $region36: #{cnn_forward.1} parent=5 // pred_fallthru
        _
      %p4318 = scmp.le.s32.totalorder 2, %s12
      // Predicated region
      $region57: #{cnn_forward.1} parent=5 // pred_check
        %p4319 = pneg %p4318
      $region58: #{cnn_forward.1} parent=5 // pred_check_branch
        %4321 = sbr.rel (%p4319) target = $region60
      $region59: #{cnn_forward.1} parent=5 // pred_region
        %s4322 = ssub.s32 %s12, 2
        // Predicated region
        $region61: #{cnn_forward.1} parent=59 // pred_check
          %p4323 = pneg %p157
        $region62: #{cnn_forward.1} parent=59 // pred_check_branch
          %4325 = sbr.rel (%p4323) target = $region64
        $region63: #{cnn_forward.1} parent=59 // pred_region
          %s4326 = smul.u32 16, %s26
          %p4327 = scmp.lt.s32.totalorder %s25, 1
          %s4328 = scalar_select %p4327, %s25, 1
          %p4329 = scmp.lt.s32.totalorder %s4326, 15
          %s4330 = scalar_select %p4329, %s4326, 15
          %s4331 = smul.addr %s4328, 16
          %s4332 = sadd.s32 %s4330, %s4331
          %s4333 = smul.addr %s4332, 8
          %s4334 = scalar_lea.vmem %s4, %s4333
        $region64: #{cnn_forward.1} parent=59 // pred_fallthru
          _
      $region60: #{cnn_forward.1} parent=5 // pred_fallthru
        _
    $region6: #{cnn_forward.1} parent=1 // loop_footer
      %s16 = sadd.s32 1, %s12
    $region7: #{cnn_forward.1} parent=1 // loop_footer_branch
      %11 = sbr.rel target = $region3
    $region8: #{cnn_forward.1} parent=1 // loop_exit
      _
    %4335 = vsyncpa [#allocation3], 1
    %s4336 = scalar_lea.sflag [#allocation3], 1
    %4337 = vsyncpa %s4336, 1
    %4338 = vsyncpa [#allocation5], 1

</llo_original>
